<compile_context>
chip_gen: v7x
topology: tpu7x:2x2x1
jax: 0.10.0
libtpu: 0.0.40
codegen_flags: <defaults>
</compile_context>

<pallas_src>
import functools

import jax
import jax.numpy as jnp
from jax.experimental import pallas as pl
from jax.experimental.pallas import tpu as pltpu

HIDDEN = 600
HIDDEN_PAD = 640          # 5 * 128
LANE = 128
SUBLANE = 8


def _round_up(x, m):
    return ((x + m - 1) // m) * m


def _mlp_kernel(x_ref,
                w1_ref, b1_ref,
                w2_ref, b2_ref,
                w3_ref, b3_ref,
                w4_ref, b4_ref,
                o_ref):
    # Whole padded MLP for one batch tile.  Weights (bf16) are VMEM-resident across
    # the batch grid; activations stay f32, cast to bf16 only at the MXU input,
    # f32 accumulation, bias-add + ReLU on the VPU in f32.
    h = x_ref[...]

    h = jnp.dot(h.astype(jnp.bfloat16), w1_ref[...],
                preferred_element_type=jnp.float32)
    h = jnp.maximum(h + b1_ref[...], 0.0)

    h = jnp.dot(h.astype(jnp.bfloat16), w2_ref[...],
                preferred_element_type=jnp.float32)
    h = jnp.maximum(h + b2_ref[...], 0.0)

    h = jnp.dot(h.astype(jnp.bfloat16), w3_ref[...],
                preferred_element_type=jnp.float32)
    h = jnp.maximum(h + b3_ref[...], 0.0)

    h = jnp.dot(h.astype(jnp.bfloat16), w4_ref[...],
                preferred_element_type=jnp.float32)
    h = jnp.maximum(h + b4_ref[...], 0.0)

    o_ref[...] = h


@functools.partial(jax.jit, static_argnames=("output_shape", "batch_tile"))
def sensor_nn_forward(x, params, output_shape, batch_tile=256):
    """x: (B, H, W) float32; params: padded bf16 weights (in,out) + f32 biases (1,out)."""
    B = x.shape[0]
    out_h, out_w = output_shape[-2], output_shape[-1]
    out_size = out_h * out_w

    in_pad = params["w1"].shape[0]
    out_pad = params["w4"].shape[1]

    # Flatten(start_dim=1) + zero-pad features up to the padded weight rows (glue).
    x_flat = x.reshape(B, -1).astype(jnp.float32)
    in_size = x_flat.shape[1]
    if in_pad != in_size:
        x_flat = jnp.pad(x_flat, ((0, 0), (0, in_pad - in_size)))

    # Batch tiling: small batches pad up to a sublane multiple, large batches tile.
    TB = min(batch_tile, _round_up(B, SUBLANE))
    B_pad = _round_up(B, TB)
    if B_pad != B:
        x_flat = jnp.pad(x_flat, ((0, B_pad - B), (0, 0)))
    grid = (B_pad // TB,)

    w1, b1 = params["w1"], params["b1"]
    w2, b2 = params["w2"], params["b2"]
    w3, b3 = params["w3"], params["b3"]
    w4, b4 = params["w4"], params["b4"]

    flops = 2 * B_pad * (in_pad * HIDDEN_PAD
                         + HIDDEN_PAD * HIDDEN_PAD * 2
                         + HIDDEN_PAD * out_pad)
    weight_bytes = sum(int(w.size) * w.dtype.itemsize for w in (w1, w2, w3, w4))
    bias_bytes = sum(int(b.size) * b.dtype.itemsize for b in (b1, b2, b3, b4))
    bytes_accessed = (int(x_flat.size) * 4 + weight_bytes + bias_bytes
                      + B_pad * out_pad * 4)

    out_flat = pl.pallas_call(
        _mlp_kernel,
        out_shape=jax.ShapeDtypeStruct((B_pad, out_pad), jnp.float32),
        grid=grid,
        in_specs=[
            pl.BlockSpec((TB, in_pad), lambda i: (i, 0)),          # x: batch-tiled
            pl.BlockSpec(w1.shape, lambda i: (0, 0)),              # weights: resident
            pl.BlockSpec(b1.shape, lambda i: (0, 0)),
            pl.BlockSpec(w2.shape, lambda i: (0, 0)),
            pl.BlockSpec(b2.shape, lambda i: (0, 0)),
            pl.BlockSpec(w3.shape, lambda i: (0, 0)),
            pl.BlockSpec(b3.shape, lambda i: (0, 0)),
            pl.BlockSpec(w4.shape, lambda i: (0, 0)),
            pl.BlockSpec(b4.shape, lambda i: (0, 0)),
        ],
        out_specs=pl.BlockSpec((TB, out_pad), lambda i: (i, 0)),   # lane-dense (128)
        compiler_params=pltpu.CompilerParams(
            dimension_semantics=("parallel",),
            vmem_limit_bytes=64 << 20,
        ),
        cost_estimate=pl.CostEstimate(
            flops=flops, transcendentals=0, bytes_accessed=bytes_accessed),
    )(x_flat, w1, b1, w2, b2, w3, b3, w4, b4)

    # Slice padding off and Unflatten(1, output_shape[-2:]) (glue).
    return out_flat[:B, :out_size].reshape(B, out_h, out_w)


def init_params(key, input_shape, output_shape, hidden=HIDDEN):
    """nn.Linear-style init, then zero-pad to lane-aligned shapes and cast W to bf16.

    Weights are stored as (in_pad, out_pad) bf16 (pre-transposed so the kernel
    computes y = x @ W + b); biases as (1, out_pad) f32.  Padded rows/cols/bias
    entries are exactly zero so ReLU and downstream matmuls are unaffected.
    """
    in_size = input_shape[-1] * input_shape[-2]
    out_size = output_shape[-1] * output_shape[-2]

    dims = [(in_size, hidden), (hidden, hidden), (hidden, hidden), (hidden, out_size)]
    pads = [(_round_up(d_in, LANE), _round_up(d_out, LANE)) for d_in, d_out in dims]

    params = {}
    keys = jax.random.split(key, 2 * len(dims))
    for i, ((din, dout), (din_p, dout_p)) in enumerate(zip(dims, pads)):
        bound = 1.0 / (din ** 0.5)   # matches nn.Linear default uniform bound
        w = jax.random.uniform(keys[2 * i], (din, dout), jnp.float32, -bound, bound)
        b = jax.random.uniform(keys[2 * i + 1], (1, dout), jnp.float32, -bound, bound)
        w = jnp.pad(w, ((0, din_p - din), (0, dout_p - dout)))
        b = jnp.pad(b, ((0, 0), (0, dout_p - dout)))
        params[f"w{i + 1}"] = w.astype(jnp.bfloat16)
        params[f"b{i + 1}"] = b
    return params


def _reference_forward(x, params, output_shape):
    """Plain-JAX reference mirroring the kernel math (bf16 weights, f32 accumulate)."""
    B = x.shape[0]
    out_size = output_shape[-2] * output_shape[-1]
    in_pad = params["w1"].shape[0]
    h = x.reshape(B, -1).astype(jnp.float32)
    if h.shape[1] != in_pad:
        h = jnp.pad(h, ((0, 0), (0, in_pad - h.shape[1])))
    for i in range(1, 5):
        h = jnp.dot(h.astype(jnp.bfloat16), params[f"w{i}"],
                    preferred_element_type=jnp.float32)
        h = jnp.maximum(h + params[f"b{i}"], 0.0)
    return h[:, :out_size].reshape(B, output_shape[-2], output_shape[-1])


if __name__ == "__main__":
    input_shape = (16, 16)    # (H, W) -> input_size = 256
    output_shape = (8, 8)     # -> output_size = 64
    batch = 2

    key = jax.random.PRNGKey(0)
    k_x, k_p = jax.random.split(key)
    x = jax.random.normal(k_x, (batch, *input_shape), dtype=jnp.float32)
    params = init_params(k_p, input_shape, output_shape)

    out = sensor_nn_forward(x, params, output_shape)
    out = jax.block_until_ready(out)

    ref = _reference_forward(x, params, output_shape)
    assert out.shape == (batch, output_shape[0], output_shape[1])
    assert jnp.allclose(out, ref, atol=1e-3, rtol=1e-3), "mismatch vs. reference"

    print("KERNEL_OK")
</pallas_src>

<mosaic_0001>
module attributes {stable_mosaic.version = 11 : i64} {
  func.func @_mlp_kernel(%arg0: i32, %arg1: memref<8x256xf32, #tpu.memory_space<vmem>>, %arg2: memref<256x640xbf16, #tpu.memory_space<vmem>>, %arg3: memref<1x640xf32, #tpu.memory_space<vmem>>, %arg4: memref<640x640xbf16, #tpu.memory_space<vmem>>, %arg5: memref<1x640xf32, #tpu.memory_space<vmem>>, %arg6: memref<640x640xbf16, #tpu.memory_space<vmem>>, %arg7: memref<1x640xf32, #tpu.memory_space<vmem>>, %arg8: memref<640x128xbf16, #tpu.memory_space<vmem>>, %arg9: memref<1x128xf32, #tpu.memory_space<vmem>>, %arg10: memref<8x128xf32, #tpu.memory_space<vmem>>) attributes {dimension_semantics = [#tpu.dimension_semantics<parallel>], iteration_bounds = array<i64: 1>, scalar_prefetch = 0 : i64, scratch_operands = 0 : i64, tpu.core_type = #tpu.core_type<tc>, window_params = [{transform_indices = @transform_0, window_bounds = array<i64: 8, 256>}, {pipeline_mode = #tpu.pipeline_mode<synchronous>, transform_indices = @transform_1, window_bounds = array<i64: 256, 640>}, {pipeline_mode = #tpu.pipeline_mode<synchronous>, transform_indices = @transform_2, window_bounds = array<i64: 1, 640>}, {pipeline_mode = #tpu.pipeline_mode<synchronous>, transform_indices = @transform_3, window_bounds = array<i64: 640, 640>}, {pipeline_mode = #tpu.pipeline_mode<synchronous>, transform_indices = @transform_4, window_bounds = array<i64: 1, 640>}, {pipeline_mode = #tpu.pipeline_mode<synchronous>, transform_indices = @transform_5, window_bounds = array<i64: 640, 640>}, {pipeline_mode = #tpu.pipeline_mode<synchronous>, transform_indices = @transform_6, window_bounds = array<i64: 1, 640>}, {pipeline_mode = #tpu.pipeline_mode<synchronous>, transform_indices = @transform_7, window_bounds = array<i64: 640, 128>}, {pipeline_mode = #tpu.pipeline_mode<synchronous>, transform_indices = @transform_8, window_bounds = array<i64: 1, 128>}, {transform_indices = @transform_9, window_bounds = array<i64: 8, 128>}]} {
    %c0 = arith.constant 0 : index
    %c0_0 = arith.constant 0 : index
    %0 = vector.load %arg1[%c0, %c0_0] : memref<8x256xf32, #tpu.memory_space<vmem>>, vector<8x256xf32>
    %1 = arith.truncf %0 : vector<8x256xf32> to vector<8x256xbf16>
    %c0_1 = arith.constant 0 : index
    %c0_2 = arith.constant 0 : index
    %2 = vector.load %arg2[%c0_1, %c0_2] : memref<256x640xbf16, #tpu.memory_space<vmem>>, vector<256x640xbf16>
    %cst = arith.constant dense<0.000000e+00> : vector<8x640xf32>
    %3 = tpu.matmul %1, %2, %cst {dimension_numbers = #tpu.dot_dimension_numbers<[1], [0], [0], [1], [0, 0, 1, 1], [], []>} : vector<8x256xbf16>, vector<256x640xbf16>, vector<8x640xf32> -> vector<8x640xf32>
    %c0_3 = arith.constant 0 : index
    %c0_4 = arith.constant 0 : index
    %4 = vector.load %arg3[%c0_3, %c0_4] : memref<1x640xf32, #tpu.memory_space<vmem>>, vector<1x640xf32>
    %5 = vector.broadcast %4 : vector<1x640xf32> to vector<8x640xf32>
    %6 = arith.addf %3, %5 : vector<8x640xf32>
    %cst_5 = arith.constant 0.000000e+00 : f32
    %7 = vector.broadcast %cst_5 : f32 to vector<8x640xf32>
    %8 = arith.maximumf %6, %7 : vector<8x640xf32>
    %9 = arith.truncf %8 : vector<8x640xf32> to vector<8x640xbf16>
    %c0_6 = arith.constant 0 : index
    %c0_7 = arith.constant 0 : index
    %10 = vector.load %arg4[%c0_6, %c0_7] : memref<640x640xbf16, #tpu.memory_space<vmem>>, vector<640x640xbf16>
    %cst_8 = arith.constant dense<0.000000e+00> : vector<8x640xf32>
    %11 = tpu.matmul %9, %10, %cst_8 {dimension_numbers = #tpu.dot_dimension_numbers<[1], [0], [0], [1], [0, 0, 1, 1], [], []>} : vector<8x640xbf16>, vector<640x640xbf16>, vector<8x640xf32> -> vector<8x640xf32>
    %c0_9 = arith.constant 0 : index
    %c0_10 = arith.constant 0 : index
    %12 = vector.load %arg5[%c0_9, %c0_10] : memref<1x640xf32, #tpu.memory_space<vmem>>, vector<1x640xf32>
    %13 = vector.broadcast %12 : vector<1x640xf32> to vector<8x640xf32>
    %14 = arith.addf %11, %13 : vector<8x640xf32>
    %cst_11 = arith.constant 0.000000e+00 : f32
    %15 = vector.broadcast %cst_11 : f32 to vector<8x640xf32>
    %16 = arith.maximumf %14, %15 : vector<8x640xf32>
    %17 = arith.truncf %16 : vector<8x640xf32> to vector<8x640xbf16>
    %c0_12 = arith.constant 0 : index
    %c0_13 = arith.constant 0 : index
    %18 = vector.load %arg6[%c0_12, %c0_13] : memref<640x640xbf16, #tpu.memory_space<vmem>>, vector<640x640xbf16>
    %cst_14 = arith.constant dense<0.000000e+00> : vector<8x640xf32>
    %19 = tpu.matmul %17, %18, %cst_14 {dimension_numbers = #tpu.dot_dimension_numbers<[1], [0], [0], [1], [0, 0, 1, 1], [], []>} : vector<8x640xbf16>, vector<640x640xbf16>, vector<8x640xf32> -> vector<8x640xf32>
    %c0_15 = arith.constant 0 : index
    %c0_16 = arith.constant 0 : index
    %20 = vector.load %arg7[%c0_15, %c0_16] : memref<1x640xf32, #tpu.memory_space<vmem>>, vector<1x640xf32>
    %21 = vector.broadcast %20 : vector<1x640xf32> to vector<8x640xf32>
    %22 = arith.addf %19, %21 : vector<8x640xf32>
    %cst_17 = arith.constant 0.000000e+00 : f32
    %23 = vector.broadcast %cst_17 : f32 to vector<8x640xf32>
    %24 = arith.maximumf %22, %23 : vector<8x640xf32>
    %25 = arith.truncf %24 : vector<8x640xf32> to vector<8x640xbf16>
    %c0_18 = arith.constant 0 : index
    %c0_19 = arith.constant 0 : index
    %26 = vector.load %arg8[%c0_18, %c0_19] : memref<640x128xbf16, #tpu.memory_space<vmem>>, vector<640x128xbf16>
    %cst_20 = arith.constant dense<0.000000e+00> : vector<8x128xf32>
    %27 = tpu.matmul %25, %26, %cst_20 {dimension_numbers = #tpu.dot_dimension_numbers<[1], [0], [0], [1], [0, 0, 1, 1], [], []>} : vector<8x640xbf16>, vector<640x128xbf16>, vector<8x128xf32> -> vector<8x128xf32>
    %c0_21 = arith.constant 0 : index
    %c0_22 = arith.constant 0 : index
    %28 = vector.load %arg9[%c0_21, %c0_22] : memref<1x128xf32, #tpu.memory_space<vmem>>, vector<1x128xf32>
    %29 = vector.broadcast %28 : vector<1x128xf32> to vector<8x128xf32>
    %30 = arith.addf %27, %29 : vector<8x128xf32>
    %cst_23 = arith.constant 0.000000e+00 : f32
    %31 = vector.broadcast %cst_23 : f32 to vector<8x128xf32>
    %32 = arith.maximumf %30, %31 : vector<8x128xf32>
    %c0_24 = arith.constant 0 : index
    %c0_25 = arith.constant 0 : index
    %33 = vector.load %arg10[%c0_24, %c0_25] : memref<8x128xf32, #tpu.memory_space<vmem>>, vector<8x128xf32>
    tpu.vector_store %arg10[%c0_24, %c0_25], %32 {strides = array<i32>} : memref<8x128xf32, #tpu.memory_space<vmem>>, vector<8x128xf32>,
    return
  }
  func.func @transform_0(%arg0: i32) -> (i32, i32) {
    %c0_i32 = arith.constant 0 : i32
    %c0_i32_0 = arith.constant 0 : i32
    return %arg0, %c0_i32 : i32, i32
  }
  func.func @transform_1(%arg0: i32) -> (i32, i32) {
    %c0_i32 = arith.constant 0 : i32
    %c0_i32_0 = arith.constant 0 : i32
    %c0_i32_1 = arith.constant 0 : i32
    return %c0_i32, %c0_i32_0 : i32, i32
  }
  func.func @transform_2(%arg0: i32) -> (i32, i32) {
    %c0_i32 = arith.constant 0 : i32
    %c0_i32_0 = arith.constant 0 : i32
    %c0_i32_1 = arith.constant 0 : i32
    return %c0_i32, %c0_i32_0 : i32, i32
  }
  func.func @transform_3(%arg0: i32) -> (i32, i32) {
    %c0_i32 = arith.constant 0 : i32
    %c0_i32_0 = arith.constant 0 : i32
    %c0_i32_1 = arith.constant 0 : i32
    return %c0_i32, %c0_i32_0 : i32, i32
  }
  func.func @transform_4(%arg0: i32) -> (i32, i32) {
    %c0_i32 = arith.constant 0 : i32
    %c0_i32_0 = arith.constant 0 : i32
    %c0_i32_1 = arith.constant 0 : i32
    return %c0_i32, %c0_i32_0 : i32, i32
  }
  func.func @transform_5(%arg0: i32) -> (i32, i32) {
    %c0_i32 = arith.constant 0 : i32
    %c0_i32_0 = arith.constant 0 : i32
    %c0_i32_1 = arith.constant 0 : i32
    return %c0_i32, %c0_i32_0 : i32, i32
  }
  func.func @transform_6(%arg0: i32) -> (i32, i32) {
    %c0_i32 = arith.constant 0 : i32
    %c0_i32_0 = arith.constant 0 : i32
    %c0_i32_1 = arith.constant 0 : i32
    return %c0_i32, %c0_i32_0 : i32, i32
  }
  func.func @transform_7(%arg0: i32) -> (i32, i32) {
    %c0_i32 = arith.constant 0 : i32
    %c0_i32_0 = arith.constant 0 : i32
    %c0_i32_1 = arith.constant 0 : i32
    return %c0_i32, %c0_i32_0 : i32, i32
  }
  func.func @transform_8(%arg0: i32) -> (i32, i32) {
    %c0_i32 = arith.constant 0 : i32
    %c0_i32_0 = arith.constant 0 : i32
    %c0_i32_1 = arith.constant 0 : i32
    return %c0_i32, %c0_i32_0 : i32, i32
  }
  func.func @transform_9(%arg0: i32) -> (i32, i32) {
    %c0_i32 = arith.constant 0 : i32
    %c0_i32_0 = arith.constant 0 : i32
    return %arg0, %c0_i32 : i32, i32
  }
}

</mosaic_0001>

<llo_original>
// kernel: sensor_nn_forward.1
$region0: #{sensor_nn_forward.1}
  #allocation0 [shape = 'u32[]', space=smem, size = 0x4, offset = 0x4, fixed_abs, tag = 'smem constant byte address 0x4 - core index']
  #allocation1 [shape = 'u32[144,128]{1,0:T(1,128)}', space=vmem, size = 0x12000, scoped, tag = 'internal scratch']
  %s0 = inlined_call_operand.hbm [shape: f32[8,256], index: 0, kind: input, shape index: {}]
  %s1 = inlined_call_operand.hbm [shape: bf16[256,640], index: 1, kind: input, shape index: {}]
  %s2 = inlined_call_operand.hbm [shape: f32[1,640], index: 2, kind: input, shape index: {}]
  %s3 = inlined_call_operand.hbm [shape: bf16[640,640], index: 3, kind: input, shape index: {}]
  %s4 = inlined_call_operand.hbm [shape: f32[1,640], index: 4, kind: input, shape index: {}]
  %s5 = inlined_call_operand.hbm [shape: bf16[640,640], index: 5, kind: input, shape index: {}]
  %s6 = inlined_call_operand.hbm [shape: f32[1,640], index: 6, kind: input, shape index: {}]
  %s7 = inlined_call_operand.hbm [shape: bf16[640,128], index: 7, kind: input, shape index: {}]
  %s8 = inlined_call_operand.hbm [shape: f32[1,128], index: 8, kind: input, shape index: {}]
  %s9 = inlined_call_operand.hbm [shape: f32[8,128], index: 9, kind: output, shape index: {}]
  %s10 = sld [smem:[#allocation0]]
  $region82: #{sensor_nn_forward.1} parent=0
    _
  %s12 = ssub.s32 1, %s10
  %s13 = scalar_select 0, %s12, %s10
  $region1: #{sensor_nn_forward.1} parent=0
    #allocation2 [shape = 'u8[8192]{0}', space=vmem, size = 0x2000, scoped, tag = 'input window, operand 0, single buffered']
    #allocation3 [shape = 's32[1]{0}', space=sflag, size = 0x4, scoped, tag = 'scoped memory for sensor_nn_forward.1']
    #allocation4 [shape = 's32[1]{0}', space=sflag, size = 0x4, scoped, tag = 'scoped memory for sensor_nn_forward.1']
    #allocation5 [shape = 'u8[327680]{0}', space=vmem, size = 0x50000, scoped, tag = 'input window, operand 1, single buffered']
    #allocation6 [shape = 's32[1]{0}', space=sflag, size = 0x4, scoped, tag = 'scoped memory for sensor_nn_forward.1']
    #allocation7 [shape = 'u8[2560]{0}', space=vmem, size = 0xc00, scoped, tag = 'input window, operand 2, single buffered']
    #allocation8 [shape = 'u8[819200]{0}', space=vmem, size = 0xc8000, scoped, tag = 'input window, operand 3, single buffered']
    #allocation9 [shape = 's32[1]{0}', space=sflag, size = 0x4, scoped, tag = 'scoped memory for sensor_nn_forward.1']
    #allocation10 [shape = 'u8[2560]{0}', space=vmem, size = 0xc00, scoped, tag = 'input window, operand 4, single buffered']
    #allocation11 [shape = 'u8[819200]{0}', space=vmem, size = 0xc8000, scoped, tag = 'input window, operand 5, single buffered']
    #allocation12 [shape = 's32[1]{0}', space=sflag, size = 0x4, scoped, tag = 'scoped memory for sensor_nn_forward.1']
    #allocation13 [shape = 'u8[2560]{0}', space=vmem, size = 0xc00, scoped, tag = 'input window, operand 6, single buffered']
    #allocation14 [shape = 'u8[163840]{0}', space=vmem, size = 0x28000, scoped, tag = 'input window, operand 7, single buffered']
    #allocation15 [shape = 's32[1]{0}', space=sflag, size = 0x4, scoped, tag = 'scoped memory for sensor_nn_forward.1']
    #allocation16 [shape = 'u8[512]{0}', space=vmem, size = 0x400, scoped, tag = 'input window, operand 8, single buffered']
    #allocation17 [shape = 'u8[4096]{0}', space=vmem, size = 0x1000, scoped, tag = 'output window, operand 0, single buffered']
    %14 = vsyncpa [#allocation3], 0
    %15 = vsyncpa [#allocation6], 0
    %16 = vsyncpa [#allocation9], 0
    %17 = vsyncpa [#allocation12], 0
    %18 = vsyncpa [#allocation15], 0
    %19 = vsyncpa [#allocation4], 0
    // Predicated region
    $region2: #{sensor_nn_forward.1} parent=1 // pred_check
      _
    $region3: #{sensor_nn_forward.1} parent=1 // pred_check_branch
      %21 = sbr.rel (0) target = $region5
    $region4: #{sensor_nn_forward.1} parent=1 // pred_region
      %s23 = ssub.s32 256, 256
      %24 = vsyncadd [#allocation3], %s23
      %s26 = sshll.u32 [#allocation2], 4
      %s27 = int_to_ptr.vmem [resolvable:$true] %s26
      %29 = dma.hbm_to_vmem [thread:$0]  %s0, 256, %s27, [#allocation3]
    $region5: #{sensor_nn_forward.1} parent=1 // pred_fallthru
      _
    // Predicated region
    $region6: #{sensor_nn_forward.1} parent=1 // pred_check
      _
    $region7: #{sensor_nn_forward.1} parent=1 // pred_check_branch
      %31 = sbr.rel (0) target = $region9
    $region8: #{sensor_nn_forward.1} parent=1 // pred_region
      %s33 = ssub.s32 10240, 10240
      %34 = vsyncadd [#allocation6], %s33
      %s35 = sshll.u32 [#allocation5], 4
      %s36 = int_to_ptr.vmem [resolvable:$true] %s35
      %41 = dma.hbm_to_vmem [thread:$0]  %s1, 10240, %s36, [#allocation6], 320, 320, 20
    $region9: #{sensor_nn_forward.1} parent=1 // pred_fallthru
      _
    // Predicated region
    $region10: #{sensor_nn_forward.1} parent=1 // pred_check
      _
    $region11: #{sensor_nn_forward.1} parent=1 // pred_check_branch
      %43 = sbr.rel (0) target = $region13
    $region12: #{sensor_nn_forward.1} parent=1 // pred_region
      %s45 = ssub.s32 80, 80
      %46 = vsyncadd [#allocation6], %s45
      %s48 = sshll.u32 [#allocation7], 4
      %s49 = int_to_ptr.vmem [resolvable:$true] %s48
      %51 = dma.hbm_to_vmem [thread:$0]  %s2, 80, %s49, [#allocation6]
    $region13: #{sensor_nn_forward.1} parent=1 // pred_fallthru
      _
    // Predicated region
    $region14: #{sensor_nn_forward.1} parent=1 // pred_check
      _
    $region15: #{sensor_nn_forward.1} parent=1 // pred_check_branch
      %53 = sbr.rel (0) target = $region17
    $region16: #{sensor_nn_forward.1} parent=1 // pred_region
      %s55 = ssub.s32 25600, 25600
      %56 = vsyncadd [#allocation9], %s55
      %s57 = sshll.u32 [#allocation8], 4
      %s58 = int_to_ptr.vmem [resolvable:$true] %s57
      %63 = dma.hbm_to_vmem [thread:$0]  %s3, 25600, %s58, [#allocation9], 320, 320, 20
    $region17: #{sensor_nn_forward.1} parent=1 // pred_fallthru
      _
    // Predicated region
    $region18: #{sensor_nn_forward.1} parent=1 // pred_check
      _
    $region19: #{sensor_nn_forward.1} parent=1 // pred_check_branch
      %65 = sbr.rel (0) target = $region21
    $region20: #{sensor_nn_forward.1} parent=1 // pred_region
      %s67 = ssub.s32 80, 80
      %68 = vsyncadd [#allocation9], %s67
      %s70 = sshll.u32 [#allocation10], 4
      %s71 = int_to_ptr.vmem [resolvable:$true] %s70
      %73 = dma.hbm_to_vmem [thread:$0]  %s4, 80, %s71, [#allocation9]
    $region21: #{sensor_nn_forward.1} parent=1 // pred_fallthru
      _
    // Predicated region
    $region22: #{sensor_nn_forward.1} parent=1 // pred_check
      _
    $region23: #{sensor_nn_forward.1} parent=1 // pred_check_branch
      %75 = sbr.rel (0) target = $region25
    $region24: #{sensor_nn_forward.1} parent=1 // pred_region
      %s77 = ssub.s32 25600, 25600
      %78 = vsyncadd [#allocation12], %s77
      %s79 = sshll.u32 [#allocation11], 4
      %s80 = int_to_ptr.vmem [resolvable:$true] %s79
      %85 = dma.hbm_to_vmem [thread:$0]  %s5, 25600, %s80, [#allocation12], 320, 320, 20
    $region25: #{sensor_nn_forward.1} parent=1 // pred_fallthru
      _
    // Predicated region
    $region26: #{sensor_nn_forward.1} parent=1 // pred_check
      _
    $region27: #{sensor_nn_forward.1} parent=1 // pred_check_branch
      %87 = sbr.rel (0) target = $region29
    $region28: #{sensor_nn_forward.1} parent=1 // pred_region
      %s89 = ssub.s32 80, 80
      %90 = vsyncadd [#allocation12], %s89
      %s92 = sshll.u32 [#allocation13], 4
      %s93 = int_to_ptr.vmem [resolvable:$true] %s92
      %95 = dma.hbm_to_vmem [thread:$0]  %s6, 80, %s93, [#allocation12]
    $region29: #{sensor_nn_forward.1} parent=1 // pred_fallthru
      _
    // Predicated region
    $region30: #{sensor_nn_forward.1} parent=1 // pred_check
      _
    $region31: #{sensor_nn_forward.1} parent=1 // pred_check_branch
      %97 = sbr.rel (0) target = $region33
    $region32: #{sensor_nn_forward.1} parent=1 // pred_region
      %s99 = ssub.s32 5120, 5120
      %100 = vsyncadd [#allocation15], %s99
      %s101 = sshll.u32 [#allocation14], 4
      %s102 = int_to_ptr.vmem [resolvable:$true] %s101
      %107 = dma.hbm_to_vmem [thread:$0]  %s7, 5120, %s102, [#allocation15], 64, 64, 4
    $region33: #{sensor_nn_forward.1} parent=1 // pred_fallthru
      _
    // Predicated region
    $region34: #{sensor_nn_forward.1} parent=1 // pred_check
      _
    $region35: #{sensor_nn_forward.1} parent=1 // pred_check_branch
      %109 = sbr.rel (0) target = $region37
    $region36: #{sensor_nn_forward.1} parent=1 // pred_region
      %s111 = ssub.s32 16, 16
      %112 = vsyncadd [#allocation15], %s111
      %s114 = sshll.u32 [#allocation16], 4
      %s115 = int_to_ptr.vmem [resolvable:$true] %s114
      %117 = dma.hbm_to_vmem [thread:$0]  %s8, 16, %s115, [#allocation15]
    $region37: #{sensor_nn_forward.1} parent=1 // pred_fallthru
      _
    // Predicated region
    $region38: #{sensor_nn_forward.1} parent=1 // pred_check
      _
    $region39: #{sensor_nn_forward.1} parent=1 // pred_check_branch
      %119 = sbr.rel (0) target = $region41
    $region40: #{sensor_nn_forward.1} parent=1 // pred_region
      %120 = dma.done [#allocation3], 256
    $region41: #{sensor_nn_forward.1} parent=1 // pred_fallthru
      _
    // Predicated region
    $region42: #{sensor_nn_forward.1} parent=1 // pred_check
      _
    $region43: #{sensor_nn_forward.1} parent=1 // pred_check_branch
      %122 = sbr.rel (0) target = $region45
    $region44: #{sensor_nn_forward.1} parent=1 // pred_region
      %123 = dma.done [#allocation6], 10240
    $region45: #{sensor_nn_forward.1} parent=1 // pred_fallthru
      _
    // Predicated region
    $region46: #{sensor_nn_forward.1} parent=1 // pred_check
      _
    $region47: #{sensor_nn_forward.1} parent=1 // pred_check_branch
      %125 = sbr.rel (0) target = $region49
    $region48: #{sensor_nn_forward.1} parent=1 // pred_region
      %126 = dma.done [#allocation6], 80
    $region49: #{sensor_nn_forward.1} parent=1 // pred_fallthru
      _
    // Predicated region
    $region50: #{sensor_nn_forward.1} parent=1 // pred_check
      _
    $region51: #{sensor_nn_forward.1} parent=1 // pred_check_branch
      %128 = sbr.rel (0) target = $region53
    $region52: #{sensor_nn_forward.1} parent=1 // pred_region
      %129 = dma.done [#allocation9], 25600
    $region53: #{sensor_nn_forward.1} parent=1 // pred_fallthru
      _
    // Predicated region
    $region54: #{sensor_nn_forward.1} parent=1 // pred_check
      _
    $region55: #{sensor_nn_forward.1} parent=1 // pred_check_branch
      %131 = sbr.rel (0) target = $region57
    $region56: #{sensor_nn_forward.1} parent=1 // pred_region
      %132 = dma.done [#allocation9], 80
    $region57: #{sensor_nn_forward.1} parent=1 // pred_fallthru
      _
    // Predicated region
    $region58: #{sensor_nn_forward.1} parent=1 // pred_check
      _
    $region59: #{sensor_nn_forward.1} parent=1 // pred_check_branch
      %134 = sbr.rel (0) target = $region61
    $region60: #{sensor_nn_forward.1} parent=1 // pred_region
      %135 = dma.done [#allocation12], 25600
    $region61: #{sensor_nn_forward.1} parent=1 // pred_fallthru
      _
    // Predicated region
    $region62: #{sensor_nn_forward.1} parent=1 // pred_check
      _
    $region63: #{sensor_nn_forward.1} parent=1 // pred_check_branch
      %137 = sbr.rel (0) target = $region65
    $region64: #{sensor_nn_forward.1} parent=1 // pred_region
      %138 = dma.done [#allocation12], 80
    $region65: #{sensor_nn_forward.1} parent=1 // pred_fallthru
      _
    // Predicated region
    $region66: #{sensor_nn_forward.1} parent=1 // pred_check
      _
    $region67: #{sensor_nn_forward.1} parent=1 // pred_check_branch
      %140 = sbr.rel (0) target = $region69
    $region68: #{sensor_nn_forward.1} parent=1 // pred_region
      %141 = dma.done [#allocation15], 5120
    $region69: #{sensor_nn_forward.1} parent=1 // pred_fallthru
      _
    // Predicated region
    $region70: #{sensor_nn_forward.1} parent=1 // pred_check
      _
    $region71: #{sensor_nn_forward.1} parent=1 // pred_check_branch
      %143 = sbr.rel (0) target = $region73
    $region72: #{sensor_nn_forward.1} parent=1 // pred_region
      %144 = dma.done [#allocation15], 16
    $region73: #{sensor_nn_forward.1} parent=1 // pred_fallthru
      _
    %v146 = vld [vmem:[#allocation2] sm:$0xff]
    %v147 = vld [vmem:[#allocation2 + $0x8] sm:$0xff]
    %v148 = vpack.c.bf16 %v146, %v146
    %v149 = vpack.c.bf16 %v147, %v147
    %v150 = vld [vmem:[#allocation5] sm:$0xff]
    %v151 = vld [vmem:[#allocation5 + $0x8] sm:$0xff]
    %v152 = vld [vmem:[#allocation5 + $0x10] sm:$0xf]
    %v153 = vld [vmem:[#allocation5 + $0x14] sm:$0xff]
    %v154 = vld [vmem:[#allocation5 + $0x1c] sm:$0xff]
    %v155 = vld [vmem:[#allocation5 + $0x24] sm:$0xf]
    %v156 = vld [vmem:[#allocation5 + $0x28] sm:$0xff]
    %v157 = vld [vmem:[#allocation5 + $0x30] sm:$0xff]
    %v158 = vld [vmem:[#allocation5 + $0x38] sm:$0xf]
    %v159 = vld [vmem:[#allocation5 + $0x3c] sm:$0xff]
    %v160 = vld [vmem:[#allocation5 + $0x44] sm:$0xff]
    %v161 = vld [vmem:[#allocation5 + $0x4c] sm:$0xf]
    %v162 = vld [vmem:[#allocation5 + $0x50] sm:$0xff]
    %v163 = vld [vmem:[#allocation5 + $0x58] sm:$0xff]
    %v164 = vld [vmem:[#allocation5 + $0x60] sm:$0xf]
    %v165 = vld [vmem:[#allocation5 + $0x64] sm:$0xff]
    %v166 = vld [vmem:[#allocation5 + $0x6c] sm:$0xff]
    %v167 = vld [vmem:[#allocation5 + $0x74] sm:$0xf]
    %v168 = vld [vmem:[#allocation5 + $0x78] sm:$0xff]
    %v169 = vld [vmem:[#allocation5 + $0x80] sm:$0xff]
    %v170 = vld [vmem:[#allocation5 + $0x88] sm:$0xf]
    %v171 = vld [vmem:[#allocation5 + $0x8c] sm:$0xff]
    %v172 = vld [vmem:[#allocation5 + $0x94] sm:$0xff]
    %v173 = vld [vmem:[#allocation5 + $0x9c] sm:$0xf]
    %v174 = vld [vmem:[#allocation5 + $0xa0] sm:$0xff]
    %v175 = vld [vmem:[#allocation5 + $0xa8] sm:$0xff]
    %v176 = vld [vmem:[#allocation5 + $0xb0] sm:$0xf]
    %v177 = vld [vmem:[#allocation5 + $0xb4] sm:$0xff]
    %v178 = vld [vmem:[#allocation5 + $0xbc] sm:$0xff]
    %v179 = vld [vmem:[#allocation5 + $0xc4] sm:$0xf]
    %v180 = vld [vmem:[#allocation5 + $0xc8] sm:$0xff]
    %v181 = vld [vmem:[#allocation5 + $0xd0] sm:$0xff]
    %v182 = vld [vmem:[#allocation5 + $0xd8] sm:$0xf]
    %v183 = vld [vmem:[#allocation5 + $0xdc] sm:$0xff]
    %v184 = vld [vmem:[#allocation5 + $0xe4] sm:$0xff]
    %v185 = vld [vmem:[#allocation5 + $0xec] sm:$0xf]
    %v186 = vld [vmem:[#allocation5 + $0xf0] sm:$0xff]
    %v187 = vld [vmem:[#allocation5 + $0xf8] sm:$0xff]
    %v188 = vld [vmem:[#allocation5 + $0x100] sm:$0xf]
    %v189 = vld [vmem:[#allocation5 + $0x104] sm:$0xff]
    %v190 = vld [vmem:[#allocation5 + $0x10c] sm:$0xff]
    %v191 = vld [vmem:[#allocation5 + $0x114] sm:$0xf]
    %v192 = vld [vmem:[#allocation5 + $0x118] sm:$0xff]
    %v193 = vld [vmem:[#allocation5 + $0x120] sm:$0xff]
    %v194 = vld [vmem:[#allocation5 + $0x128] sm:$0xf]
    %v195 = vld [vmem:[#allocation5 + $0x12c] sm:$0xff]
    %v196 = vld [vmem:[#allocation5 + $0x134] sm:$0xff]
    %v197 = vld [vmem:[#allocation5 + $0x13c] sm:$0xf]
    %v198 = vld [vmem:[#allocation5 + $0x140] sm:$0xff]
    %v199 = vld [vmem:[#allocation5 + $0x148] sm:$0xff]
    %v200 = vld [vmem:[#allocation5 + $0x150] sm:$0xf]
    %v201 = vld [vmem:[#allocation5 + $0x154] sm:$0xff]
    %v202 = vld [vmem:[#allocation5 + $0x15c] sm:$0xff]
    %v203 = vld [vmem:[#allocation5 + $0x164] sm:$0xf]
    %v204 = vld [vmem:[#allocation5 + $0x168] sm:$0xff]
    %v205 = vld [vmem:[#allocation5 + $0x170] sm:$0xff]
    %v206 = vld [vmem:[#allocation5 + $0x178] sm:$0xf]
    %v207 = vld [vmem:[#allocation5 + $0x17c] sm:$0xff]
    %v208 = vld [vmem:[#allocation5 + $0x184] sm:$0xff]
    %v209 = vld [vmem:[#allocation5 + $0x18c] sm:$0xf]
    %v210 = vld [vmem:[#allocation5 + $0x190] sm:$0xff]
    %v211 = vld [vmem:[#allocation5 + $0x198] sm:$0xff]
    %v212 = vld [vmem:[#allocation5 + $0x1a0] sm:$0xf]
    %v213 = vld [vmem:[#allocation5 + $0x1a4] sm:$0xff]
    %v214 = vld [vmem:[#allocation5 + $0x1ac] sm:$0xff]
    %v215 = vld [vmem:[#allocation5 + $0x1b4] sm:$0xf]
    %v216 = vld [vmem:[#allocation5 + $0x1b8] sm:$0xff]
    %v217 = vld [vmem:[#allocation5 + $0x1c0] sm:$0xff]
    %v218 = vld [vmem:[#allocation5 + $0x1c8] sm:$0xf]
    %v219 = vld [vmem:[#allocation5 + $0x1cc] sm:$0xff]
    %v220 = vld [vmem:[#allocation5 + $0x1d4] sm:$0xff]
    %v221 = vld [vmem:[#allocation5 + $0x1dc] sm:$0xf]
    %v222 = vld [vmem:[#allocation5 + $0x1e0] sm:$0xff]
    %v223 = vld [vmem:[#allocation5 + $0x1e8] sm:$0xff]
    %v224 = vld [vmem:[#allocation5 + $0x1f0] sm:$0xf]
    %v225 = vld [vmem:[#allocation5 + $0x1f4] sm:$0xff]
    %v226 = vld [vmem:[#allocation5 + $0x1fc] sm:$0xff]
    %v227 = vld [vmem:[#allocation5 + $0x204] sm:$0xf]
    %v228 = vld [vmem:[#allocation5 + $0x208] sm:$0xff]
    %v229 = vld [vmem:[#allocation5 + $0x210] sm:$0xff]
    %v230 = vld [vmem:[#allocation5 + $0x218] sm:$0xf]
    %v231 = vld [vmem:[#allocation5 + $0x21c] sm:$0xff]
    %v232 = vld [vmem:[#allocation5 + $0x224] sm:$0xff]
    %v233 = vld [vmem:[#allocation5 + $0x22c] sm:$0xf]
    %v234 = vld [vmem:[#allocation5 + $0x230] sm:$0xff]
    %v235 = vld [vmem:[#allocation5 + $0x238] sm:$0xff]
    %v236 = vld [vmem:[#allocation5 + $0x240] sm:$0xf]
    %v237 = vld [vmem:[#allocation5 + $0x244] sm:$0xff]
    %v238 = vld [vmem:[#allocation5 + $0x24c] sm:$0xff]
    %v239 = vld [vmem:[#allocation5 + $0x254] sm:$0xf]
    %v240 = vld [vmem:[#allocation5 + $0x258] sm:$0xff]
    %v241 = vld [vmem:[#allocation5 + $0x260] sm:$0xff]
    %v242 = vld [vmem:[#allocation5 + $0x268] sm:$0xf]
    %v243 = vld [vmem:[#allocation5 + $0x26c] sm:$0xff]
    %v244 = vld [vmem:[#allocation5 + $0x274] sm:$0xff]
    %v245 = vld [vmem:[#allocation5 + $0x27c] sm:$0xf]
    %v246 = vld [vmem:[#allocation7] sm:$0x1f]
    %v248 = vlaneseq
    %v249 = vshrl.u32 %v248, 7
    %v250 = vsub.s32 0, %v249
    %v251 = vrot.slane %v246, %v250
    %v252 = vlaneseq
    %v253 = vshrl.u32 %v252, 7
    %v254 = vsub.s32 1, %v253
    %v255 = vrot.slane %v246, %v254
    %v256 = vlaneseq
    %v257 = vshrl.u32 %v256, 7
    %v258 = vsub.s32 2, %v257
    %v259 = vrot.slane %v246, %v258
    %v260 = vlaneseq
    %v261 = vshrl.u32 %v260, 7
    %v262 = vsub.s32 3, %v261
    %v263 = vrot.slane %v246, %v262
    %v264 = vlaneseq
    %v265 = vshrl.u32 %v264, 7
    %v266 = vsub.s32 4, %v265
    %v267 = vrot.slane %v246, %v266
    %v369 = vunpack.c.l.b16 %v150
    %v370 = vunpack.c.h.b16 %v150
    %v371 = vunpack.c.l.b16 %v151
    %v372 = vunpack.c.h.b16 %v151
    %v373 = vunpack.c.l.b16 %v152
    %v374 = vunpack.c.l.b16 %v153
    %v375 = vunpack.c.h.b16 %v153
    %v376 = vunpack.c.l.b16 %v154
    %v377 = vunpack.c.h.b16 %v154
    %v378 = vunpack.c.l.b16 %v155
    %v379 = vunpack.c.l.b16 %v156
    %v380 = vunpack.c.h.b16 %v156
    %v381 = vunpack.c.l.b16 %v157
    %v382 = vunpack.c.h.b16 %v157
    %v383 = vunpack.c.l.b16 %v158
    %v384 = vunpack.c.l.b16 %v159
    %v385 = vunpack.c.h.b16 %v159
    %v386 = vunpack.c.l.b16 %v160
    %v387 = vunpack.c.h.b16 %v160
    %v388 = vunpack.c.l.b16 %v161
    %v389 = vunpack.c.l.b16 %v162
    %v390 = vunpack.c.h.b16 %v162
    %v391 = vunpack.c.l.b16 %v163
    %v392 = vunpack.c.h.b16 %v163
    %v393 = vunpack.c.l.b16 %v164
    %v394 = vunpack.c.l.b16 %v165
    %v395 = vunpack.c.h.b16 %v165
    %v396 = vunpack.c.l.b16 %v166
    %v397 = vunpack.c.h.b16 %v166
    %v398 = vunpack.c.l.b16 %v167
    %v399 = vunpack.c.l.b16 %v168
    %v400 = vunpack.c.h.b16 %v168
    %v401 = vunpack.c.l.b16 %v169
    %v402 = vunpack.c.h.b16 %v169
    %v403 = vunpack.c.l.b16 %v170
    %v404 = vunpack.c.l.b16 %v171
    %v405 = vunpack.c.h.b16 %v171
    %v406 = vunpack.c.l.b16 %v172
    %v407 = vunpack.c.h.b16 %v172
    %v408 = vunpack.c.l.b16 %v173
    %v409 = vunpack.c.l.b16 %v174
    %v410 = vunpack.c.h.b16 %v174
    %v411 = vunpack.c.l.b16 %v175
    %v412 = vunpack.c.h.b16 %v175
    %v413 = vunpack.c.l.b16 %v176
    %v414 = vunpack.c.l.b16 %v177
    %v415 = vunpack.c.h.b16 %v177
    %v416 = vunpack.c.l.b16 %v178
    %v417 = vunpack.c.h.b16 %v178
    %v418 = vunpack.c.l.b16 %v179
    %v419 = vunpack.c.l.b16 %v180
    %v420 = vunpack.c.h.b16 %v180
    %v421 = vunpack.c.l.b16 %v181
    %v422 = vunpack.c.h.b16 %v181
    %v423 = vunpack.c.l.b16 %v182
    %v424 = vunpack.c.l.b16 %v183
    %v425 = vunpack.c.h.b16 %v183
    %v426 = vunpack.c.l.b16 %v184
    %v427 = vunpack.c.h.b16 %v184
    %v428 = vunpack.c.l.b16 %v185
    %v429 = vunpack.c.l.b16 %v186
    %v430 = vunpack.c.h.b16 %v186
    %v431 = vunpack.c.l.b16 %v187
    %v432 = vunpack.c.h.b16 %v187
    %v433 = vunpack.c.l.b16 %v188
    %v434 = vunpack.c.l.b16 %v189
    %v435 = vunpack.c.h.b16 %v189
    %v436 = vunpack.c.l.b16 %v190
    %v437 = vunpack.c.h.b16 %v190
    %v438 = vunpack.c.l.b16 %v191
    %v439 = vunpack.c.l.b16 %v192
    %v440 = vunpack.c.h.b16 %v192
    %v441 = vunpack.c.l.b16 %v193
    %v442 = vunpack.c.h.b16 %v193
    %v443 = vunpack.c.l.b16 %v194
    %v444 = vunpack.c.l.b16 %v195
    %v445 = vunpack.c.h.b16 %v195
    %v446 = vunpack.c.l.b16 %v196
    %v447 = vunpack.c.h.b16 %v196
    %v448 = vunpack.c.l.b16 %v197
    %v449 = vunpack.c.l.b16 %v198
    %v450 = vunpack.c.h.b16 %v198
    %v451 = vunpack.c.l.b16 %v199
    %v452 = vunpack.c.h.b16 %v199
    %v453 = vunpack.c.l.b16 %v200
    %v454 = vunpack.c.l.b16 %v201
    %v455 = vunpack.c.h.b16 %v201
    %v456 = vunpack.c.l.b16 %v202
    %v457 = vunpack.c.h.b16 %v202
    %v458 = vunpack.c.l.b16 %v203
    %v459 = vunpack.c.l.b16 %v204
    %v460 = vunpack.c.h.b16 %v204
    %v461 = vunpack.c.l.b16 %v205
    %v462 = vunpack.c.h.b16 %v205
    %v463 = vunpack.c.l.b16 %v206
    %v464 = vunpack.c.l.b16 %v207
    %v465 = vunpack.c.h.b16 %v207
    %v466 = vunpack.c.l.b16 %v208
    %v467 = vunpack.c.h.b16 %v208
    %v468 = vunpack.c.l.b16 %v209
    %v469 = vunpack.c.l.b16 %v210
    %v470 = vunpack.c.h.b16 %v210
    %v471 = vunpack.c.l.b16 %v211
    %v472 = vunpack.c.h.b16 %v211
    %v473 = vunpack.c.l.b16 %v212
    %v474 = vunpack.c.l.b16 %v213
    %v475 = vunpack.c.h.b16 %v213
    %v476 = vunpack.c.l.b16 %v214
    %v477 = vunpack.c.h.b16 %v214
    %v478 = vunpack.c.l.b16 %v215
    %v479 = vunpack.c.l.b16 %v216
    %v480 = vunpack.c.h.b16 %v216
    %v481 = vunpack.c.l.b16 %v217
    %v482 = vunpack.c.h.b16 %v217
    %v483 = vunpack.c.l.b16 %v218
    %v484 = vunpack.c.l.b16 %v219
    %v485 = vunpack.c.h.b16 %v219
    %v486 = vunpack.c.l.b16 %v220
    %v487 = vunpack.c.h.b16 %v220
    %v488 = vunpack.c.l.b16 %v221
    %v489 = vunpack.c.l.b16 %v222
    %v490 = vunpack.c.h.b16 %v222
    %v491 = vunpack.c.l.b16 %v223
    %v492 = vunpack.c.h.b16 %v223
    %v493 = vunpack.c.l.b16 %v224
    %v494 = vunpack.c.l.b16 %v225
    %v495 = vunpack.c.h.b16 %v225
    %v496 = vunpack.c.l.b16 %v226
    %v497 = vunpack.c.h.b16 %v226
    %v498 = vunpack.c.l.b16 %v227
    %v499 = vunpack.c.l.b16 %v228
    %v500 = vunpack.c.h.b16 %v228
    %v501 = vunpack.c.l.b16 %v229
    %v502 = vunpack.c.h.b16 %v229
    %v503 = vunpack.c.l.b16 %v230
    %v504 = vunpack.c.l.b16 %v231
    %v505 = vunpack.c.h.b16 %v231
    %v506 = vunpack.c.l.b16 %v232
    %v507 = vunpack.c.h.b16 %v232
    %v508 = vunpack.c.l.b16 %v233
    %v509 = vunpack.c.l.b16 %v234
    %v510 = vunpack.c.h.b16 %v234
    %v511 = vunpack.c.l.b16 %v235
    %v512 = vunpack.c.h.b16 %v235
    %v513 = vunpack.c.l.b16 %v236
    %v514 = vunpack.c.l.b16 %v237
    %v515 = vunpack.c.h.b16 %v237
    %v516 = vunpack.c.l.b16 %v238
    %v517 = vunpack.c.h.b16 %v238
    %v518 = vunpack.c.l.b16 %v239
    %v519 = vunpack.c.l.b16 %v240
    %v520 = vunpack.c.h.b16 %v240
    %v521 = vunpack.c.l.b16 %v241
    %v522 = vunpack.c.h.b16 %v241
    %v523 = vunpack.c.l.b16 %v242
    %v524 = vunpack.c.l.b16 %v243
    %v525 = vunpack.c.h.b16 %v243
    %v526 = vunpack.c.l.b16 %v244
    %v527 = vunpack.c.h.b16 %v244
    %v528 = vunpack.c.l.b16 %v245
    %v529 = vpack.c.b16 %v374, %v369
    %v530 = vpack.c.b16 %v375, %v370
    %v531 = vpack.c.b16 %v376, %v371
    %v532 = vpack.c.b16 %v377, %v372
    %v533 = vpack.c.b16 %v378, %v373
    %v534 = vpack.c.b16 %v384, %v379
    %v535 = vpack.c.b16 %v385, %v380
    %v536 = vpack.c.b16 %v386, %v381
    %v537 = vpack.c.b16 %v387, %v382
    %v538 = vpack.c.b16 %v388, %v383
    %v539 = vpack.c.b16 %v394, %v389
    %v540 = vpack.c.b16 %v395, %v390
    %v541 = vpack.c.b16 %v396, %v391
    %v542 = vpack.c.b16 %v397, %v392
    %v543 = vpack.c.b16 %v398, %v393
    %v544 = vpack.c.b16 %v404, %v399
    %v545 = vpack.c.b16 %v405, %v400
    %v546 = vpack.c.b16 %v406, %v401
    %v547 = vpack.c.b16 %v407, %v402
    %v548 = vpack.c.b16 %v408, %v403
    %v549 = vpack.c.b16 %v414, %v409
    %v550 = vpack.c.b16 %v415, %v410
    %v551 = vpack.c.b16 %v416, %v411
    %v552 = vpack.c.b16 %v417, %v412
    %v553 = vpack.c.b16 %v418, %v413
    %v554 = vpack.c.b16 %v424, %v419
    %v555 = vpack.c.b16 %v425, %v420
    %v556 = vpack.c.b16 %v426, %v421
    %v557 = vpack.c.b16 %v427, %v422
    %v558 = vpack.c.b16 %v428, %v423
    %v559 = vpack.c.b16 %v434, %v429
    %v560 = vpack.c.b16 %v435, %v430
    %v561 = vpack.c.b16 %v436, %v431
    %v562 = vpack.c.b16 %v437, %v432
    %v563 = vpack.c.b16 %v438, %v433
    %v564 = vpack.c.b16 %v444, %v439
    %v565 = vpack.c.b16 %v445, %v440
    %v566 = vpack.c.b16 %v446, %v441
    %v567 = vpack.c.b16 %v447, %v442
    %v568 = vpack.c.b16 %v448, %v443
    %v569 = vpack.c.b16 %v454, %v449
    %v570 = vpack.c.b16 %v455, %v450
    %v571 = vpack.c.b16 %v456, %v451
    %v572 = vpack.c.b16 %v457, %v452
    %v573 = vpack.c.b16 %v458, %v453
    %v574 = vpack.c.b16 %v464, %v459
    %v575 = vpack.c.b16 %v465, %v460
    %v576 = vpack.c.b16 %v466, %v461
    %v577 = vpack.c.b16 %v467, %v462
    %v578 = vpack.c.b16 %v468, %v463
    %v579 = vpack.c.b16 %v474, %v469
    %v580 = vpack.c.b16 %v475, %v470
    %v581 = vpack.c.b16 %v476, %v471
    %v582 = vpack.c.b16 %v477, %v472
    %v583 = vpack.c.b16 %v478, %v473
    %v584 = vpack.c.b16 %v484, %v479
    %v585 = vpack.c.b16 %v485, %v480
    %v586 = vpack.c.b16 %v486, %v481
    %v587 = vpack.c.b16 %v487, %v482
    %v588 = vpack.c.b16 %v488, %v483
    %v589 = vpack.c.b16 %v494, %v489
    %v590 = vpack.c.b16 %v495, %v490
    %v591 = vpack.c.b16 %v496, %v491
    %v592 = vpack.c.b16 %v497, %v492
    %v593 = vpack.c.b16 %v498, %v493
    %v594 = vpack.c.b16 %v504, %v499
    %v595 = vpack.c.b16 %v505, %v500
    %v596 = vpack.c.b16 %v506, %v501
    %v597 = vpack.c.b16 %v507, %v502
    %v598 = vpack.c.b16 %v508, %v503
    %v599 = vpack.c.b16 %v514, %v509
    %v600 = vpack.c.b16 %v515, %v510
    %v601 = vpack.c.b16 %v516, %v511
    %v602 = vpack.c.b16 %v517, %v512
    %v603 = vpack.c.b16 %v518, %v513
    %v604 = vpack.c.b16 %v524, %v519
    %v605 = vpack.c.b16 %v525, %v520
    %v606 = vpack.c.b16 %v526, %v521
    %v607 = vpack.c.b16 %v527, %v522
    %v608 = vpack.c.b16 %v528, %v523
    %689 = vmatprep.subr.bf16.mxu0 %v530
    %690 = vmatpush1.bf16.msra.mxu0 %v529
    %691 = vmatprep.subr.bf16.mxu0 %v535
    %692 = vmatpush1.bf16.msra.mxu0 %v534
    %693 = vmatprep.subr.bf16.mxu0 %v540
    %694 = vmatpush1.bf16.msra.mxu0 %v539
    %695 = vmatprep.subr.bf16.mxu0 %v545
    %696 = vmatpush1.bf16.msra.mxu0 %v544
    %697 = vmatprep.subr.bf16.mxu0 %v550
    %698 = vmatpush1.bf16.msra.mxu0 %v549
    %699 = vmatprep.subr.bf16.mxu0 %v555
    %700 = vmatpush1.bf16.msra.mxu0 %v554
    %701 = vmatprep.subr.bf16.mxu0 %v560
    %702 = vmatpush1.bf16.msra.mxu0 %v559
    %703 = vmatprep.subr.bf16.mxu0 %v565
    %704 = vmatpush1.bf16.msra.mxu0 %v564
    %705 = vmatprep.subr.bf16.mxu0 %v570
    %706 = vmatpush1.bf16.msra.mxu0 %v569
    %707 = vmatprep.subr.bf16.mxu0 %v575
    %708 = vmatpush1.bf16.msra.mxu0 %v574
    %709 = vmatprep.subr.bf16.mxu0 %v580
    %710 = vmatpush1.bf16.msra.mxu0 %v579
    %711 = vmatprep.subr.bf16.mxu0 %v585
    %712 = vmatpush1.bf16.msra.mxu0 %v584
    %713 = vmatprep.subr.bf16.mxu0 %v590
    %714 = vmatpush1.bf16.msra.mxu0 %v589
    %715 = vmatprep.subr.bf16.mxu0 %v595
    %716 = vmatpush1.bf16.msra.mxu0 %v594
    %717 = vmatprep.subr.bf16.mxu0 %v600
    %718 = vmatpush1.bf16.msra.mxu0 %v599
    %719 = vmatprep.subr.bf16.mxu0 %v605
    %720 = vmatpush1.bf16.msra.mxu0 %v604
    %721 = vmatprep.mubr.bf16.mxu0 %v149
    %722 = vmatmul.mubr.bf16.gmra.mrb[0].mxu0 %v148
    %v723 = vpop.f32.mrb[0].mxu0
    %v724 = vadd.f32 %v251, %v723
    %v725 = vpop.f32.mrb[0].mxu0
    %v726 = vadd.f32 %v255, %v725
    %v727 = vpop.f32.mrb[0].mxu0
    %v728 = vpop.f32.mrb[0].mxu0
    %729 = vdwg.mxu0
    %730 = vmatprep.subr.bf16.mxu0 %v532
    %731 = vmatpush1.bf16.msra.mxu0 %v531
    %732 = vmatprep.subr.bf16.mxu0 %v537
    %733 = vmatpush1.bf16.msra.mxu0 %v536
    %734 = vmatprep.subr.bf16.mxu0 %v542
    %735 = vmatpush1.bf16.msra.mxu0 %v541
    %736 = vmatprep.subr.bf16.mxu0 %v547
    %737 = vmatpush1.bf16.msra.mxu0 %v546
    %738 = vmatprep.subr.bf16.mxu0 %v552
    %739 = vmatpush1.bf16.msra.mxu0 %v551
    %740 = vmatprep.subr.bf16.mxu0 %v557
    %741 = vmatpush1.bf16.msra.mxu0 %v556
    %742 = vmatprep.subr.bf16.mxu0 %v562
    %743 = vmatpush1.bf16.msra.mxu0 %v561
    %744 = vmatprep.subr.bf16.mxu0 %v567
    %745 = vmatpush1.bf16.msra.mxu0 %v566
    %746 = vmatprep.subr.bf16.mxu0 %v572
    %747 = vmatpush1.bf16.msra.mxu0 %v571
    %748 = vmatprep.subr.bf16.mxu0 %v577
    %749 = vmatpush1.bf16.msra.mxu0 %v576
    %750 = vmatprep.subr.bf16.mxu0 %v582
    %751 = vmatpush1.bf16.msra.mxu0 %v581
    %752 = vmatprep.subr.bf16.mxu0 %v587
    %753 = vmatpush1.bf16.msra.mxu0 %v586
    %754 = vmatprep.subr.bf16.mxu0 %v592
    %755 = vmatpush1.bf16.msra.mxu0 %v591
    %756 = vmatprep.subr.bf16.mxu0 %v597
    %757 = vmatpush1.bf16.msra.mxu0 %v596
    %758 = vmatprep.subr.bf16.mxu0 %v602
    %759 = vmatpush1.bf16.msra.mxu0 %v601
    %760 = vmatprep.subr.bf16.mxu0 %v607
    %761 = vmatpush1.bf16.msra.mxu0 %v606
    %762 = vmatprep.mubr.bf16.mxu0 %v149
    %763 = vmatmul.mubr.bf16.gmra.mrb[0].mxu0 %v148
    %v764 = vpop.f32.mrb[0].mxu0
    %v765 = vadd.f32 %v259, %v764
    %v766 = vpop.f32.mrb[0].mxu0
    %v767 = vadd.f32 %v263, %v766
    %v768 = vpop.f32.mrb[0].mxu0
    %v769 = vpop.f32.mrb[0].mxu0
    %770 = vdwg.mxu0
    %771 = vmatprep.subr.bf16.mxu0 0
    %772 = vmatpush1.bf16.msra.mxu0 %v533
    %773 = vmatprep.subr.bf16.mxu0 0
    %774 = vmatpush1.bf16.msra.mxu0 %v538
    %775 = vmatprep.subr.bf16.mxu0 0
    %776 = vmatpush1.bf16.msra.mxu0 %v543
    %777 = vmatprep.subr.bf16.mxu0 0
    %778 = vmatpush1.bf16.msra.mxu0 %v548
    %779 = vmatprep.subr.bf16.mxu0 0
    %780 = vmatpush1.bf16.msra.mxu0 %v553
    %781 = vmatprep.subr.bf16.mxu0 0
    %782 = vmatpush1.bf16.msra.mxu0 %v558
    %783 = vmatprep.subr.bf16.mxu0 0
    %784 = vmatpush1.bf16.msra.mxu0 %v563
    %785 = vmatprep.subr.bf16.mxu0 0
    %786 = vmatpush1.bf16.msra.mxu0 %v568
    %787 = vmatprep.subr.bf16.mxu0 0
    %788 = vmatpush1.bf16.msra.mxu0 %v573
    %789 = vmatprep.subr.bf16.mxu0 0
    %790 = vmatpush1.bf16.msra.mxu0 %v578
    %791 = vmatprep.subr.bf16.mxu0 0
    %792 = vmatpush1.bf16.msra.mxu0 %v583
    %793 = vmatprep.subr.bf16.mxu0 0
    %794 = vmatpush1.bf16.msra.mxu0 %v588
    %795 = vmatprep.subr.bf16.mxu0 0
    %796 = vmatpush1.bf16.msra.mxu0 %v593
    %797 = vmatprep.subr.bf16.mxu0 0
    %798 = vmatpush1.bf16.msra.mxu0 %v598
    %799 = vmatprep.subr.bf16.mxu0 0
    %800 = vmatpush1.bf16.msra.mxu0 %v603
    %801 = vmatprep.subr.bf16.mxu0 0
    %802 = vmatpush1.bf16.msra.mxu0 %v608
    %803 = vmatprep.mubr.bf16.mxu0 %v149
    %804 = vmatmul.mubr.bf16.gmra.mrb[0].mxu0 %v148
    %v805 = vpop.f32.mrb[0].mxu0
    %v806 = vadd.f32 %v267, %v805
    %v807 = vpop.f32.mrb[0].mxu0
    %v808 = vpop.f32.mrb[0].mxu0
    %v809 = vpop.f32.mrb[0].mxu0
    %810 = vdwg.mxu0
    %v811 = vmax.f32 %v724, 0.0
    %v812 = vmax.f32 %v726, 0.0
    %v813 = vmax.f32 %v765, 0.0
    %v814 = vmax.f32 %v767, 0.0
    %v815 = vmax.f32 %v806, 0.0
    %v816 = vpack.c.bf16 %v811, %v811
    %v817 = vpack.c.bf16 %v812, %v812
    %v818 = vpack.c.bf16 %v813, %v813
    %v819 = vpack.c.bf16 %v814, %v814
    %v820 = vpack.c.bf16 %v815, %v815
    %v821 = vld [vmem:[#allocation8] sm:$0xff]
    %v822 = vld [vmem:[#allocation8 + $0x8] sm:$0xff]
    %v823 = vld [vmem:[#allocation8 + $0x10] sm:$0xf]
    %v824 = vld [vmem:[#allocation8 + $0x14] sm:$0xff]
    %v825 = vld [vmem:[#allocation8 + $0x1c] sm:$0xff]
    %v826 = vld [vmem:[#allocation8 + $0x24] sm:$0xf]
    %v827 = vld [vmem:[#allocation8 + $0x28] sm:$0xff]
    %v828 = vld [vmem:[#allocation8 + $0x30] sm:$0xff]
    %v829 = vld [vmem:[#allocation8 + $0x38] sm:$0xf]
    %v830 = vld [vmem:[#allocation8 + $0x3c] sm:$0xff]
    %v831 = vld [vmem:[#allocation8 + $0x44] sm:$0xff]
    %v832 = vld [vmem:[#allocation8 + $0x4c] sm:$0xf]
    %v833 = vld [vmem:[#allocation8 + $0x50] sm:$0xff]
    %v834 = vld [vmem:[#allocation8 + $0x58] sm:$0xff]
    %v835 = vld [vmem:[#allocation8 + $0x60] sm:$0xf]
    %v836 = vld [vmem:[#allocation8 + $0x64] sm:$0xff]
    %v837 = vld [vmem:[#allocation8 + $0x6c] sm:$0xff]
    %v838 = vld [vmem:[#allocation8 + $0x74] sm:$0xf]
    %v839 = vld [vmem:[#allocation8 + $0x78] sm:$0xff]
    %v840 = vld [vmem:[#allocation8 + $0x80] sm:$0xff]
    %v841 = vld [vmem:[#allocation8 + $0x88] sm:$0xf]
    %v842 = vld [vmem:[#allocation8 + $0x8c] sm:$0xff]
    %v843 = vld [vmem:[#allocation8 + $0x94] sm:$0xff]
    %v844 = vld [vmem:[#allocation8 + $0x9c] sm:$0xf]
    %v845 = vld [vmem:[#allocation8 + $0xa0] sm:$0xff]
    %v846 = vld [vmem:[#allocation8 + $0xa8] sm:$0xff]
    %v847 = vld [vmem:[#allocation8 + $0xb0] sm:$0xf]
    %v848 = vld [vmem:[#allocation8 + $0xb4] sm:$0xff]
    %v849 = vld [vmem:[#allocation8 + $0xbc] sm:$0xff]
    %v850 = vld [vmem:[#allocation8 + $0xc4] sm:$0xf]
    %v851 = vld [vmem:[#allocation8 + $0xc8] sm:$0xff]
    %v852 = vld [vmem:[#allocation8 + $0xd0] sm:$0xff]
    %v853 = vld [vmem:[#allocation8 + $0xd8] sm:$0xf]
    %v854 = vld [vmem:[#allocation8 + $0xdc] sm:$0xff]
    %v855 = vld [vmem:[#allocation8 + $0xe4] sm:$0xff]
    %v856 = vld [vmem:[#allocation8 + $0xec] sm:$0xf]
    %v857 = vld [vmem:[#allocation8 + $0xf0] sm:$0xff]
    %v858 = vld [vmem:[#allocation8 + $0xf8] sm:$0xff]
    %v859 = vld [vmem:[#allocation8 + $0x100] sm:$0xf]
    %v860 = vld [vmem:[#allocation8 + $0x104] sm:$0xff]
    %v861 = vld [vmem:[#allocation8 + $0x10c] sm:$0xff]
    %v862 = vld [vmem:[#allocation8 + $0x114] sm:$0xf]
    %v863 = vld [vmem:[#allocation8 + $0x118] sm:$0xff]
    %v864 = vld [vmem:[#allocation8 + $0x120] sm:$0xff]
    %v865 = vld [vmem:[#allocation8 + $0x128] sm:$0xf]
    %v866 = vld [vmem:[#allocation8 + $0x12c] sm:$0xff]
    %v867 = vld [vmem:[#allocation8 + $0x134] sm:$0xff]
    %v868 = vld [vmem:[#allocation8 + $0x13c] sm:$0xf]
    %v869 = vld [vmem:[#allocation8 + $0x140] sm:$0xff]
    %v870 = vld [vmem:[#allocation8 + $0x148] sm:$0xff]
    %v871 = vld [vmem:[#allocation8 + $0x150] sm:$0xf]
    %v872 = vld [vmem:[#allocation8 + $0x154] sm:$0xff]
    %v873 = vld [vmem:[#allocation8 + $0x15c] sm:$0xff]
    %v874 = vld [vmem:[#allocation8 + $0x164] sm:$0xf]
    %v875 = vld [vmem:[#allocation8 + $0x168] sm:$0xff]
    %v876 = vld [vmem:[#allocation8 + $0x170] sm:$0xff]
    %v877 = vld [vmem:[#allocation8 + $0x178] sm:$0xf]
    %v878 = vld [vmem:[#allocation8 + $0x17c] sm:$0xff]
    %v879 = vld [vmem:[#allocation8 + $0x184] sm:$0xff]
    %v880 = vld [vmem:[#allocation8 + $0x18c] sm:$0xf]
    %v881 = vld [vmem:[#allocation8 + $0x190] sm:$0xff]
    %v882 = vld [vmem:[#allocation8 + $0x198] sm:$0xff]
    %v883 = vld [vmem:[#allocation8 + $0x1a0] sm:$0xf]
    %v884 = vld [vmem:[#allocation8 + $0x1a4] sm:$0xff]
    %v885 = vld [vmem:[#allocation8 + $0x1ac] sm:$0xff]
    %v886 = vld [vmem:[#allocation8 + $0x1b4] sm:$0xf]
    %v887 = vld [vmem:[#allocation8 + $0x1b8] sm:$0xff]
    %v888 = vld [vmem:[#allocation8 + $0x1c0] sm:$0xff]
    %v889 = vld [vmem:[#allocation8 + $0x1c8] sm:$0xf]
    %v890 = vld [vmem:[#allocation8 + $0x1cc] sm:$0xff]
    %v891 = vld [vmem:[#allocation8 + $0x1d4] sm:$0xff]
    %v892 = vld [vmem:[#allocation8 + $0x1dc] sm:$0xf]
    %v893 = vld [vmem:[#allocation8 + $0x1e0] sm:$0xff]
    %v894 = vld [vmem:[#allocation8 + $0x1e8] sm:$0xff]
    %v895 = vld [vmem:[#allocation8 + $0x1f0] sm:$0xf]
    %v896 = vld [vmem:[#allocation8 + $0x1f4] sm:$0xff]
    %v897 = vld [vmem:[#allocation8 + $0x1fc] sm:$0xff]
    %v898 = vld [vmem:[#allocation8 + $0x204] sm:$0xf]
    %v899 = vld [vmem:[#allocation8 + $0x208] sm:$0xff]
    %v900 = vld [vmem:[#allocation8 + $0x210] sm:$0xff]
    %v901 = vld [vmem:[#allocation8 + $0x218] sm:$0xf]
    %v902 = vld [vmem:[#allocation8 + $0x21c] sm:$0xff]
    %v903 = vld [vmem:[#allocation8 + $0x224] sm:$0xff]
    %v904 = vld [vmem:[#allocation8 + $0x22c] sm:$0xf]
    %v905 = vld [vmem:[#allocation8 + $0x230] sm:$0xff]
    %v906 = vld [vmem:[#allocation8 + $0x238] sm:$0xff]
    %v907 = vld [vmem:[#allocation8 + $0x240] sm:$0xf]
    %v908 = vld [vmem:[#allocation8 + $0x244] sm:$0xff]
    %v909 = vld [vmem:[#allocation8 + $0x24c] sm:$0xff]
    %v910 = vld [vmem:[#allocation8 + $0x254] sm:$0xf]
    %v911 = vld [vmem:[#allocation8 + $0x258] sm:$0xff]
    %v912 = vld [vmem:[#allocation8 + $0x260] sm:$0xff]
    %v913 = vld [vmem:[#allocation8 + $0x268] sm:$0xf]
    %v914 = vld [vmem:[#allocation8 + $0x26c] sm:$0xff]
    %v915 = vld [vmem:[#allocation8 + $0x274] sm:$0xff]
    %v916 = vld [vmem:[#allocation8 + $0x27c] sm:$0xf]
    %v917 = vld [vmem:[#allocation8 + $0x280] sm:$0xff]
    %v918 = vld [vmem:[#allocation8 + $0x288] sm:$0xff]
    %v919 = vld [vmem:[#allocation8 + $0x290] sm:$0xf]
    %v920 = vld [vmem:[#allocation8 + $0x294] sm:$0xff]
    %v921 = vld [vmem:[#allocation8 + $0x29c] sm:$0xff]
    %v922 = vld [vmem:[#allocation8 + $0x2a4] sm:$0xf]
    %v923 = vld [vmem:[#allocation8 + $0x2a8] sm:$0xff]
    %v924 = vld [vmem:[#allocation8 + $0x2b0] sm:$0xff]
    %v925 = vld [vmem:[#allocation8 + $0x2b8] sm:$0xf]
    %v926 = vld [vmem:[#allocation8 + $0x2bc] sm:$0xff]
    %v927 = vld [vmem:[#allocation8 + $0x2c4] sm:$0xff]
    %v928 = vld [vmem:[#allocation8 + $0x2cc] sm:$0xf]
    %v929 = vld [vmem:[#allocation8 + $0x2d0] sm:$0xff]
    %v930 = vld [vmem:[#allocation8 + $0x2d8] sm:$0xff]
    %v931 = vld [vmem:[#allocation8 + $0x2e0] sm:$0xf]
    %v932 = vld [vmem:[#allocation8 + $0x2e4] sm:$0xff]
    %v933 = vld [vmem:[#allocation8 + $0x2ec] sm:$0xff]
    %v934 = vld [vmem:[#allocation8 + $0x2f4] sm:$0xf]
    %v935 = vld [vmem:[#allocation8 + $0x2f8] sm:$0xff]
    %v936 = vld [vmem:[#allocation8 + $0x300] sm:$0xff]
    %v937 = vld [vmem:[#allocation8 + $0x308] sm:$0xf]
    %v938 = vld [vmem:[#allocation8 + $0x30c] sm:$0xff]
    %v939 = vld [vmem:[#allocation8 + $0x314] sm:$0xff]
    %v940 = vld [vmem:[#allocation8 + $0x31c] sm:$0xf]
    %v941 = vld [vmem:[#allocation8 + $0x320] sm:$0xff]
    %v942 = vld [vmem:[#allocation8 + $0x328] sm:$0xff]
    %v943 = vld [vmem:[#allocation8 + $0x330] sm:$0xf]
    %v944 = vld [vmem:[#allocation8 + $0x334] sm:$0xff]
    %v945 = vld [vmem:[#allocation8 + $0x33c] sm:$0xff]
    %v946 = vld [vmem:[#allocation8 + $0x344] sm:$0xf]
    %v947 = vld [vmem:[#allocation8 + $0x348] sm:$0xff]
    %v948 = vld [vmem:[#allocation8 + $0x350] sm:$0xff]
    %v949 = vld [vmem:[#allocation8 + $0x358] sm:$0xf]
    %v950 = vld [vmem:[#allocation8 + $0x35c] sm:$0xff]
    %v951 = vld [vmem:[#allocation8 + $0x364] sm:$0xff]
    %v952 = vld [vmem:[#allocation8 + $0x36c] sm:$0xf]
    %v953 = vld [vmem:[#allocation8 + $0x370] sm:$0xff]
    %v954 = vld [vmem:[#allocation8 + $0x378] sm:$0xff]
    %v955 = vld [vmem:[#allocation8 + $0x380] sm:$0xf]
    %v956 = vld [vmem:[#allocation8 + $0x384] sm:$0xff]
    %v957 = vld [vmem:[#allocation8 + $0x38c] sm:$0xff]
    %v958 = vld [vmem:[#allocation8 + $0x394] sm:$0xf]
    %v959 = vld [vmem:[#allocation8 + $0x398] sm:$0xff]
    %v960 = vld [vmem:[#allocation8 + $0x3a0] sm:$0xff]
    %v961 = vld [vmem:[#allocation8 + $0x3a8] sm:$0xf]
    %v962 = vld [vmem:[#allocation8 + $0x3ac] sm:$0xff]
    %v963 = vld [vmem:[#allocation8 + $0x3b4] sm:$0xff]
    %v964 = vld [vmem:[#allocation8 + $0x3bc] sm:$0xf]
    %v965 = vld [vmem:[#allocation8 + $0x3c0] sm:$0xff]
    %v966 = vld [vmem:[#allocation8 + $0x3c8] sm:$0xff]
    %v967 = vld [vmem:[#allocation8 + $0x3d0] sm:$0xf]
    %v968 = vld [vmem:[#allocation8 + $0x3d4] sm:$0xff]
    %v969 = vld [vmem:[#allocation8 + $0x3dc] sm:$0xff]
    %v970 = vld [vmem:[#allocation8 + $0x3e4] sm:$0xf]
    %v971 = vld [vmem:[#allocation8 + $0x3e8] sm:$0xff]
    %v972 = vld [vmem:[#allocation8 + $0x3f0] sm:$0xff]
    %v973 = vld [vmem:[#allocation8 + $0x3f8] sm:$0xf]
    %v974 = vld [vmem:[#allocation8 + $0x3fc] sm:$0xff]
    %v975 = vld [vmem:[#allocation8 + $0x404] sm:$0xff]
    %v976 = vld [vmem:[#allocation8 + $0x40c] sm:$0xf]
    %v977 = vld [vmem:[#allocation8 + $0x410] sm:$0xff]
    %v978 = vld [vmem:[#allocation8 + $0x418] sm:$0xff]
    %v979 = vld [vmem:[#allocation8 + $0x420] sm:$0xf]
    %v980 = vld [vmem:[#allocation8 + $0x424] sm:$0xff]
    %v981 = vld [vmem:[#allocation8 + $0x42c] sm:$0xff]
    %v982 = vld [vmem:[#allocation8 + $0x434] sm:$0xf]
    %v983 = vld [vmem:[#allocation8 + $0x438] sm:$0xff]
    %v984 = vld [vmem:[#allocation8 + $0x440] sm:$0xff]
    %v985 = vld [vmem:[#allocation8 + $0x448] sm:$0xf]
    %v986 = vld [vmem:[#allocation8 + $0x44c] sm:$0xff]
    %v987 = vld [vmem:[#allocation8 + $0x454] sm:$0xff]
    %v988 = vld [vmem:[#allocation8 + $0x45c] sm:$0xf]
    %v989 = vld [vmem:[#allocation8 + $0x460] sm:$0xff]
    %v990 = vld [vmem:[#allocation8 + $0x468] sm:$0xff]
    %v991 = vld [vmem:[#allocation8 + $0x470] sm:$0xf]
    %v992 = vld [vmem:[#allocation8 + $0x474] sm:$0xff]
    %v993 = vld [vmem:[#allocation8 + $0x47c] sm:$0xff]
    %v994 = vld [vmem:[#allocation8 + $0x484] sm:$0xf]
    %v995 = vld [vmem:[#allocation8 + $0x488] sm:$0xff]
    %v996 = vld [vmem:[#allocation8 + $0x490] sm:$0xff]
    %v997 = vld [vmem:[#allocation8 + $0x498] sm:$0xf]
    %v998 = vld [vmem:[#allocation8 + $0x49c] sm:$0xff]
    %v999 = vld [vmem:[#allocation8 + $0x4a4] sm:$0xff]
    %v1000 = vld [vmem:[#allocation8 + $0x4ac] sm:$0xf]
    %v1001 = vld [vmem:[#allocation8 + $0x4b0] sm:$0xff]
    %v1002 = vld [vmem:[#allocation8 + $0x4b8] sm:$0xff]
    %v1003 = vld [vmem:[#allocation8 + $0x4c0] sm:$0xf]
    %v1004 = vld [vmem:[#allocation8 + $0x4c4] sm:$0xff]
    %v1005 = vld [vmem:[#allocation8 + $0x4cc] sm:$0xff]
    %v1006 = vld [vmem:[#allocation8 + $0x4d4] sm:$0xf]
    %v1007 = vld [vmem:[#allocation8 + $0x4d8] sm:$0xff]
    %v1008 = vld [vmem:[#allocation8 + $0x4e0] sm:$0xff]
    %v1009 = vld [vmem:[#allocation8 + $0x4e8] sm:$0xf]
    %v1010 = vld [vmem:[#allocation8 + $0x4ec] sm:$0xff]
    %v1011 = vld [vmem:[#allocation8 + $0x4f4] sm:$0xff]
    %v1012 = vld [vmem:[#allocation8 + $0x4fc] sm:$0xf]
    %v1013 = vld [vmem:[#allocation8 + $0x500] sm:$0xff]
    %v1014 = vld [vmem:[#allocation8 + $0x508] sm:$0xff]
    %v1015 = vld [vmem:[#allocation8 + $0x510] sm:$0xf]
    %v1016 = vld [vmem:[#allocation8 + $0x514] sm:$0xff]
    %v1017 = vld [vmem:[#allocation8 + $0x51c] sm:$0xff]
    %v1018 = vld [vmem:[#allocation8 + $0x524] sm:$0xf]
    %v1019 = vld [vmem:[#allocation8 + $0x528] sm:$0xff]
    %v1020 = vld [vmem:[#allocation8 + $0x530] sm:$0xff]
    %v1021 = vld [vmem:[#allocation8 + $0x538] sm:$0xf]
    %v1022 = vld [vmem:[#allocation8 + $0x53c] sm:$0xff]
    %v1023 = vld [vmem:[#allocation8 + $0x544] sm:$0xff]
    %v1024 = vld [vmem:[#allocation8 + $0x54c] sm:$0xf]
    %v1025 = vld [vmem:[#allocation8 + $0x550] sm:$0xff]
    %v1026 = vld [vmem:[#allocation8 + $0x558] sm:$0xff]
    %v1027 = vld [vmem:[#allocation8 + $0x560] sm:$0xf]
    %v1028 = vld [vmem:[#allocation8 + $0x564] sm:$0xff]
    %v1029 = vld [vmem:[#allocation8 + $0x56c] sm:$0xff]
    %v1030 = vld [vmem:[#allocation8 + $0x574] sm:$0xf]
    %v1031 = vld [vmem:[#allocation8 + $0x578] sm:$0xff]
    %v1032 = vld [vmem:[#allocation8 + $0x580] sm:$0xff]
    %v1033 = vld [vmem:[#allocation8 + $0x588] sm:$0xf]
    %v1034 = vld [vmem:[#allocation8 + $0x58c] sm:$0xff]
    %v1035 = vld [vmem:[#allocation8 + $0x594] sm:$0xff]
    %v1036 = vld [vmem:[#allocation8 + $0x59c] sm:$0xf]
    %v1037 = vld [vmem:[#allocation8 + $0x5a0] sm:$0xff]
    %v1038 = vld [vmem:[#allocation8 + $0x5a8] sm:$0xff]
    %v1039 = vld [vmem:[#allocation8 + $0x5b0] sm:$0xf]
    %v1040 = vld [vmem:[#allocation8 + $0x5b4] sm:$0xff]
    %v1041 = vld [vmem:[#allocation8 + $0x5bc] sm:$0xff]
    %v1042 = vld [vmem:[#allocation8 + $0x5c4] sm:$0xf]
    %v1043 = vld [vmem:[#allocation8 + $0x5c8] sm:$0xff]
    %v1044 = vld [vmem:[#allocation8 + $0x5d0] sm:$0xff]
    %v1045 = vld [vmem:[#allocation8 + $0x5d8] sm:$0xf]
    %v1046 = vld [vmem:[#allocation8 + $0x5dc] sm:$0xff]
    %v1047 = vld [vmem:[#allocation8 + $0x5e4] sm:$0xff]
    %v1048 = vld [vmem:[#allocation8 + $0x5ec] sm:$0xf]
    %v1049 = vld [vmem:[#allocation8 + $0x5f0] sm:$0xff]
    %v1050 = vld [vmem:[#allocation8 + $0x5f8] sm:$0xff]
    %v1051 = vld [vmem:[#allocation8 + $0x600] sm:$0xf]
    %v1052 = vld [vmem:[#allocation8 + $0x604] sm:$0xff]
    %v1053 = vld [vmem:[#allocation8 + $0x60c] sm:$0xff]
    %v1054 = vld [vmem:[#allocation8 + $0x614] sm:$0xf]
    %v1055 = vld [vmem:[#allocation8 + $0x618] sm:$0xff]
    %v1056 = vld [vmem:[#allocation8 + $0x620] sm:$0xff]
    %v1057 = vld [vmem:[#allocation8 + $0x628] sm:$0xf]
    %v1058 = vld [vmem:[#allocation8 + $0x62c] sm:$0xff]
    %v1059 = vld [vmem:[#allocation8 + $0x634] sm:$0xff]
    %v1060 = vld [vmem:[#allocation8 + $0x63c] sm:$0xf]
    %v1061 = vld [vmem:[#allocation10] sm:$0x1f]
    %v1063 = vlaneseq
    %v1064 = vshrl.u32 %v1063, 7
    %v1065 = vsub.s32 0, %v1064
    %v1066 = vrot.slane %v1061, %v1065
    %v1067 = vlaneseq
    %v1068 = vshrl.u32 %v1067, 7
    %v1069 = vsub.s32 1, %v1068
    %v1070 = vrot.slane %v1061, %v1069
    %v1071 = vlaneseq
    %v1072 = vshrl.u32 %v1071, 7
    %v1073 = vsub.s32 2, %v1072
    %v1074 = vrot.slane %v1061, %v1073
    %v1075 = vlaneseq
    %v1076 = vshrl.u32 %v1075, 7
    %v1077 = vsub.s32 3, %v1076
    %v1078 = vrot.slane %v1061, %v1077
    %v1079 = vlaneseq
    %v1080 = vshrl.u32 %v1079, 7
    %v1081 = vsub.s32 4, %v1080
    %v1082 = vrot.slane %v1061, %v1081
    %v1328 = vunpack.c.l.b16 %v821
    %v1329 = vunpack.c.h.b16 %v821
    %v1330 = vunpack.c.l.b16 %v822
    %v1331 = vunpack.c.h.b16 %v822
    %v1332 = vunpack.c.l.b16 %v823
    %v1333 = vunpack.c.l.b16 %v824
    %v1334 = vunpack.c.h.b16 %v824
    %v1335 = vunpack.c.l.b16 %v825
    %v1336 = vunpack.c.h.b16 %v825
    %v1337 = vunpack.c.l.b16 %v826
    %v1338 = vunpack.c.l.b16 %v827
    %v1339 = vunpack.c.h.b16 %v827
    %v1340 = vunpack.c.l.b16 %v828
    %v1341 = vunpack.c.h.b16 %v828
    %v1342 = vunpack.c.l.b16 %v829
    %v1343 = vunpack.c.l.b16 %v830
    %v1344 = vunpack.c.h.b16 %v830
    %v1345 = vunpack.c.l.b16 %v831
    %v1346 = vunpack.c.h.b16 %v831
    %v1347 = vunpack.c.l.b16 %v832
    %v1348 = vunpack.c.l.b16 %v833
    %v1349 = vunpack.c.h.b16 %v833
    %v1350 = vunpack.c.l.b16 %v834
    %v1351 = vunpack.c.h.b16 %v834
    %v1352 = vunpack.c.l.b16 %v835
    %v1353 = vunpack.c.l.b16 %v836
    %v1354 = vunpack.c.h.b16 %v836
    %v1355 = vunpack.c.l.b16 %v837
    %v1356 = vunpack.c.h.b16 %v837
    %v1357 = vunpack.c.l.b16 %v838
    %v1358 = vunpack.c.l.b16 %v839
    %v1359 = vunpack.c.h.b16 %v839
    %v1360 = vunpack.c.l.b16 %v840
    %v1361 = vunpack.c.h.b16 %v840
    %v1362 = vunpack.c.l.b16 %v841
    %v1363 = vunpack.c.l.b16 %v842
    %v1364 = vunpack.c.h.b16 %v842
    %v1365 = vunpack.c.l.b16 %v843
    %v1366 = vunpack.c.h.b16 %v843
    %v1367 = vunpack.c.l.b16 %v844
    %v1368 = vunpack.c.l.b16 %v845
    %v1369 = vunpack.c.h.b16 %v845
    %v1370 = vunpack.c.l.b16 %v846
    %v1371 = vunpack.c.h.b16 %v846
    %v1372 = vunpack.c.l.b16 %v847
    %v1373 = vunpack.c.l.b16 %v848
    %v1374 = vunpack.c.h.b16 %v848
    %v1375 = vunpack.c.l.b16 %v849
    %v1376 = vunpack.c.h.b16 %v849
    %v1377 = vunpack.c.l.b16 %v850
    %v1378 = vunpack.c.l.b16 %v851
    %v1379 = vunpack.c.h.b16 %v851
    %v1380 = vunpack.c.l.b16 %v852
    %v1381 = vunpack.c.h.b16 %v852
    %v1382 = vunpack.c.l.b16 %v853
    %v1383 = vunpack.c.l.b16 %v854
    %v1384 = vunpack.c.h.b16 %v854
    %v1385 = vunpack.c.l.b16 %v855
    %v1386 = vunpack.c.h.b16 %v855
    %v1387 = vunpack.c.l.b16 %v856
    %v1388 = vunpack.c.l.b16 %v857
    %v1389 = vunpack.c.h.b16 %v857
    %v1390 = vunpack.c.l.b16 %v858
    %v1391 = vunpack.c.h.b16 %v858
    %v1392 = vunpack.c.l.b16 %v859
    %v1393 = vunpack.c.l.b16 %v860
    %v1394 = vunpack.c.h.b16 %v860
    %v1395 = vunpack.c.l.b16 %v861
    %v1396 = vunpack.c.h.b16 %v861
    %v1397 = vunpack.c.l.b16 %v862
    %v1398 = vunpack.c.l.b16 %v863
    %v1399 = vunpack.c.h.b16 %v863
    %v1400 = vunpack.c.l.b16 %v864
    %v1401 = vunpack.c.h.b16 %v864
    %v1402 = vunpack.c.l.b16 %v865
    %v1403 = vunpack.c.l.b16 %v866
    %v1404 = vunpack.c.h.b16 %v866
    %v1405 = vunpack.c.l.b16 %v867
    %v1406 = vunpack.c.h.b16 %v867
    %v1407 = vunpack.c.l.b16 %v868
    %v1408 = vunpack.c.l.b16 %v869
    %v1409 = vunpack.c.h.b16 %v869
    %v1410 = vunpack.c.l.b16 %v870
    %v1411 = vunpack.c.h.b16 %v870
    %v1412 = vunpack.c.l.b16 %v871
    %v1413 = vunpack.c.l.b16 %v872
    %v1414 = vunpack.c.h.b16 %v872
    %v1415 = vunpack.c.l.b16 %v873
    %v1416 = vunpack.c.h.b16 %v873
    %v1417 = vunpack.c.l.b16 %v874
    %v1418 = vunpack.c.l.b16 %v875
    %v1419 = vunpack.c.h.b16 %v875
    %v1420 = vunpack.c.l.b16 %v876
    %v1421 = vunpack.c.h.b16 %v876
    %v1422 = vunpack.c.l.b16 %v877
    %v1423 = vunpack.c.l.b16 %v878
    %v1424 = vunpack.c.h.b16 %v878
    %v1425 = vunpack.c.l.b16 %v879
    %v1426 = vunpack.c.h.b16 %v879
    %v1427 = vunpack.c.l.b16 %v880
    %v1428 = vunpack.c.l.b16 %v881
    %v1429 = vunpack.c.h.b16 %v881
    %v1430 = vunpack.c.l.b16 %v882
    %v1431 = vunpack.c.h.b16 %v882
    %v1432 = vunpack.c.l.b16 %v883
    %v1433 = vunpack.c.l.b16 %v884
    %v1434 = vunpack.c.h.b16 %v884
    %v1435 = vunpack.c.l.b16 %v885
    %v1436 = vunpack.c.h.b16 %v885
    %v1437 = vunpack.c.l.b16 %v886
    %v1438 = vunpack.c.l.b16 %v887
    %v1439 = vunpack.c.h.b16 %v887
    %v1440 = vunpack.c.l.b16 %v888
    %v1441 = vunpack.c.h.b16 %v888
    %v1442 = vunpack.c.l.b16 %v889
    %v1443 = vunpack.c.l.b16 %v890
    %v1444 = vunpack.c.h.b16 %v890
    %v1445 = vunpack.c.l.b16 %v891
    %v1446 = vunpack.c.h.b16 %v891
    %v1447 = vunpack.c.l.b16 %v892
    %v1448 = vunpack.c.l.b16 %v893
    %v1449 = vunpack.c.h.b16 %v893
    %v1450 = vunpack.c.l.b16 %v894
    %v1451 = vunpack.c.h.b16 %v894
    %v1452 = vunpack.c.l.b16 %v895
    %v1453 = vunpack.c.l.b16 %v896
    %v1454 = vunpack.c.h.b16 %v896
    %v1455 = vunpack.c.l.b16 %v897
    %v1456 = vunpack.c.h.b16 %v897
    %v1457 = vunpack.c.l.b16 %v898
    %v1458 = vunpack.c.l.b16 %v899
    %v1459 = vunpack.c.h.b16 %v899
    %v1460 = vunpack.c.l.b16 %v900
    %v1461 = vunpack.c.h.b16 %v900
    %v1462 = vunpack.c.l.b16 %v901
    %v1463 = vunpack.c.l.b16 %v902
    %v1464 = vunpack.c.h.b16 %v902
    %v1465 = vunpack.c.l.b16 %v903
    %v1466 = vunpack.c.h.b16 %v903
    %v1467 = vunpack.c.l.b16 %v904
    %v1468 = vunpack.c.l.b16 %v905
    %v1469 = vunpack.c.h.b16 %v905
    %v1470 = vunpack.c.l.b16 %v906
    %v1471 = vunpack.c.h.b16 %v906
    %v1472 = vunpack.c.l.b16 %v907
    %v1473 = vunpack.c.l.b16 %v908
    %v1474 = vunpack.c.h.b16 %v908
    %v1475 = vunpack.c.l.b16 %v909
    %v1476 = vunpack.c.h.b16 %v909
    %v1477 = vunpack.c.l.b16 %v910
    %v1478 = vunpack.c.l.b16 %v911
    %v1479 = vunpack.c.h.b16 %v911
    %v1480 = vunpack.c.l.b16 %v912
    %v1481 = vunpack.c.h.b16 %v912
    %v1482 = vunpack.c.l.b16 %v913
    %v1483 = vunpack.c.l.b16 %v914
    %v1484 = vunpack.c.h.b16 %v914
    %v1485 = vunpack.c.l.b16 %v915
    %v1486 = vunpack.c.h.b16 %v915
    %v1487 = vunpack.c.l.b16 %v916
    %v1488 = vunpack.c.l.b16 %v917
    %v1489 = vunpack.c.h.b16 %v917
    %v1490 = vunpack.c.l.b16 %v918
    %v1491 = vunpack.c.h.b16 %v918
    %v1492 = vunpack.c.l.b16 %v919
    %v1493 = vunpack.c.l.b16 %v920
    %v1494 = vunpack.c.h.b16 %v920
    %v1495 = vunpack.c.l.b16 %v921
    %v1496 = vunpack.c.h.b16 %v921
    %v1497 = vunpack.c.l.b16 %v922
    %v1498 = vunpack.c.l.b16 %v923
    %v1499 = vunpack.c.h.b16 %v923
    %v1500 = vunpack.c.l.b16 %v924
    %v1501 = vunpack.c.h.b16 %v924
    %v1502 = vunpack.c.l.b16 %v925
    %v1503 = vunpack.c.l.b16 %v926
    %v1504 = vunpack.c.h.b16 %v926
    %v1505 = vunpack.c.l.b16 %v927
    %v1506 = vunpack.c.h.b16 %v927
    %v1507 = vunpack.c.l.b16 %v928
    %v1508 = vunpack.c.l.b16 %v929
    %v1509 = vunpack.c.h.b16 %v929
    %v1510 = vunpack.c.l.b16 %v930
    %v1511 = vunpack.c.h.b16 %v930
    %v1512 = vunpack.c.l.b16 %v931
    %v1513 = vunpack.c.l.b16 %v932
    %v1514 = vunpack.c.h.b16 %v932
    %v1515 = vunpack.c.l.b16 %v933
    %v1516 = vunpack.c.h.b16 %v933
    %v1517 = vunpack.c.l.b16 %v934
    %v1518 = vunpack.c.l.b16 %v935
    %v1519 = vunpack.c.h.b16 %v935
    %v1520 = vunpack.c.l.b16 %v936
    %v1521 = vunpack.c.h.b16 %v936
    %v1522 = vunpack.c.l.b16 %v937
    %v1523 = vunpack.c.l.b16 %v938
    %v1524 = vunpack.c.h.b16 %v938
    %v1525 = vunpack.c.l.b16 %v939
    %v1526 = vunpack.c.h.b16 %v939
    %v1527 = vunpack.c.l.b16 %v940
    %v1528 = vunpack.c.l.b16 %v941
    %v1529 = vunpack.c.h.b16 %v941
    %v1530 = vunpack.c.l.b16 %v942
    %v1531 = vunpack.c.h.b16 %v942
    %v1532 = vunpack.c.l.b16 %v943
    %v1533 = vunpack.c.l.b16 %v944
    %v1534 = vunpack.c.h.b16 %v944
    %v1535 = vunpack.c.l.b16 %v945
    %v1536 = vunpack.c.h.b16 %v945
    %v1537 = vunpack.c.l.b16 %v946
    %v1538 = vunpack.c.l.b16 %v947
    %v1539 = vunpack.c.h.b16 %v947
    %v1540 = vunpack.c.l.b16 %v948
    %v1541 = vunpack.c.h.b16 %v948
    %v1542 = vunpack.c.l.b16 %v949
    %v1543 = vunpack.c.l.b16 %v950
    %v1544 = vunpack.c.h.b16 %v950
    %v1545 = vunpack.c.l.b16 %v951
    %v1546 = vunpack.c.h.b16 %v951
    %v1547 = vunpack.c.l.b16 %v952
    %v1548 = vunpack.c.l.b16 %v953
    %v1549 = vunpack.c.h.b16 %v953
    %v1550 = vunpack.c.l.b16 %v954
    %v1551 = vunpack.c.h.b16 %v954
    %v1552 = vunpack.c.l.b16 %v955
    %v1553 = vunpack.c.l.b16 %v956
    %v1554 = vunpack.c.h.b16 %v956
    %v1555 = vunpack.c.l.b16 %v957
    %v1556 = vunpack.c.h.b16 %v957
    %v1557 = vunpack.c.l.b16 %v958
    %v1558 = vunpack.c.l.b16 %v959
    %v1559 = vunpack.c.h.b16 %v959
    %v1560 = vunpack.c.l.b16 %v960
    %v1561 = vunpack.c.h.b16 %v960
    %v1562 = vunpack.c.l.b16 %v961
    %v1563 = vunpack.c.l.b16 %v962
    %v1564 = vunpack.c.h.b16 %v962
    %v1565 = vunpack.c.l.b16 %v963
    %v1566 = vunpack.c.h.b16 %v963
    %v1567 = vunpack.c.l.b16 %v964
    %v1568 = vunpack.c.l.b16 %v965
    %v1569 = vunpack.c.h.b16 %v965
    %v1570 = vunpack.c.l.b16 %v966
    %v1571 = vunpack.c.h.b16 %v966
    %v1572 = vunpack.c.l.b16 %v967
    %v1573 = vunpack.c.l.b16 %v968
    %v1574 = vunpack.c.h.b16 %v968
    %v1575 = vunpack.c.l.b16 %v969
    %v1576 = vunpack.c.h.b16 %v969
    %v1577 = vunpack.c.l.b16 %v970
    %v1578 = vunpack.c.l.b16 %v971
    %v1579 = vunpack.c.h.b16 %v971
    %v1580 = vunpack.c.l.b16 %v972
    %v1581 = vunpack.c.h.b16 %v972
    %v1582 = vunpack.c.l.b16 %v973
    %v1583 = vunpack.c.l.b16 %v974
    %v1584 = vunpack.c.h.b16 %v974
    %v1585 = vunpack.c.l.b16 %v975
    %v1586 = vunpack.c.h.b16 %v975
    %v1587 = vunpack.c.l.b16 %v976
    %v1588 = vunpack.c.l.b16 %v977
    %v1589 = vunpack.c.h.b16 %v977
    %v1590 = vunpack.c.l.b16 %v978
    %v1591 = vunpack.c.h.b16 %v978
    %v1592 = vunpack.c.l.b16 %v979
    %v1593 = vunpack.c.l.b16 %v980
    %v1594 = vunpack.c.h.b16 %v980
    %v1595 = vunpack.c.l.b16 %v981
    %v1596 = vunpack.c.h.b16 %v981
    %v1597 = vunpack.c.l.b16 %v982
    %v1598 = vunpack.c.l.b16 %v983
    %v1599 = vunpack.c.h.b16 %v983
    %v1600 = vunpack.c.l.b16 %v984
    %v1601 = vunpack.c.h.b16 %v984
    %v1602 = vunpack.c.l.b16 %v985
    %v1603 = vunpack.c.l.b16 %v986
    %v1604 = vunpack.c.h.b16 %v986
    %v1605 = vunpack.c.l.b16 %v987
    %v1606 = vunpack.c.h.b16 %v987
    %v1607 = vunpack.c.l.b16 %v988
    %v1608 = vunpack.c.l.b16 %v989
    %v1609 = vunpack.c.h.b16 %v989
    %v1610 = vunpack.c.l.b16 %v990
    %v1611 = vunpack.c.h.b16 %v990
    %v1612 = vunpack.c.l.b16 %v991
    %v1613 = vunpack.c.l.b16 %v992
    %v1614 = vunpack.c.h.b16 %v992
    %v1615 = vunpack.c.l.b16 %v993
    %v1616 = vunpack.c.h.b16 %v993
    %v1617 = vunpack.c.l.b16 %v994
    %v1618 = vunpack.c.l.b16 %v995
    %v1619 = vunpack.c.h.b16 %v995
    %v1620 = vunpack.c.l.b16 %v996
    %v1621 = vunpack.c.h.b16 %v996
    %v1622 = vunpack.c.l.b16 %v997
    %v1623 = vunpack.c.l.b16 %v998
    %v1624 = vunpack.c.h.b16 %v998
    %v1625 = vunpack.c.l.b16 %v999
    %v1626 = vunpack.c.h.b16 %v999
    %v1627 = vunpack.c.l.b16 %v1000
    %v1628 = vunpack.c.l.b16 %v1001
    %v1629 = vunpack.c.h.b16 %v1001
    %v1630 = vunpack.c.l.b16 %v1002
    %v1631 = vunpack.c.h.b16 %v1002
    %v1632 = vunpack.c.l.b16 %v1003
    %v1633 = vunpack.c.l.b16 %v1004
    %v1634 = vunpack.c.h.b16 %v1004
    %v1635 = vunpack.c.l.b16 %v1005
    %v1636 = vunpack.c.h.b16 %v1005
    %v1637 = vunpack.c.l.b16 %v1006
    %v1638 = vunpack.c.l.b16 %v1007
    %v1639 = vunpack.c.h.b16 %v1007
    %v1640 = vunpack.c.l.b16 %v1008
    %v1641 = vunpack.c.h.b16 %v1008
    %v1642 = vunpack.c.l.b16 %v1009
    %v1643 = vunpack.c.l.b16 %v1010
    %v1644 = vunpack.c.h.b16 %v1010
    %v1645 = vunpack.c.l.b16 %v1011
    %v1646 = vunpack.c.h.b16 %v1011
    %v1647 = vunpack.c.l.b16 %v1012
    %v1648 = vunpack.c.l.b16 %v1013
    %v1649 = vunpack.c.h.b16 %v1013
    %v1650 = vunpack.c.l.b16 %v1014
    %v1651 = vunpack.c.h.b16 %v1014
    %v1652 = vunpack.c.l.b16 %v1015
    %v1653 = vunpack.c.l.b16 %v1016
    %v1654 = vunpack.c.h.b16 %v1016
    %v1655 = vunpack.c.l.b16 %v1017
    %v1656 = vunpack.c.h.b16 %v1017
    %v1657 = vunpack.c.l.b16 %v1018
    %v1658 = vunpack.c.l.b16 %v1019
    %v1659 = vunpack.c.h.b16 %v1019
    %v1660 = vunpack.c.l.b16 %v1020
    %v1661 = vunpack.c.h.b16 %v1020
    %v1662 = vunpack.c.l.b16 %v1021
    %v1663 = vunpack.c.l.b16 %v1022
    %v1664 = vunpack.c.h.b16 %v1022
    %v1665 = vunpack.c.l.b16 %v1023
    %v1666 = vunpack.c.h.b16 %v1023
    %v1667 = vunpack.c.l.b16 %v1024
    %v1668 = vunpack.c.l.b16 %v1025
    %v1669 = vunpack.c.h.b16 %v1025
    %v1670 = vunpack.c.l.b16 %v1026
    %v1671 = vunpack.c.h.b16 %v1026
    %v1672 = vunpack.c.l.b16 %v1027
    %v1673 = vunpack.c.l.b16 %v1028
    %v1674 = vunpack.c.h.b16 %v1028
    %v1675 = vunpack.c.l.b16 %v1029
    %v1676 = vunpack.c.h.b16 %v1029
    %v1677 = vunpack.c.l.b16 %v1030
    %v1678 = vunpack.c.l.b16 %v1031
    %v1679 = vunpack.c.h.b16 %v1031
    %v1680 = vunpack.c.l.b16 %v1032
    %v1681 = vunpack.c.h.b16 %v1032
    %v1682 = vunpack.c.l.b16 %v1033
    %v1683 = vunpack.c.l.b16 %v1034
    %v1684 = vunpack.c.h.b16 %v1034
    %v1685 = vunpack.c.l.b16 %v1035
    %v1686 = vunpack.c.h.b16 %v1035
    %v1687 = vunpack.c.l.b16 %v1036
    %v1688 = vunpack.c.l.b16 %v1037
    %v1689 = vunpack.c.h.b16 %v1037
    %v1690 = vunpack.c.l.b16 %v1038
    %v1691 = vunpack.c.h.b16 %v1038
    %v1692 = vunpack.c.l.b16 %v1039
    %v1693 = vunpack.c.l.b16 %v1040
    %v1694 = vunpack.c.h.b16 %v1040
    %v1695 = vunpack.c.l.b16 %v1041
    %v1696 = vunpack.c.h.b16 %v1041
    %v1697 = vunpack.c.l.b16 %v1042
    %v1698 = vunpack.c.l.b16 %v1043
    %v1699 = vunpack.c.h.b16 %v1043
    %v1700 = vunpack.c.l.b16 %v1044
    %v1701 = vunpack.c.h.b16 %v1044
    %v1702 = vunpack.c.l.b16 %v1045
    %v1703 = vunpack.c.l.b16 %v1046
    %v1704 = vunpack.c.h.b16 %v1046
    %v1705 = vunpack.c.l.b16 %v1047
    %v1706 = vunpack.c.h.b16 %v1047
    %v1707 = vunpack.c.l.b16 %v1048
    %v1708 = vunpack.c.l.b16 %v1049
    %v1709 = vunpack.c.h.b16 %v1049
    %v1710 = vunpack.c.l.b16 %v1050
    %v1711 = vunpack.c.h.b16 %v1050
    %v1712 = vunpack.c.l.b16 %v1051
    %v1713 = vunpack.c.l.b16 %v1052
    %v1714 = vunpack.c.h.b16 %v1052
    %v1715 = vunpack.c.l.b16 %v1053
    %v1716 = vunpack.c.h.b16 %v1053
    %v1717 = vunpack.c.l.b16 %v1054
    %v1718 = vunpack.c.l.b16 %v1055
    %v1719 = vunpack.c.h.b16 %v1055
    %v1720 = vunpack.c.l.b16 %v1056
    %v1721 = vunpack.c.h.b16 %v1056
    %v1722 = vunpack.c.l.b16 %v1057
    %v1723 = vunpack.c.l.b16 %v1058
    %v1724 = vunpack.c.h.b16 %v1058
    %v1725 = vunpack.c.l.b16 %v1059
    %v1726 = vunpack.c.h.b16 %v1059
    %v1727 = vunpack.c.l.b16 %v1060
    %v1728 = vpack.c.b16 %v1333, %v1328
    %v1729 = vpack.c.b16 %v1334, %v1329
    %v1730 = vpack.c.b16 %v1335, %v1330
    %v1731 = vpack.c.b16 %v1336, %v1331
    %v1732 = vpack.c.b16 %v1337, %v1332
    %v1733 = vpack.c.b16 %v1343, %v1338
    %v1734 = vpack.c.b16 %v1344, %v1339
    %v1735 = vpack.c.b16 %v1345, %v1340
    %v1736 = vpack.c.b16 %v1346, %v1341
    %v1737 = vpack.c.b16 %v1347, %v1342
    %v1738 = vpack.c.b16 %v1353, %v1348
    %v1739 = vpack.c.b16 %v1354, %v1349
    %v1740 = vpack.c.b16 %v1355, %v1350
    %v1741 = vpack.c.b16 %v1356, %v1351
    %v1742 = vpack.c.b16 %v1357, %v1352
    %v1743 = vpack.c.b16 %v1363, %v1358
    %v1744 = vpack.c.b16 %v1364, %v1359
    %v1745 = vpack.c.b16 %v1365, %v1360
    %v1746 = vpack.c.b16 %v1366, %v1361
    %v1747 = vpack.c.b16 %v1367, %v1362
    %v1748 = vpack.c.b16 %v1373, %v1368
    %v1749 = vpack.c.b16 %v1374, %v1369
    %v1750 = vpack.c.b16 %v1375, %v1370
    %v1751 = vpack.c.b16 %v1376, %v1371
    %v1752 = vpack.c.b16 %v1377, %v1372
    %v1753 = vpack.c.b16 %v1383, %v1378
    %v1754 = vpack.c.b16 %v1384, %v1379
    %v1755 = vpack.c.b16 %v1385, %v1380
    %v1756 = vpack.c.b16 %v1386, %v1381
    %v1757 = vpack.c.b16 %v1387, %v1382
    %v1758 = vpack.c.b16 %v1393, %v1388
    %v1759 = vpack.c.b16 %v1394, %v1389
    %v1760 = vpack.c.b16 %v1395, %v1390
    %v1761 = vpack.c.b16 %v1396, %v1391
    %v1762 = vpack.c.b16 %v1397, %v1392
    %v1763 = vpack.c.b16 %v1403, %v1398
    %v1764 = vpack.c.b16 %v1404, %v1399
    %v1765 = vpack.c.b16 %v1405, %v1400
    %v1766 = vpack.c.b16 %v1406, %v1401
    %v1767 = vpack.c.b16 %v1407, %v1402
    %v1768 = vpack.c.b16 %v1413, %v1408
    %v1769 = vpack.c.b16 %v1414, %v1409
    %v1770 = vpack.c.b16 %v1415, %v1410
    %v1771 = vpack.c.b16 %v1416, %v1411
    %v1772 = vpack.c.b16 %v1417, %v1412
    %v1773 = vpack.c.b16 %v1423, %v1418
    %v1774 = vpack.c.b16 %v1424, %v1419
    %v1775 = vpack.c.b16 %v1425, %v1420
    %v1776 = vpack.c.b16 %v1426, %v1421
    %v1777 = vpack.c.b16 %v1427, %v1422
    %v1778 = vpack.c.b16 %v1433, %v1428
    %v1779 = vpack.c.b16 %v1434, %v1429
    %v1780 = vpack.c.b16 %v1435, %v1430
    %v1781 = vpack.c.b16 %v1436, %v1431
    %v1782 = vpack.c.b16 %v1437, %v1432
    %v1783 = vpack.c.b16 %v1443, %v1438
    %v1784 = vpack.c.b16 %v1444, %v1439
    %v1785 = vpack.c.b16 %v1445, %v1440
    %v1786 = vpack.c.b16 %v1446, %v1441
    %v1787 = vpack.c.b16 %v1447, %v1442
    %v1788 = vpack.c.b16 %v1453, %v1448
    %v1789 = vpack.c.b16 %v1454, %v1449
    %v1790 = vpack.c.b16 %v1455, %v1450
    %v1791 = vpack.c.b16 %v1456, %v1451
    %v1792 = vpack.c.b16 %v1457, %v1452
    %v1793 = vpack.c.b16 %v1463, %v1458
    %v1794 = vpack.c.b16 %v1464, %v1459
    %v1795 = vpack.c.b16 %v1465, %v1460
    %v1796 = vpack.c.b16 %v1466, %v1461
    %v1797 = vpack.c.b16 %v1467, %v1462
    %v1798 = vpack.c.b16 %v1473, %v1468
    %v1799 = vpack.c.b16 %v1474, %v1469
    %v1800 = vpack.c.b16 %v1475, %v1470
    %v1801 = vpack.c.b16 %v1476, %v1471
    %v1802 = vpack.c.b16 %v1477, %v1472
    %v1803 = vpack.c.b16 %v1483, %v1478
    %v1804 = vpack.c.b16 %v1484, %v1479
    %v1805 = vpack.c.b16 %v1485, %v1480
    %v1806 = vpack.c.b16 %v1486, %v1481
    %v1807 = vpack.c.b16 %v1487, %v1482
    %v1808 = vpack.c.b16 %v1493, %v1488
    %v1809 = vpack.c.b16 %v1494, %v1489
    %v1810 = vpack.c.b16 %v1495, %v1490
    %v1811 = vpack.c.b16 %v1496, %v1491
    %v1812 = vpack.c.b16 %v1497, %v1492
    %v1813 = vpack.c.b16 %v1503, %v1498
    %v1814 = vpack.c.b16 %v1504, %v1499
    %v1815 = vpack.c.b16 %v1505, %v1500
    %v1816 = vpack.c.b16 %v1506, %v1501
    %v1817 = vpack.c.b16 %v1507, %v1502
    %v1818 = vpack.c.b16 %v1513, %v1508
    %v1819 = vpack.c.b16 %v1514, %v1509
    %v1820 = vpack.c.b16 %v1515, %v1510
    %v1821 = vpack.c.b16 %v1516, %v1511
    %v1822 = vpack.c.b16 %v1517, %v1512
    %v1823 = vpack.c.b16 %v1523, %v1518
    %v1824 = vpack.c.b16 %v1524, %v1519
    %v1825 = vpack.c.b16 %v1525, %v1520
    %v1826 = vpack.c.b16 %v1526, %v1521
    %v1827 = vpack.c.b16 %v1527, %v1522
    %v1828 = vpack.c.b16 %v1533, %v1528
    %v1829 = vpack.c.b16 %v1534, %v1529
    %v1830 = vpack.c.b16 %v1535, %v1530
    %v1831 = vpack.c.b16 %v1536, %v1531
    %v1832 = vpack.c.b16 %v1537, %v1532
    %v1833 = vpack.c.b16 %v1543, %v1538
    %v1834 = vpack.c.b16 %v1544, %v1539
    %v1835 = vpack.c.b16 %v1545, %v1540
    %v1836 = vpack.c.b16 %v1546, %v1541
    %v1837 = vpack.c.b16 %v1547, %v1542
    %v1838 = vpack.c.b16 %v1553, %v1548
    %v1839 = vpack.c.b16 %v1554, %v1549
    %v1840 = vpack.c.b16 %v1555, %v1550
    %v1841 = vpack.c.b16 %v1556, %v1551
    %v1842 = vpack.c.b16 %v1557, %v1552
    %v1843 = vpack.c.b16 %v1563, %v1558
    %v1844 = vpack.c.b16 %v1564, %v1559
    %v1845 = vpack.c.b16 %v1565, %v1560
    %v1846 = vpack.c.b16 %v1566, %v1561
    %v1847 = vpack.c.b16 %v1567, %v1562
    %v1848 = vpack.c.b16 %v1573, %v1568
    %v1849 = vpack.c.b16 %v1574, %v1569
    %v1850 = vpack.c.b16 %v1575, %v1570
    %v1851 = vpack.c.b16 %v1576, %v1571
    %v1852 = vpack.c.b16 %v1577, %v1572
    %v1853 = vpack.c.b16 %v1583, %v1578
    %v1854 = vpack.c.b16 %v1584, %v1579
    %v1855 = vpack.c.b16 %v1585, %v1580
    %v1856 = vpack.c.b16 %v1586, %v1581
    %v1857 = vpack.c.b16 %v1587, %v1582
    %v1858 = vpack.c.b16 %v1593, %v1588
    %v1859 = vpack.c.b16 %v1594, %v1589
    %v1860 = vpack.c.b16 %v1595, %v1590
    %v1861 = vpack.c.b16 %v1596, %v1591
    %v1862 = vpack.c.b16 %v1597, %v1592
    %v1863 = vpack.c.b16 %v1603, %v1598
    %v1864 = vpack.c.b16 %v1604, %v1599
    %v1865 = vpack.c.b16 %v1605, %v1600
    %v1866 = vpack.c.b16 %v1606, %v1601
    %v1867 = vpack.c.b16 %v1607, %v1602
    %v1868 = vpack.c.b16 %v1613, %v1608
    %v1869 = vpack.c.b16 %v1614, %v1609
    %v1870 = vpack.c.b16 %v1615, %v1610
    %v1871 = vpack.c.b16 %v1616, %v1611
    %v1872 = vpack.c.b16 %v1617, %v1612
    %v1873 = vpack.c.b16 %v1623, %v1618
    %v1874 = vpack.c.b16 %v1624, %v1619
    %v1875 = vpack.c.b16 %v1625, %v1620
    %v1876 = vpack.c.b16 %v1626, %v1621
    %v1877 = vpack.c.b16 %v1627, %v1622
    %v1878 = vpack.c.b16 %v1633, %v1628
    %v1879 = vpack.c.b16 %v1634, %v1629
    %v1880 = vpack.c.b16 %v1635, %v1630
    %v1881 = vpack.c.b16 %v1636, %v1631
    %v1882 = vpack.c.b16 %v1637, %v1632
    %v1883 = vpack.c.b16 %v1643, %v1638
    %v1884 = vpack.c.b16 %v1644, %v1639
    %v1885 = vpack.c.b16 %v1645, %v1640
    %v1886 = vpack.c.b16 %v1646, %v1641
    %v1887 = vpack.c.b16 %v1647, %v1642
    %v1888 = vpack.c.b16 %v1653, %v1648
    %v1889 = vpack.c.b16 %v1654, %v1649
    %v1890 = vpack.c.b16 %v1655, %v1650
    %v1891 = vpack.c.b16 %v1656, %v1651
    %v1892 = vpack.c.b16 %v1657, %v1652
    %v1893 = vpack.c.b16 %v1663, %v1658
    %v1894 = vpack.c.b16 %v1664, %v1659
    %v1895 = vpack.c.b16 %v1665, %v1660
    %v1896 = vpack.c.b16 %v1666, %v1661
    %v1897 = vpack.c.b16 %v1667, %v1662
    %v1898 = vpack.c.b16 %v1673, %v1668
    %v1899 = vpack.c.b16 %v1674, %v1669
    %v1900 = vpack.c.b16 %v1675, %v1670
    %v1901 = vpack.c.b16 %v1676, %v1671
    %v1902 = vpack.c.b16 %v1677, %v1672
    %v1903 = vpack.c.b16 %v1683, %v1678
    %v1904 = vpack.c.b16 %v1684, %v1679
    %v1905 = vpack.c.b16 %v1685, %v1680
    %v1906 = vpack.c.b16 %v1686, %v1681
    %v1907 = vpack.c.b16 %v1687, %v1682
    %v1908 = vpack.c.b16 %v1693, %v1688
    %v1909 = vpack.c.b16 %v1694, %v1689
    %v1910 = vpack.c.b16 %v1695, %v1690
    %v1911 = vpack.c.b16 %v1696, %v1691
    %v1912 = vpack.c.b16 %v1697, %v1692
    %v1913 = vpack.c.b16 %v1703, %v1698
    %v1914 = vpack.c.b16 %v1704, %v1699
    %v1915 = vpack.c.b16 %v1705, %v1700
    %v1916 = vpack.c.b16 %v1706, %v1701
    %v1917 = vpack.c.b16 %v1707, %v1702
    %v1918 = vpack.c.b16 %v1713, %v1708
    %v1919 = vpack.c.b16 %v1714, %v1709
    %v1920 = vpack.c.b16 %v1715, %v1710
    %v1921 = vpack.c.b16 %v1716, %v1711
    %v1922 = vpack.c.b16 %v1717, %v1712
    %v1923 = vpack.c.b16 %v1723, %v1718
    %v1924 = vpack.c.b16 %v1724, %v1719
    %v1925 = vpack.c.b16 %v1725, %v1720
    %v1926 = vpack.c.b16 %v1726, %v1721
    %v1927 = vpack.c.b16 %v1727, %v1722
    %2128 = vmatprep.subr.bf16.mxu0 %v1729
    %2129 = vmatpush1.bf16.msra.mxu0 %v1728
    %2130 = vmatprep.subr.bf16.mxu0 %v1734
    %2131 = vmatpush1.bf16.msra.mxu0 %v1733
    %2132 = vmatprep.subr.bf16.mxu0 %v1739
    %2133 = vmatpush1.bf16.msra.mxu0 %v1738
    %2134 = vmatprep.subr.bf16.mxu0 %v1744
    %2135 = vmatpush1.bf16.msra.mxu0 %v1743
    %2136 = vmatprep.subr.bf16.mxu0 %v1749
    %2137 = vmatpush1.bf16.msra.mxu0 %v1748
    %2138 = vmatprep.subr.bf16.mxu0 %v1754
    %2139 = vmatpush1.bf16.msra.mxu0 %v1753
    %2140 = vmatprep.subr.bf16.mxu0 %v1759
    %2141 = vmatpush1.bf16.msra.mxu0 %v1758
    %2142 = vmatprep.subr.bf16.mxu0 %v1764
    %2143 = vmatpush1.bf16.msra.mxu0 %v1763
    %2144 = vmatprep.subr.bf16.mxu0 %v1769
    %2145 = vmatpush1.bf16.msra.mxu0 %v1768
    %2146 = vmatprep.subr.bf16.mxu0 %v1774
    %2147 = vmatpush1.bf16.msra.mxu0 %v1773
    %2148 = vmatprep.subr.bf16.mxu0 %v1779
    %2149 = vmatpush1.bf16.msra.mxu0 %v1778
    %2150 = vmatprep.subr.bf16.mxu0 %v1784
    %2151 = vmatpush1.bf16.msra.mxu0 %v1783
    %2152 = vmatprep.subr.bf16.mxu0 %v1789
    %2153 = vmatpush1.bf16.msra.mxu0 %v1788
    %2154 = vmatprep.subr.bf16.mxu0 %v1794
    %2155 = vmatpush1.bf16.msra.mxu0 %v1793
    %2156 = vmatprep.subr.bf16.mxu0 %v1799
    %2157 = vmatpush1.bf16.msra.mxu0 %v1798
    %2158 = vmatprep.subr.bf16.mxu0 %v1804
    %2159 = vmatpush1.bf16.msra.mxu0 %v1803
    %2160 = vmatprep.mubr.bf16.mxu0 %v817
    %2161 = vmatmul.mubr.bf16.gmra.mrb[0].mxu0 %v816
    %v2162 = vpop.f32.mrb[0].mxu0
    %v2163 = vadd.f32 %v1066, %v2162
    %v2164 = vpop.f32.mrb[0].mxu0
    %v2165 = vadd.f32 %v1070, %v2164
    %v2166 = vpop.f32.mrb[0].mxu0
    %v2167 = vpop.f32.mrb[0].mxu0
    %2168 = vdwg.mxu0
    %2169 = vmatprep.subr.bf16.mxu0 %v1809
    %2170 = vmatpush1.bf16.msra.mxu0 %v1808
    %2171 = vmatprep.subr.bf16.mxu0 %v1814
    %2172 = vmatpush1.bf16.msra.mxu0 %v1813
    %2173 = vmatprep.subr.bf16.mxu0 %v1819
    %2174 = vmatpush1.bf16.msra.mxu0 %v1818
    %2175 = vmatprep.subr.bf16.mxu0 %v1824
    %2176 = vmatpush1.bf16.msra.mxu0 %v1823
    %2177 = vmatprep.subr.bf16.mxu0 %v1829
    %2178 = vmatpush1.bf16.msra.mxu0 %v1828
    %2179 = vmatprep.subr.bf16.mxu0 %v1834
    %2180 = vmatpush1.bf16.msra.mxu0 %v1833
    %2181 = vmatprep.subr.bf16.mxu0 %v1839
    %2182 = vmatpush1.bf16.msra.mxu0 %v1838
    %2183 = vmatprep.subr.bf16.mxu0 %v1844
    %2184 = vmatpush1.bf16.msra.mxu0 %v1843
    %2185 = vmatprep.subr.bf16.mxu0 %v1849
    %2186 = vmatpush1.bf16.msra.mxu0 %v1848
    %2187 = vmatprep.subr.bf16.mxu0 %v1854
    %2188 = vmatpush1.bf16.msra.mxu0 %v1853
    %2189 = vmatprep.subr.bf16.mxu0 %v1859
    %2190 = vmatpush1.bf16.msra.mxu0 %v1858
    %2191 = vmatprep.subr.bf16.mxu0 %v1864
    %2192 = vmatpush1.bf16.msra.mxu0 %v1863
    %2193 = vmatprep.subr.bf16.mxu0 %v1869
    %2194 = vmatpush1.bf16.msra.mxu0 %v1868
    %2195 = vmatprep.subr.bf16.mxu0 %v1874
    %2196 = vmatpush1.bf16.msra.mxu0 %v1873
    %2197 = vmatprep.subr.bf16.mxu0 %v1879
    %2198 = vmatpush1.bf16.msra.mxu0 %v1878
    %2199 = vmatprep.subr.bf16.mxu0 %v1884
    %2200 = vmatpush1.bf16.msra.mxu0 %v1883
    %2201 = vmatprep.mubr.bf16.mxu0 %v819
    %2202 = vmatmul.mubr.bf16.gmra.mrb[0].mxu0 %v818
    %v2203 = vpop.f32.mrb[0].mxu0
    %v2204 = vadd.f32 %v2163, %v2203
    %v2205 = vpop.f32.mrb[0].mxu0
    %v2206 = vadd.f32 %v2165, %v2205
    %v2207 = vpop.f32.mrb[0].mxu0
    %v2208 = vpop.f32.mrb[0].mxu0
    %2209 = vdwg.mxu0
    %2210 = vmatprep.subr.bf16.mxu0 %v1889
    %2211 = vmatpush1.bf16.msra.mxu0 %v1888
    %2212 = vmatprep.subr.bf16.mxu0 %v1894
    %2213 = vmatpush1.bf16.msra.mxu0 %v1893
    %2214 = vmatprep.subr.bf16.mxu0 %v1899
    %2215 = vmatpush1.bf16.msra.mxu0 %v1898
    %2216 = vmatprep.subr.bf16.mxu0 %v1904
    %2217 = vmatpush1.bf16.msra.mxu0 %v1903
    %2218 = vmatprep.subr.bf16.mxu0 %v1909
    %2219 = vmatpush1.bf16.msra.mxu0 %v1908
    %2220 = vmatprep.subr.bf16.mxu0 %v1914
    %2221 = vmatpush1.bf16.msra.mxu0 %v1913
    %2222 = vmatprep.subr.bf16.mxu0 %v1919
    %2223 = vmatpush1.bf16.msra.mxu0 %v1918
    %2224 = vmatprep.subr.bf16.mxu0 %v1924
    %2225 = vmatpush1.bf16.msra.mxu0 %v1923
    %2226 = vmatprep.subr.bf16.mxu0 0
    %2227 = vmatpush1.bf16.msra.mxu0 0
    %2228 = vmatprep.subr.bf16.mxu0 0
    %2229 = vmatpush1.bf16.msra.mxu0 0
    %2230 = vmatprep.subr.bf16.mxu0 0
    %2231 = vmatpush1.bf16.msra.mxu0 0
    %2232 = vmatprep.subr.bf16.mxu0 0
    %2233 = vmatpush1.bf16.msra.mxu0 0
    %2234 = vmatprep.subr.bf16.mxu0 0
    %2235 = vmatpush1.bf16.msra.mxu0 0
    %2236 = vmatprep.subr.bf16.mxu0 0
    %2237 = vmatpush1.bf16.msra.mxu0 0
    %2238 = vmatprep.subr.bf16.mxu0 0
    %2239 = vmatpush1.bf16.msra.mxu0 0
    %2240 = vmatprep.subr.bf16.mxu0 0
    %2241 = vmatpush1.bf16.msra.mxu0 0
    %2242 = vmatprep.mubr.bf16.mxu0 0
    %2243 = vmatmul.mubr.bf16.gmra.mrb[0].mxu0 %v820
    %v2244 = vpop.f32.mrb[0].mxu0
    %v2245 = vadd.f32 %v2204, %v2244
    %v2246 = vpop.f32.mrb[0].mxu0
    %v2247 = vadd.f32 %v2206, %v2246
    %v2248 = vpop.f32.mrb[0].mxu0
    %v2249 = vpop.f32.mrb[0].mxu0
    %2250 = vdwg.mxu0
    %2251 = vmatprep.subr.bf16.mxu0 %v1731
    %2252 = vmatpush1.bf16.msra.mxu0 %v1730
    %2253 = vmatprep.subr.bf16.mxu0 %v1736
    %2254 = vmatpush1.bf16.msra.mxu0 %v1735
    %2255 = vmatprep.subr.bf16.mxu0 %v1741
    %2256 = vmatpush1.bf16.msra.mxu0 %v1740
    %2257 = vmatprep.subr.bf16.mxu0 %v1746
    %2258 = vmatpush1.bf16.msra.mxu0 %v1745
    %2259 = vmatprep.subr.bf16.mxu0 %v1751
    %2260 = vmatpush1.bf16.msra.mxu0 %v1750
    %2261 = vmatprep.subr.bf16.mxu0 %v1756
    %2262 = vmatpush1.bf16.msra.mxu0 %v1755
    %2263 = vmatprep.subr.bf16.mxu0 %v1761
    %2264 = vmatpush1.bf16.msra.mxu0 %v1760
    %2265 = vmatprep.subr.bf16.mxu0 %v1766
    %2266 = vmatpush1.bf16.msra.mxu0 %v1765
    %2267 = vmatprep.subr.bf16.mxu0 %v1771
    %2268 = vmatpush1.bf16.msra.mxu0 %v1770
    %2269 = vmatprep.subr.bf16.mxu0 %v1776
    %2270 = vmatpush1.bf16.msra.mxu0 %v1775
    %2271 = vmatprep.subr.bf16.mxu0 %v1781
    %2272 = vmatpush1.bf16.msra.mxu0 %v1780
    %2273 = vmatprep.subr.bf16.mxu0 %v1786
    %2274 = vmatpush1.bf16.msra.mxu0 %v1785
    %2275 = vmatprep.subr.bf16.mxu0 %v1791
    %2276 = vmatpush1.bf16.msra.mxu0 %v1790
    %2277 = vmatprep.subr.bf16.mxu0 %v1796
    %2278 = vmatpush1.bf16.msra.mxu0 %v1795
    %2279 = vmatprep.subr.bf16.mxu0 %v1801
    %2280 = vmatpush1.bf16.msra.mxu0 %v1800
    %2281 = vmatprep.subr.bf16.mxu0 %v1806
    %2282 = vmatpush1.bf16.msra.mxu0 %v1805
    %2283 = vmatprep.mubr.bf16.mxu0 %v817
    %2284 = vmatmul.mubr.bf16.gmra.mrb[0].mxu0 %v816
    %v2285 = vpop.f32.mrb[0].mxu0
    %v2286 = vadd.f32 %v1074, %v2285
    %v2287 = vpop.f32.mrb[0].mxu0
    %v2288 = vadd.f32 %v1078, %v2287
    %v2289 = vpop.f32.mrb[0].mxu0
    %v2290 = vpop.f32.mrb[0].mxu0
    %2291 = vdwg.mxu0
    %2292 = vmatprep.subr.bf16.mxu0 %v1811
    %2293 = vmatpush1.bf16.msra.mxu0 %v1810
    %2294 = vmatprep.subr.bf16.mxu0 %v1816
    %2295 = vmatpush1.bf16.msra.mxu0 %v1815
    %2296 = vmatprep.subr.bf16.mxu0 %v1821
    %2297 = vmatpush1.bf16.msra.mxu0 %v1820
    %2298 = vmatprep.subr.bf16.mxu0 %v1826
    %2299 = vmatpush1.bf16.msra.mxu0 %v1825
    %2300 = vmatprep.subr.bf16.mxu0 %v1831
    %2301 = vmatpush1.bf16.msra.mxu0 %v1830
    %2302 = vmatprep.subr.bf16.mxu0 %v1836
    %2303 = vmatpush1.bf16.msra.mxu0 %v1835
    %2304 = vmatprep.subr.bf16.mxu0 %v1841
    %2305 = vmatpush1.bf16.msra.mxu0 %v1840
    %2306 = vmatprep.subr.bf16.mxu0 %v1846
    %2307 = vmatpush1.bf16.msra.mxu0 %v1845
    %2308 = vmatprep.subr.bf16.mxu0 %v1851
    %2309 = vmatpush1.bf16.msra.mxu0 %v1850
    %2310 = vmatprep.subr.bf16.mxu0 %v1856
    %2311 = vmatpush1.bf16.msra.mxu0 %v1855
    %2312 = vmatprep.subr.bf16.mxu0 %v1861
    %2313 = vmatpush1.bf16.msra.mxu0 %v1860
    %2314 = vmatprep.subr.bf16.mxu0 %v1866
    %2315 = vmatpush1.bf16.msra.mxu0 %v1865
    %2316 = vmatprep.subr.bf16.mxu0 %v1871
    %2317 = vmatpush1.bf16.msra.mxu0 %v1870
    %2318 = vmatprep.subr.bf16.mxu0 %v1876
    %2319 = vmatpush1.bf16.msra.mxu0 %v1875
    %2320 = vmatprep.subr.bf16.mxu0 %v1881
    %2321 = vmatpush1.bf16.msra.mxu0 %v1880
    %2322 = vmatprep.subr.bf16.mxu0 %v1886
    %2323 = vmatpush1.bf16.msra.mxu0 %v1885
    %2324 = vmatprep.mubr.bf16.mxu0 %v819
    %2325 = vmatmul.mubr.bf16.gmra.mrb[0].mxu0 %v818
    %v2326 = vpop.f32.mrb[0].mxu0
    %v2327 = vadd.f32 %v2286, %v2326
    %v2328 = vpop.f32.mrb[0].mxu0
    %v2329 = vadd.f32 %v2288, %v2328
    %v2330 = vpop.f32.mrb[0].mxu0
    %v2331 = vpop.f32.mrb[0].mxu0
    %2332 = vdwg.mxu0
    %2333 = vmatprep.subr.bf16.mxu0 %v1891
    %2334 = vmatpush1.bf16.msra.mxu0 %v1890
    %2335 = vmatprep.subr.bf16.mxu0 %v1896
    %2336 = vmatpush1.bf16.msra.mxu0 %v1895
    %2337 = vmatprep.subr.bf16.mxu0 %v1901
    %2338 = vmatpush1.bf16.msra.mxu0 %v1900
    %2339 = vmatprep.subr.bf16.mxu0 %v1906
    %2340 = vmatpush1.bf16.msra.mxu0 %v1905
    %2341 = vmatprep.subr.bf16.mxu0 %v1911
    %2342 = vmatpush1.bf16.msra.mxu0 %v1910
    %2343 = vmatprep.subr.bf16.mxu0 %v1916
    %2344 = vmatpush1.bf16.msra.mxu0 %v1915
    %2345 = vmatprep.subr.bf16.mxu0 %v1921
    %2346 = vmatpush1.bf16.msra.mxu0 %v1920
    %2347 = vmatprep.subr.bf16.mxu0 %v1926
    %2348 = vmatpush1.bf16.msra.mxu0 %v1925
    %2349 = vmatprep.subr.bf16.mxu0 0
    %2350 = vmatpush1.bf16.msra.mxu0 0
    %2351 = vmatprep.subr.bf16.mxu0 0
    %2352 = vmatpush1.bf16.msra.mxu0 0
    %2353 = vmatprep.subr.bf16.mxu0 0
    %2354 = vmatpush1.bf16.msra.mxu0 0
    %2355 = vmatprep.subr.bf16.mxu0 0
    %2356 = vmatpush1.bf16.msra.mxu0 0
    %2357 = vmatprep.subr.bf16.mxu0 0
    %2358 = vmatpush1.bf16.msra.mxu0 0
    %2359 = vmatprep.subr.bf16.mxu0 0
    %2360 = vmatpush1.bf16.msra.mxu0 0
    %2361 = vmatprep.subr.bf16.mxu0 0
    %2362 = vmatpush1.bf16.msra.mxu0 0
    %2363 = vmatprep.subr.bf16.mxu0 0
    %2364 = vmatpush1.bf16.msra.mxu0 0
    %2365 = vmatprep.mubr.bf16.mxu0 0
    %2366 = vmatmul.mubr.bf16.gmra.mrb[0].mxu0 %v820
    %v2367 = vpop.f32.mrb[0].mxu0
    %v2368 = vadd.f32 %v2327, %v2367
    %v2369 = vpop.f32.mrb[0].mxu0
    %v2370 = vadd.f32 %v2329, %v2369
    %v2371 = vpop.f32.mrb[0].mxu0
    %v2372 = vpop.f32.mrb[0].mxu0
    %2373 = vdwg.mxu0
    %2374 = vmatprep.subr.bf16.mxu0 0
    %2375 = vmatpush1.bf16.msra.mxu0 %v1732
    %2376 = vmatprep.subr.bf16.mxu0 0
    %2377 = vmatpush1.bf16.msra.mxu0 %v1737
    %2378 = vmatprep.subr.bf16.mxu0 0
    %2379 = vmatpush1.bf16.msra.mxu0 %v1742
    %2380 = vmatprep.subr.bf16.mxu0 0
    %2381 = vmatpush1.bf16.msra.mxu0 %v1747
    %2382 = vmatprep.subr.bf16.mxu0 0
    %2383 = vmatpush1.bf16.msra.mxu0 %v1752
    %2384 = vmatprep.subr.bf16.mxu0 0
    %2385 = vmatpush1.bf16.msra.mxu0 %v1757
    %2386 = vmatprep.subr.bf16.mxu0 0
    %2387 = vmatpush1.bf16.msra.mxu0 %v1762
    %2388 = vmatprep.subr.bf16.mxu0 0
    %2389 = vmatpush1.bf16.msra.mxu0 %v1767
    %2390 = vmatprep.subr.bf16.mxu0 0
    %2391 = vmatpush1.bf16.msra.mxu0 %v1772
    %2392 = vmatprep.subr.bf16.mxu0 0
    %2393 = vmatpush1.bf16.msra.mxu0 %v1777
    %2394 = vmatprep.subr.bf16.mxu0 0
    %2395 = vmatpush1.bf16.msra.mxu0 %v1782
    %2396 = vmatprep.subr.bf16.mxu0 0
    %2397 = vmatpush1.bf16.msra.mxu0 %v1787
    %2398 = vmatprep.subr.bf16.mxu0 0
    %2399 = vmatpush1.bf16.msra.mxu0 %v1792
    %2400 = vmatprep.subr.bf16.mxu0 0
    %2401 = vmatpush1.bf16.msra.mxu0 %v1797
    %2402 = vmatprep.subr.bf16.mxu0 0
    %2403 = vmatpush1.bf16.msra.mxu0 %v1802
    %2404 = vmatprep.subr.bf16.mxu0 0
    %2405 = vmatpush1.bf16.msra.mxu0 %v1807
    %2406 = vmatprep.mubr.bf16.mxu0 %v817
    %2407 = vmatmul.mubr.bf16.gmra.mrb[0].mxu0 %v816
    %v2408 = vpop.f32.mrb[0].mxu0
    %v2409 = vadd.f32 %v1082, %v2408
    %v2410 = vpop.f32.mrb[0].mxu0
    %v2411 = vpop.f32.mrb[0].mxu0
    %v2412 = vpop.f32.mrb[0].mxu0
    %2413 = vdwg.mxu0
    %2414 = vmatprep.subr.bf16.mxu0 0
    %2415 = vmatpush1.bf16.msra.mxu0 %v1812
    %2416 = vmatprep.subr.bf16.mxu0 0
    %2417 = vmatpush1.bf16.msra.mxu0 %v1817
    %2418 = vmatprep.subr.bf16.mxu0 0
    %2419 = vmatpush1.bf16.msra.mxu0 %v1822
    %2420 = vmatprep.subr.bf16.mxu0 0
    %2421 = vmatpush1.bf16.msra.mxu0 %v1827
    %2422 = vmatprep.subr.bf16.mxu0 0
    %2423 = vmatpush1.bf16.msra.mxu0 %v1832
    %2424 = vmatprep.subr.bf16.mxu0 0
    %2425 = vmatpush1.bf16.msra.mxu0 %v1837
    %2426 = vmatprep.subr.bf16.mxu0 0
    %2427 = vmatpush1.bf16.msra.mxu0 %v1842
    %2428 = vmatprep.subr.bf16.mxu0 0
    %2429 = vmatpush1.bf16.msra.mxu0 %v1847
    %2430 = vmatprep.subr.bf16.mxu0 0
    %2431 = vmatpush1.bf16.msra.mxu0 %v1852
    %2432 = vmatprep.subr.bf16.mxu0 0
    %2433 = vmatpush1.bf16.msra.mxu0 %v1857
    %2434 = vmatprep.subr.bf16.mxu0 0
    %2435 = vmatpush1.bf16.msra.mxu0 %v1862
    %2436 = vmatprep.subr.bf16.mxu0 0
    %2437 = vmatpush1.bf16.msra.mxu0 %v1867
    %2438 = vmatprep.subr.bf16.mxu0 0
    %2439 = vmatpush1.bf16.msra.mxu0 %v1872
    %2440 = vmatprep.subr.bf16.mxu0 0
    %2441 = vmatpush1.bf16.msra.mxu0 %v1877
    %2442 = vmatprep.subr.bf16.mxu0 0
    %2443 = vmatpush1.bf16.msra.mxu0 %v1882
    %2444 = vmatprep.subr.bf16.mxu0 0
    %2445 = vmatpush1.bf16.msra.mxu0 %v1887
    %2446 = vmatprep.mubr.bf16.mxu0 %v819
    %2447 = vmatmul.mubr.bf16.gmra.mrb[0].mxu0 %v818
    %v2448 = vpop.f32.mrb[0].mxu0
    %v2449 = vadd.f32 %v2409, %v2448
    %v2450 = vpop.f32.mrb[0].mxu0
    %v2451 = vpop.f32.mrb[0].mxu0
    %v2452 = vpop.f32.mrb[0].mxu0
    %2453 = vdwg.mxu0
    %2454 = vmatprep.subr.bf16.mxu0 0
    %2455 = vmatpush1.bf16.msra.mxu0 %v1892
    %2456 = vmatprep.subr.bf16.mxu0 0
    %2457 = vmatpush1.bf16.msra.mxu0 %v1897
    %2458 = vmatprep.subr.bf16.mxu0 0
    %2459 = vmatpush1.bf16.msra.mxu0 %v1902
    %2460 = vmatprep.subr.bf16.mxu0 0
    %2461 = vmatpush1.bf16.msra.mxu0 %v1907
    %2462 = vmatprep.subr.bf16.mxu0 0
    %2463 = vmatpush1.bf16.msra.mxu0 %v1912
    %2464 = vmatprep.subr.bf16.mxu0 0
    %2465 = vmatpush1.bf16.msra.mxu0 %v1917
    %2466 = vmatprep.subr.bf16.mxu0 0
    %2467 = vmatpush1.bf16.msra.mxu0 %v1922
    %2468 = vmatprep.subr.bf16.mxu0 0
    %2469 = vmatpush1.bf16.msra.mxu0 %v1927
    %2470 = vmatprep.subr.bf16.mxu0 0
    %2471 = vmatpush1.bf16.msra.mxu0 0
    %2472 = vmatprep.subr.bf16.mxu0 0
    %2473 = vmatpush1.bf16.msra.mxu0 0
    %2474 = vmatprep.subr.bf16.mxu0 0
    %2475 = vmatpush1.bf16.msra.mxu0 0
    %2476 = vmatprep.subr.bf16.mxu0 0
    %2477 = vmatpush1.bf16.msra.mxu0 0
    %2478 = vmatprep.subr.bf16.mxu0 0
    %2479 = vmatpush1.bf16.msra.mxu0 0
    %2480 = vmatprep.subr.bf16.mxu0 0
    %2481 = vmatpush1.bf16.msra.mxu0 0
    %2482 = vmatprep.subr.bf16.mxu0 0
    %2483 = vmatpush1.bf16.msra.mxu0 0
    %2484 = vmatprep.subr.bf16.mxu0 0
    %2485 = vmatpush1.bf16.msra.mxu0 0
    %2486 = vmatprep.mubr.bf16.mxu0 0
    %2487 = vmatmul.mubr.bf16.gmra.mrb[0].mxu0 %v820
    %v2488 = vpop.f32.mrb[0].mxu0
    %v2489 = vadd.f32 %v2449, %v2488
    %v2490 = vpop.f32.mrb[0].mxu0
    %v2491 = vpop.f32.mrb[0].mxu0
    %v2492 = vpop.f32.mrb[0].mxu0
    %2493 = vdwg.mxu0
    %v2494 = vmax.f32 %v2245, 0.0
    %v2495 = vmax.f32 %v2247, 0.0
    %v2496 = vmax.f32 %v2368, 0.0
    %v2497 = vmax.f32 %v2370, 0.0
    %v2498 = vmax.f32 %v2489, 0.0
    %v2499 = vpack.c.bf16 %v2494, %v2494
    %v2500 = vpack.c.bf16 %v2495, %v2495
    %v2501 = vpack.c.bf16 %v2496, %v2496
    %v2502 = vpack.c.bf16 %v2497, %v2497
    %v2503 = vpack.c.bf16 %v2498, %v2498
    %v2504 = vld [vmem:[#allocation11] sm:$0xff]
    %v2505 = vld [vmem:[#allocation11 + $0x8] sm:$0xff]
    %v2506 = vld [vmem:[#allocation11 + $0x10] sm:$0xf]
    %v2507 = vld [vmem:[#allocation11 + $0x14] sm:$0xff]
    %v2508 = vld [vmem:[#allocation11 + $0x1c] sm:$0xff]
    %v2509 = vld [vmem:[#allocation11 + $0x24] sm:$0xf]
    %v2510 = vld [vmem:[#allocation11 + $0x28] sm:$0xff]
    %v2511 = vld [vmem:[#allocation11 + $0x30] sm:$0xff]
    %v2512 = vld [vmem:[#allocation11 + $0x38] sm:$0xf]
    %v2513 = vld [vmem:[#allocation11 + $0x3c] sm:$0xff]
    %v2514 = vld [vmem:[#allocation11 + $0x44] sm:$0xff]
    %v2515 = vld [vmem:[#allocation11 + $0x4c] sm:$0xf]
    %v2516 = vld [vmem:[#allocation11 + $0x50] sm:$0xff]
    %v2517 = vld [vmem:[#allocation11 + $0x58] sm:$0xff]
    %v2518 = vld [vmem:[#allocation11 + $0x60] sm:$0xf]
    %v2519 = vld [vmem:[#allocation11 + $0x64] sm:$0xff]
    %v2520 = vld [vmem:[#allocation11 + $0x6c] sm:$0xff]
    %v2521 = vld [vmem:[#allocation11 + $0x74] sm:$0xf]
    %v2522 = vld [vmem:[#allocation11 + $0x78] sm:$0xff]
    %v2523 = vld [vmem:[#allocation11 + $0x80] sm:$0xff]
    %v2524 = vld [vmem:[#allocation11 + $0x88] sm:$0xf]
    %v2525 = vld [vmem:[#allocation11 + $0x8c] sm:$0xff]
    %v2526 = vld [vmem:[#allocation11 + $0x94] sm:$0xff]
    %v2527 = vld [vmem:[#allocation11 + $0x9c] sm:$0xf]
    %v2528 = vld [vmem:[#allocation11 + $0xa0] sm:$0xff]
    %v2529 = vld [vmem:[#allocation11 + $0xa8] sm:$0xff]
    %v2530 = vld [vmem:[#allocation11 + $0xb0] sm:$0xf]
    %v2531 = vld [vmem:[#allocation11 + $0xb4] sm:$0xff]
    %v2532 = vld [vmem:[#allocation11 + $0xbc] sm:$0xff]
    %v2533 = vld [vmem:[#allocation11 + $0xc4] sm:$0xf]
    %v2534 = vld [vmem:[#allocation11 + $0xc8] sm:$0xff]
    %v2535 = vld [vmem:[#allocation11 + $0xd0] sm:$0xff]
    %v2536 = vld [vmem:[#allocation11 + $0xd8] sm:$0xf]
    %v2537 = vld [vmem:[#allocation11 + $0xdc] sm:$0xff]
    %v2538 = vld [vmem:[#allocation11 + $0xe4] sm:$0xff]
    %v2539 = vld [vmem:[#allocation11 + $0xec] sm:$0xf]
    %v2540 = vld [vmem:[#allocation11 + $0xf0] sm:$0xff]
    %v2541 = vld [vmem:[#allocation11 + $0xf8] sm:$0xff]
    %v2542 = vld [vmem:[#allocation11 + $0x100] sm:$0xf]
    %v2543 = vld [vmem:[#allocation11 + $0x104] sm:$0xff]
    %v2544 = vld [vmem:[#allocation11 + $0x10c] sm:$0xff]
    %v2545 = vld [vmem:[#allocation11 + $0x114] sm:$0xf]
    %v2546 = vld [vmem:[#allocation11 + $0x118] sm:$0xff]
    %v2547 = vld [vmem:[#allocation11 + $0x120] sm:$0xff]
    %v2548 = vld [vmem:[#allocation11 + $0x128] sm:$0xf]
    %v2549 = vld [vmem:[#allocation11 + $0x12c] sm:$0xff]
    %v2550 = vld [vmem:[#allocation11 + $0x134] sm:$0xff]
    %v2551 = vld [vmem:[#allocation11 + $0x13c] sm:$0xf]
    %v2552 = vld [vmem:[#allocation11 + $0x140] sm:$0xff]
    %v2553 = vld [vmem:[#allocation11 + $0x148] sm:$0xff]
    %v2554 = vld [vmem:[#allocation11 + $0x150] sm:$0xf]
    %v2555 = vld [vmem:[#allocation11 + $0x154] sm:$0xff]
    %v2556 = vld [vmem:[#allocation11 + $0x15c] sm:$0xff]
    %v2557 = vld [vmem:[#allocation11 + $0x164] sm:$0xf]
    %v2558 = vld [vmem:[#allocation11 + $0x168] sm:$0xff]
    %v2559 = vld [vmem:[#allocation11 + $0x170] sm:$0xff]
    %v2560 = vld [vmem:[#allocation11 + $0x178] sm:$0xf]
    %v2561 = vld [vmem:[#allocation11 + $0x17c] sm:$0xff]
    %v2562 = vld [vmem:[#allocation11 + $0x184] sm:$0xff]
    %v2563 = vld [vmem:[#allocation11 + $0x18c] sm:$0xf]
    %v2564 = vld [vmem:[#allocation11 + $0x190] sm:$0xff]
    %v2565 = vld [vmem:[#allocation11 + $0x198] sm:$0xff]
    %v2566 = vld [vmem:[#allocation11 + $0x1a0] sm:$0xf]
    %v2567 = vld [vmem:[#allocation11 + $0x1a4] sm:$0xff]
    %v2568 = vld [vmem:[#allocation11 + $0x1ac] sm:$0xff]
    %v2569 = vld [vmem:[#allocation11 + $0x1b4] sm:$0xf]
    %v2570 = vld [vmem:[#allocation11 + $0x1b8] sm:$0xff]
    %v2571 = vld [vmem:[#allocation11 + $0x1c0] sm:$0xff]
    %v2572 = vld [vmem:[#allocation11 + $0x1c8] sm:$0xf]
    %v2573 = vld [vmem:[#allocation11 + $0x1cc] sm:$0xff]
    %v2574 = vld [vmem:[#allocation11 + $0x1d4] sm:$0xff]
    %v2575 = vld [vmem:[#allocation11 + $0x1dc] sm:$0xf]
    %v2576 = vld [vmem:[#allocation11 + $0x1e0] sm:$0xff]
    %v2577 = vld [vmem:[#allocation11 + $0x1e8] sm:$0xff]
    %v2578 = vld [vmem:[#allocation11 + $0x1f0] sm:$0xf]
    %v2579 = vld [vmem:[#allocation11 + $0x1f4] sm:$0xff]
    %v2580 = vld [vmem:[#allocation11 + $0x1fc] sm:$0xff]
    %v2581 = vld [vmem:[#allocation11 + $0x204] sm:$0xf]
    %v2582 = vld [vmem:[#allocation11 + $0x208] sm:$0xff]
    %v2583 = vld [vmem:[#allocation11 + $0x210] sm:$0xff]
    %v2584 = vld [vmem:[#allocation11 + $0x218] sm:$0xf]
    %v2585 = vld [vmem:[#allocation11 + $0x21c] sm:$0xff]
    %v2586 = vld [vmem:[#allocation11 + $0x224] sm:$0xff]
    %v2587 = vld [vmem:[#allocation11 + $0x22c] sm:$0xf]
    %v2588 = vld [vmem:[#allocation11 + $0x230] sm:$0xff]
    %v2589 = vld [vmem:[#allocation11 + $0x238] sm:$0xff]
    %v2590 = vld [vmem:[#allocation11 + $0x240] sm:$0xf]
    %v2591 = vld [vmem:[#allocation11 + $0x244] sm:$0xff]
    %v2592 = vld [vmem:[#allocation11 + $0x24c] sm:$0xff]
    %v2593 = vld [vmem:[#allocation11 + $0x254] sm:$0xf]
    %v2594 = vld [vmem:[#allocation11 + $0x258] sm:$0xff]
    %v2595 = vld [vmem:[#allocation11 + $0x260] sm:$0xff]
    %v2596 = vld [vmem:[#allocation11 + $0x268] sm:$0xf]
    %v2597 = vld [vmem:[#allocation11 + $0x26c] sm:$0xff]
    %v2598 = vld [vmem:[#allocation11 + $0x274] sm:$0xff]
    %v2599 = vld [vmem:[#allocation11 + $0x27c] sm:$0xf]
    %v2600 = vld [vmem:[#allocation11 + $0x280] sm:$0xff]
    %v2601 = vld [vmem:[#allocation11 + $0x288] sm:$0xff]
    %v2602 = vld [vmem:[#allocation11 + $0x290] sm:$0xf]
    %v2603 = vld [vmem:[#allocation11 + $0x294] sm:$0xff]
    %v2604 = vld [vmem:[#allocation11 + $0x29c] sm:$0xff]
    %v2605 = vld [vmem:[#allocation11 + $0x2a4] sm:$0xf]
    %v2606 = vld [vmem:[#allocation11 + $0x2a8] sm:$0xff]
    %v2607 = vld [vmem:[#allocation11 + $0x2b0] sm:$0xff]
    %v2608 = vld [vmem:[#allocation11 + $0x2b8] sm:$0xf]
    %v2609 = vld [vmem:[#allocation11 + $0x2bc] sm:$0xff]
    %v2610 = vld [vmem:[#allocation11 + $0x2c4] sm:$0xff]
    %v2611 = vld [vmem:[#allocation11 + $0x2cc] sm:$0xf]
    %v2612 = vld [vmem:[#allocation11 + $0x2d0] sm:$0xff]
    %v2613 = vld [vmem:[#allocation11 + $0x2d8] sm:$0xff]
    %v2614 = vld [vmem:[#allocation11 + $0x2e0] sm:$0xf]
    %v2615 = vld [vmem:[#allocation11 + $0x2e4] sm:$0xff]
    %v2616 = vld [vmem:[#allocation11 + $0x2ec] sm:$0xff]
    %v2617 = vld [vmem:[#allocation11 + $0x2f4] sm:$0xf]
    %v2618 = vld [vmem:[#allocation11 + $0x2f8] sm:$0xff]
    %v2619 = vld [vmem:[#allocation11 + $0x300] sm:$0xff]
    %v2620 = vld [vmem:[#allocation11 + $0x308] sm:$0xf]
    %v2621 = vld [vmem:[#allocation11 + $0x30c] sm:$0xff]
    %v2622 = vld [vmem:[#allocation11 + $0x314] sm:$0xff]
    %v2623 = vld [vmem:[#allocation11 + $0x31c] sm:$0xf]
    %v2624 = vld [vmem:[#allocation11 + $0x320] sm:$0xff]
    %v2625 = vld [vmem:[#allocation11 + $0x328] sm:$0xff]
    %v2626 = vld [vmem:[#allocation11 + $0x330] sm:$0xf]
    %v2627 = vld [vmem:[#allocation11 + $0x334] sm:$0xff]
    %v2628 = vld [vmem:[#allocation11 + $0x33c] sm:$0xff]
    %v2629 = vld [vmem:[#allocation11 + $0x344] sm:$0xf]
    %v2630 = vld [vmem:[#allocation11 + $0x348] sm:$0xff]
    %v2631 = vld [vmem:[#allocation11 + $0x350] sm:$0xff]
    %v2632 = vld [vmem:[#allocation11 + $0x358] sm:$0xf]
    %v2633 = vld [vmem:[#allocation11 + $0x35c] sm:$0xff]
    %v2634 = vld [vmem:[#allocation11 + $0x364] sm:$0xff]
    %v2635 = vld [vmem:[#allocation11 + $0x36c] sm:$0xf]
    %v2636 = vld [vmem:[#allocation11 + $0x370] sm:$0xff]
    %v2637 = vld [vmem:[#allocation11 + $0x378] sm:$0xff]
    %v2638 = vld [vmem:[#allocation11 + $0x380] sm:$0xf]
    %v2639 = vld [vmem:[#allocation11 + $0x384] sm:$0xff]
    %v2640 = vld [vmem:[#allocation11 + $0x38c] sm:$0xff]
    %v2641 = vld [vmem:[#allocation11 + $0x394] sm:$0xf]
    %v2642 = vld [vmem:[#allocation11 + $0x398] sm:$0xff]
    %v2643 = vld [vmem:[#allocation11 + $0x3a0] sm:$0xff]
    %v2644 = vld [vmem:[#allocation11 + $0x3a8] sm:$0xf]
    %v2645 = vld [vmem:[#allocation11 + $0x3ac] sm:$0xff]
    %v2646 = vld [vmem:[#allocation11 + $0x3b4] sm:$0xff]
    %v2647 = vld [vmem:[#allocation11 + $0x3bc] sm:$0xf]
    %v2648 = vld [vmem:[#allocation11 + $0x3c0] sm:$0xff]
    %v2649 = vld [vmem:[#allocation11 + $0x3c8] sm:$0xff]
    %v2650 = vld [vmem:[#allocation11 + $0x3d0] sm:$0xf]
    %v2651 = vld [vmem:[#allocation11 + $0x3d4] sm:$0xff]
    %v2652 = vld [vmem:[#allocation11 + $0x3dc] sm:$0xff]
    %v2653 = vld [vmem:[#allocation11 + $0x3e4] sm:$0xf]
    %v2654 = vld [vmem:[#allocation11 + $0x3e8] sm:$0xff]
    %v2655 = vld [vmem:[#allocation11 + $0x3f0] sm:$0xff]
    %v2656 = vld [vmem:[#allocation11 + $0x3f8] sm:$0xf]
    %v2657 = vld [vmem:[#allocation11 + $0x3fc] sm:$0xff]
    %v2658 = vld [vmem:[#allocation11 + $0x404] sm:$0xff]
    %v2659 = vld [vmem:[#allocation11 + $0x40c] sm:$0xf]
    %v2660 = vld [vmem:[#allocation11 + $0x410] sm:$0xff]
    %v2661 = vld [vmem:[#allocation11 + $0x418] sm:$0xff]
    %v2662 = vld [vmem:[#allocation11 + $0x420] sm:$0xf]
    %v2663 = vld [vmem:[#allocation11 + $0x424] sm:$0xff]
    %v2664 = vld [vmem:[#allocation11 + $0x42c] sm:$0xff]
    %v2665 = vld [vmem:[#allocation11 + $0x434] sm:$0xf]
    %v2666 = vld [vmem:[#allocation11 + $0x438] sm:$0xff]
    %v2667 = vld [vmem:[#allocation11 + $0x440] sm:$0xff]
    %v2668 = vld [vmem:[#allocation11 + $0x448] sm:$0xf]
    %v2669 = vld [vmem:[#allocation11 + $0x44c] sm:$0xff]
    %v2670 = vld [vmem:[#allocation11 + $0x454] sm:$0xff]
    %v2671 = vld [vmem:[#allocation11 + $0x45c] sm:$0xf]
    %v2672 = vld [vmem:[#allocation11 + $0x460] sm:$0xff]
    %v2673 = vld [vmem:[#allocation11 + $0x468] sm:$0xff]
    %v2674 = vld [vmem:[#allocation11 + $0x470] sm:$0xf]
    %v2675 = vld [vmem:[#allocation11 + $0x474] sm:$0xff]
    %v2676 = vld [vmem:[#allocation11 + $0x47c] sm:$0xff]
    %v2677 = vld [vmem:[#allocation11 + $0x484] sm:$0xf]
    %v2678 = vld [vmem:[#allocation11 + $0x488] sm:$0xff]
    %v2679 = vld [vmem:[#allocation11 + $0x490] sm:$0xff]
    %v2680 = vld [vmem:[#allocation11 + $0x498] sm:$0xf]
    %v2681 = vld [vmem:[#allocation11 + $0x49c] sm:$0xff]
    %v2682 = vld [vmem:[#allocation11 + $0x4a4] sm:$0xff]
    %v2683 = vld [vmem:[#allocation11 + $0x4ac] sm:$0xf]
    %v2684 = vld [vmem:[#allocation11 + $0x4b0] sm:$0xff]
    %v2685 = vld [vmem:[#allocation11 + $0x4b8] sm:$0xff]
    %v2686 = vld [vmem:[#allocation11 + $0x4c0] sm:$0xf]
    %v2687 = vld [vmem:[#allocation11 + $0x4c4] sm:$0xff]
    %v2688 = vld [vmem:[#allocation11 + $0x4cc] sm:$0xff]
    %v2689 = vld [vmem:[#allocation11 + $0x4d4] sm:$0xf]
    %v2690 = vld [vmem:[#allocation11 + $0x4d8] sm:$0xff]
    %v2691 = vld [vmem:[#allocation11 + $0x4e0] sm:$0xff]
    %v2692 = vld [vmem:[#allocation11 + $0x4e8] sm:$0xf]
    %v2693 = vld [vmem:[#allocation11 + $0x4ec] sm:$0xff]
    %v2694 = vld [vmem:[#allocation11 + $0x4f4] sm:$0xff]
    %v2695 = vld [vmem:[#allocation11 + $0x4fc] sm:$0xf]
    %v2696 = vld [vmem:[#allocation11 + $0x500] sm:$0xff]
    %v2697 = vld [vmem:[#allocation11 + $0x508] sm:$0xff]
    %v2698 = vld [vmem:[#allocation11 + $0x510] sm:$0xf]
    %v2699 = vld [vmem:[#allocation11 + $0x514] sm:$0xff]
    %v2700 = vld [vmem:[#allocation11 + $0x51c] sm:$0xff]
    %v2701 = vld [vmem:[#allocation11 + $0x524] sm:$0xf]
    %v2702 = vld [vmem:[#allocation11 + $0x528] sm:$0xff]
    %v2703 = vld [vmem:[#allocation11 + $0x530] sm:$0xff]
    %v2704 = vld [vmem:[#allocation11 + $0x538] sm:$0xf]
    %v2705 = vld [vmem:[#allocation11 + $0x53c] sm:$0xff]
    %v2706 = vld [vmem:[#allocation11 + $0x544] sm:$0xff]
    %v2707 = vld [vmem:[#allocation11 + $0x54c] sm:$0xf]
    %v2708 = vld [vmem:[#allocation11 + $0x550] sm:$0xff]
    %v2709 = vld [vmem:[#allocation11 + $0x558] sm:$0xff]
    %v2710 = vld [vmem:[#allocation11 + $0x560] sm:$0xf]
    %v2711 = vld [vmem:[#allocation11 + $0x564] sm:$0xff]
    %v2712 = vld [vmem:[#allocation11 + $0x56c] sm:$0xff]
    %v2713 = vld [vmem:[#allocation11 + $0x574] sm:$0xf]
    %v2714 = vld [vmem:[#allocation11 + $0x578] sm:$0xff]
    %v2715 = vld [vmem:[#allocation11 + $0x580] sm:$0xff]
    %v2716 = vld [vmem:[#allocation11 + $0x588] sm:$0xf]
    %v2717 = vld [vmem:[#allocation11 + $0x58c] sm:$0xff]
    %v2718 = vld [vmem:[#allocation11 + $0x594] sm:$0xff]
    %v2719 = vld [vmem:[#allocation11 + $0x59c] sm:$0xf]
    %v2720 = vld [vmem:[#allocation11 + $0x5a0] sm:$0xff]
    %v2721 = vld [vmem:[#allocation11 + $0x5a8] sm:$0xff]
    %v2722 = vld [vmem:[#allocation11 + $0x5b0] sm:$0xf]
    %v2723 = vld [vmem:[#allocation11 + $0x5b4] sm:$0xff]
    %v2724 = vld [vmem:[#allocation11 + $0x5bc] sm:$0xff]
    %v2725 = vld [vmem:[#allocation11 + $0x5c4] sm:$0xf]
    %v2726 = vld [vmem:[#allocation11 + $0x5c8] sm:$0xff]
    %v2727 = vld [vmem:[#allocation11 + $0x5d0] sm:$0xff]
    %v2728 = vld [vmem:[#allocation11 + $0x5d8] sm:$0xf]
    %v2729 = vld [vmem:[#allocation11 + $0x5dc] sm:$0xff]
    %v2730 = vld [vmem:[#allocation11 + $0x5e4] sm:$0xff]
    %v2731 = vld [vmem:[#allocation11 + $0x5ec] sm:$0xf]
    %v2732 = vld [vmem:[#allocation11 + $0x5f0] sm:$0xff]
    %v2733 = vld [vmem:[#allocation11 + $0x5f8] sm:$0xff]
    %v2734 = vld [vmem:[#allocation11 + $0x600] sm:$0xf]
    %v2735 = vld [vmem:[#allocation11 + $0x604] sm:$0xff]
    %v2736 = vld [vmem:[#allocation11 + $0x60c] sm:$0xff]
    %v2737 = vld [vmem:[#allocation11 + $0x614] sm:$0xf]
    %v2738 = vld [vmem:[#allocation11 + $0x618] sm:$0xff]
    %v2739 = vld [vmem:[#allocation11 + $0x620] sm:$0xff]
    %v2740 = vld [vmem:[#allocation11 + $0x628] sm:$0xf]
    %v2741 = vld [vmem:[#allocation11 + $0x62c] sm:$0xff]
    %v2742 = vld [vmem:[#allocation11 + $0x634] sm:$0xff]
    %v2743 = vld [vmem:[#allocation11 + $0x63c] sm:$0xf]
    %v2744 = vld [vmem:[#allocation13] sm:$0x1f]
    %v2746 = vlaneseq
    %v2747 = vshrl.u32 %v2746, 7
    %v2748 = vsub.s32 0, %v2747
    %v2749 = vrot.slane %v2744, %v2748
    %v2750 = vlaneseq
    %v2751 = vshrl.u32 %v2750, 7
    %v2752 = vsub.s32 1, %v2751
    %v2753 = vrot.slane %v2744, %v2752
    %v2754 = vlaneseq
    %v2755 = vshrl.u32 %v2754, 7
    %v2756 = vsub.s32 2, %v2755
    %v2757 = vrot.slane %v2744, %v2756
    %v2758 = vlaneseq
    %v2759 = vshrl.u32 %v2758, 7
    %v2760 = vsub.s32 3, %v2759
    %v2761 = vrot.slane %v2744, %v2760
    %v2762 = vlaneseq
    %v2763 = vshrl.u32 %v2762, 7
    %v2764 = vsub.s32 4, %v2763
    %v2765 = vrot.slane %v2744, %v2764
    %v3011 = vunpack.c.l.b16 %v2504
    %v3012 = vunpack.c.h.b16 %v2504
    %v3013 = vunpack.c.l.b16 %v2505
    %v3014 = vunpack.c.h.b16 %v2505
    %v3015 = vunpack.c.l.b16 %v2506
    %v3016 = vunpack.c.l.b16 %v2507
    %v3017 = vunpack.c.h.b16 %v2507
    %v3018 = vunpack.c.l.b16 %v2508
    %v3019 = vunpack.c.h.b16 %v2508
    %v3020 = vunpack.c.l.b16 %v2509
    %v3021 = vunpack.c.l.b16 %v2510
    %v3022 = vunpack.c.h.b16 %v2510
    %v3023 = vunpack.c.l.b16 %v2511
    %v3024 = vunpack.c.h.b16 %v2511
    %v3025 = vunpack.c.l.b16 %v2512
    %v3026 = vunpack.c.l.b16 %v2513
    %v3027 = vunpack.c.h.b16 %v2513
    %v3028 = vunpack.c.l.b16 %v2514
    %v3029 = vunpack.c.h.b16 %v2514
    %v3030 = vunpack.c.l.b16 %v2515
    %v3031 = vunpack.c.l.b16 %v2516
    %v3032 = vunpack.c.h.b16 %v2516
    %v3033 = vunpack.c.l.b16 %v2517
    %v3034 = vunpack.c.h.b16 %v2517
    %v3035 = vunpack.c.l.b16 %v2518
    %v3036 = vunpack.c.l.b16 %v2519
    %v3037 = vunpack.c.h.b16 %v2519
    %v3038 = vunpack.c.l.b16 %v2520
    %v3039 = vunpack.c.h.b16 %v2520
    %v3040 = vunpack.c.l.b16 %v2521
    %v3041 = vunpack.c.l.b16 %v2522
    %v3042 = vunpack.c.h.b16 %v2522
    %v3043 = vunpack.c.l.b16 %v2523
    %v3044 = vunpack.c.h.b16 %v2523
    %v3045 = vunpack.c.l.b16 %v2524
    %v3046 = vunpack.c.l.b16 %v2525
    %v3047 = vunpack.c.h.b16 %v2525
    %v3048 = vunpack.c.l.b16 %v2526
    %v3049 = vunpack.c.h.b16 %v2526
    %v3050 = vunpack.c.l.b16 %v2527
    %v3051 = vunpack.c.l.b16 %v2528
    %v3052 = vunpack.c.h.b16 %v2528
    %v3053 = vunpack.c.l.b16 %v2529
    %v3054 = vunpack.c.h.b16 %v2529
    %v3055 = vunpack.c.l.b16 %v2530
    %v3056 = vunpack.c.l.b16 %v2531
    %v3057 = vunpack.c.h.b16 %v2531
    %v3058 = vunpack.c.l.b16 %v2532
    %v3059 = vunpack.c.h.b16 %v2532
    %v3060 = vunpack.c.l.b16 %v2533
    %v3061 = vunpack.c.l.b16 %v2534
    %v3062 = vunpack.c.h.b16 %v2534
    %v3063 = vunpack.c.l.b16 %v2535
    %v3064 = vunpack.c.h.b16 %v2535
    %v3065 = vunpack.c.l.b16 %v2536
    %v3066 = vunpack.c.l.b16 %v2537
    %v3067 = vunpack.c.h.b16 %v2537
    %v3068 = vunpack.c.l.b16 %v2538
    %v3069 = vunpack.c.h.b16 %v2538
    %v3070 = vunpack.c.l.b16 %v2539
    %v3071 = vunpack.c.l.b16 %v2540
    %v3072 = vunpack.c.h.b16 %v2540
    %v3073 = vunpack.c.l.b16 %v2541
    %v3074 = vunpack.c.h.b16 %v2541
    %v3075 = vunpack.c.l.b16 %v2542
    %v3076 = vunpack.c.l.b16 %v2543
    %v3077 = vunpack.c.h.b16 %v2543
    %v3078 = vunpack.c.l.b16 %v2544
    %v3079 = vunpack.c.h.b16 %v2544
    %v3080 = vunpack.c.l.b16 %v2545
    %v3081 = vunpack.c.l.b16 %v2546
    %v3082 = vunpack.c.h.b16 %v2546
    %v3083 = vunpack.c.l.b16 %v2547
    %v3084 = vunpack.c.h.b16 %v2547
    %v3085 = vunpack.c.l.b16 %v2548
    %v3086 = vunpack.c.l.b16 %v2549
    %v3087 = vunpack.c.h.b16 %v2549
    %v3088 = vunpack.c.l.b16 %v2550
    %v3089 = vunpack.c.h.b16 %v2550
    %v3090 = vunpack.c.l.b16 %v2551
    %v3091 = vunpack.c.l.b16 %v2552
    %v3092 = vunpack.c.h.b16 %v2552
    %v3093 = vunpack.c.l.b16 %v2553
    %v3094 = vunpack.c.h.b16 %v2553
    %v3095 = vunpack.c.l.b16 %v2554
    %v3096 = vunpack.c.l.b16 %v2555
    %v3097 = vunpack.c.h.b16 %v2555
    %v3098 = vunpack.c.l.b16 %v2556
    %v3099 = vunpack.c.h.b16 %v2556
    %v3100 = vunpack.c.l.b16 %v2557
    %v3101 = vunpack.c.l.b16 %v2558
    %v3102 = vunpack.c.h.b16 %v2558
    %v3103 = vunpack.c.l.b16 %v2559
    %v3104 = vunpack.c.h.b16 %v2559
    %v3105 = vunpack.c.l.b16 %v2560
    %v3106 = vunpack.c.l.b16 %v2561
    %v3107 = vunpack.c.h.b16 %v2561
    %v3108 = vunpack.c.l.b16 %v2562
    %v3109 = vunpack.c.h.b16 %v2562
    %v3110 = vunpack.c.l.b16 %v2563
    %v3111 = vunpack.c.l.b16 %v2564
    %v3112 = vunpack.c.h.b16 %v2564
    %v3113 = vunpack.c.l.b16 %v2565
    %v3114 = vunpack.c.h.b16 %v2565
    %v3115 = vunpack.c.l.b16 %v2566
    %v3116 = vunpack.c.l.b16 %v2567
    %v3117 = vunpack.c.h.b16 %v2567
    %v3118 = vunpack.c.l.b16 %v2568
    %v3119 = vunpack.c.h.b16 %v2568
    %v3120 = vunpack.c.l.b16 %v2569
    %v3121 = vunpack.c.l.b16 %v2570
    %v3122 = vunpack.c.h.b16 %v2570
    %v3123 = vunpack.c.l.b16 %v2571
    %v3124 = vunpack.c.h.b16 %v2571
    %v3125 = vunpack.c.l.b16 %v2572
    %v3126 = vunpack.c.l.b16 %v2573
    %v3127 = vunpack.c.h.b16 %v2573
    %v3128 = vunpack.c.l.b16 %v2574
    %v3129 = vunpack.c.h.b16 %v2574
    %v3130 = vunpack.c.l.b16 %v2575
    %v3131 = vunpack.c.l.b16 %v2576
    %v3132 = vunpack.c.h.b16 %v2576
    %v3133 = vunpack.c.l.b16 %v2577
    %v3134 = vunpack.c.h.b16 %v2577
    %v3135 = vunpack.c.l.b16 %v2578
    %v3136 = vunpack.c.l.b16 %v2579
    %v3137 = vunpack.c.h.b16 %v2579
    %v3138 = vunpack.c.l.b16 %v2580
    %v3139 = vunpack.c.h.b16 %v2580
    %v3140 = vunpack.c.l.b16 %v2581
    %v3141 = vunpack.c.l.b16 %v2582
    %v3142 = vunpack.c.h.b16 %v2582
    %v3143 = vunpack.c.l.b16 %v2583
    %v3144 = vunpack.c.h.b16 %v2583
    %v3145 = vunpack.c.l.b16 %v2584
    %v3146 = vunpack.c.l.b16 %v2585
    %v3147 = vunpack.c.h.b16 %v2585
    %v3148 = vunpack.c.l.b16 %v2586
    %v3149 = vunpack.c.h.b16 %v2586
    %v3150 = vunpack.c.l.b16 %v2587
    %v3151 = vunpack.c.l.b16 %v2588
    %v3152 = vunpack.c.h.b16 %v2588
    %v3153 = vunpack.c.l.b16 %v2589
    %v3154 = vunpack.c.h.b16 %v2589
    %v3155 = vunpack.c.l.b16 %v2590
    %v3156 = vunpack.c.l.b16 %v2591
    %v3157 = vunpack.c.h.b16 %v2591
    %v3158 = vunpack.c.l.b16 %v2592
    %v3159 = vunpack.c.h.b16 %v2592
    %v3160 = vunpack.c.l.b16 %v2593
    %v3161 = vunpack.c.l.b16 %v2594
    %v3162 = vunpack.c.h.b16 %v2594
    %v3163 = vunpack.c.l.b16 %v2595
    %v3164 = vunpack.c.h.b16 %v2595
    %v3165 = vunpack.c.l.b16 %v2596
    %v3166 = vunpack.c.l.b16 %v2597
    %v3167 = vunpack.c.h.b16 %v2597
    %v3168 = vunpack.c.l.b16 %v2598
    %v3169 = vunpack.c.h.b16 %v2598
    %v3170 = vunpack.c.l.b16 %v2599
    %v3171 = vunpack.c.l.b16 %v2600
    %v3172 = vunpack.c.h.b16 %v2600
    %v3173 = vunpack.c.l.b16 %v2601
    %v3174 = vunpack.c.h.b16 %v2601
    %v3175 = vunpack.c.l.b16 %v2602
    %v3176 = vunpack.c.l.b16 %v2603
    %v3177 = vunpack.c.h.b16 %v2603
    %v3178 = vunpack.c.l.b16 %v2604
    %v3179 = vunpack.c.h.b16 %v2604
    %v3180 = vunpack.c.l.b16 %v2605
    %v3181 = vunpack.c.l.b16 %v2606
    %v3182 = vunpack.c.h.b16 %v2606
    %v3183 = vunpack.c.l.b16 %v2607
    %v3184 = vunpack.c.h.b16 %v2607
    %v3185 = vunpack.c.l.b16 %v2608
    %v3186 = vunpack.c.l.b16 %v2609
    %v3187 = vunpack.c.h.b16 %v2609
    %v3188 = vunpack.c.l.b16 %v2610
    %v3189 = vunpack.c.h.b16 %v2610
    %v3190 = vunpack.c.l.b16 %v2611
    %v3191 = vunpack.c.l.b16 %v2612
    %v3192 = vunpack.c.h.b16 %v2612
    %v3193 = vunpack.c.l.b16 %v2613
    %v3194 = vunpack.c.h.b16 %v2613
    %v3195 = vunpack.c.l.b16 %v2614
    %v3196 = vunpack.c.l.b16 %v2615
    %v3197 = vunpack.c.h.b16 %v2615
    %v3198 = vunpack.c.l.b16 %v2616
    %v3199 = vunpack.c.h.b16 %v2616
    %v3200 = vunpack.c.l.b16 %v2617
    %v3201 = vunpack.c.l.b16 %v2618
    %v3202 = vunpack.c.h.b16 %v2618
    %v3203 = vunpack.c.l.b16 %v2619
    %v3204 = vunpack.c.h.b16 %v2619
    %v3205 = vunpack.c.l.b16 %v2620
    %v3206 = vunpack.c.l.b16 %v2621
    %v3207 = vunpack.c.h.b16 %v2621
    %v3208 = vunpack.c.l.b16 %v2622
    %v3209 = vunpack.c.h.b16 %v2622
    %v3210 = vunpack.c.l.b16 %v2623
    %v3211 = vunpack.c.l.b16 %v2624
    %v3212 = vunpack.c.h.b16 %v2624
    %v3213 = vunpack.c.l.b16 %v2625
    %v3214 = vunpack.c.h.b16 %v2625
    %v3215 = vunpack.c.l.b16 %v2626
    %v3216 = vunpack.c.l.b16 %v2627
    %v3217 = vunpack.c.h.b16 %v2627
    %v3218 = vunpack.c.l.b16 %v2628
    %v3219 = vunpack.c.h.b16 %v2628
    %v3220 = vunpack.c.l.b16 %v2629
    %v3221 = vunpack.c.l.b16 %v2630
    %v3222 = vunpack.c.h.b16 %v2630
    %v3223 = vunpack.c.l.b16 %v2631
    %v3224 = vunpack.c.h.b16 %v2631
    %v3225 = vunpack.c.l.b16 %v2632
    %v3226 = vunpack.c.l.b16 %v2633
    %v3227 = vunpack.c.h.b16 %v2633
    %v3228 = vunpack.c.l.b16 %v2634
    %v3229 = vunpack.c.h.b16 %v2634
    %v3230 = vunpack.c.l.b16 %v2635
    %v3231 = vunpack.c.l.b16 %v2636
    %v3232 = vunpack.c.h.b16 %v2636
    %v3233 = vunpack.c.l.b16 %v2637
    %v3234 = vunpack.c.h.b16 %v2637
    %v3235 = vunpack.c.l.b16 %v2638
    %v3236 = vunpack.c.l.b16 %v2639
    %v3237 = vunpack.c.h.b16 %v2639
    %v3238 = vunpack.c.l.b16 %v2640
    %v3239 = vunpack.c.h.b16 %v2640
    %v3240 = vunpack.c.l.b16 %v2641
    %v3241 = vunpack.c.l.b16 %v2642
    %v3242 = vunpack.c.h.b16 %v2642
    %v3243 = vunpack.c.l.b16 %v2643
    %v3244 = vunpack.c.h.b16 %v2643
    %v3245 = vunpack.c.l.b16 %v2644
    %v3246 = vunpack.c.l.b16 %v2645
    %v3247 = vunpack.c.h.b16 %v2645
    %v3248 = vunpack.c.l.b16 %v2646
    %v3249 = vunpack.c.h.b16 %v2646
    %v3250 = vunpack.c.l.b16 %v2647
    %v3251 = vunpack.c.l.b16 %v2648
    %v3252 = vunpack.c.h.b16 %v2648
    %v3253 = vunpack.c.l.b16 %v2649
    %v3254 = vunpack.c.h.b16 %v2649
    %v3255 = vunpack.c.l.b16 %v2650
    %v3256 = vunpack.c.l.b16 %v2651
    %v3257 = vunpack.c.h.b16 %v2651
    %v3258 = vunpack.c.l.b16 %v2652
    %v3259 = vunpack.c.h.b16 %v2652
    %v3260 = vunpack.c.l.b16 %v2653
    %v3261 = vunpack.c.l.b16 %v2654
    %v3262 = vunpack.c.h.b16 %v2654
    %v3263 = vunpack.c.l.b16 %v2655
    %v3264 = vunpack.c.h.b16 %v2655
    %v3265 = vunpack.c.l.b16 %v2656
    %v3266 = vunpack.c.l.b16 %v2657
    %v3267 = vunpack.c.h.b16 %v2657
    %v3268 = vunpack.c.l.b16 %v2658
    %v3269 = vunpack.c.h.b16 %v2658
    %v3270 = vunpack.c.l.b16 %v2659
    %v3271 = vunpack.c.l.b16 %v2660
    %v3272 = vunpack.c.h.b16 %v2660
    %v3273 = vunpack.c.l.b16 %v2661
    %v3274 = vunpack.c.h.b16 %v2661
    %v3275 = vunpack.c.l.b16 %v2662
    %v3276 = vunpack.c.l.b16 %v2663
    %v3277 = vunpack.c.h.b16 %v2663
    %v3278 = vunpack.c.l.b16 %v2664
    %v3279 = vunpack.c.h.b16 %v2664
    %v3280 = vunpack.c.l.b16 %v2665
    %v3281 = vunpack.c.l.b16 %v2666
    %v3282 = vunpack.c.h.b16 %v2666
    %v3283 = vunpack.c.l.b16 %v2667
    %v3284 = vunpack.c.h.b16 %v2667
    %v3285 = vunpack.c.l.b16 %v2668
    %v3286 = vunpack.c.l.b16 %v2669
    %v3287 = vunpack.c.h.b16 %v2669
    %v3288 = vunpack.c.l.b16 %v2670
    %v3289 = vunpack.c.h.b16 %v2670
    %v3290 = vunpack.c.l.b16 %v2671
    %v3291 = vunpack.c.l.b16 %v2672
    %v3292 = vunpack.c.h.b16 %v2672
    %v3293 = vunpack.c.l.b16 %v2673
    %v3294 = vunpack.c.h.b16 %v2673
    %v3295 = vunpack.c.l.b16 %v2674
    %v3296 = vunpack.c.l.b16 %v2675
    %v3297 = vunpack.c.h.b16 %v2675
    %v3298 = vunpack.c.l.b16 %v2676
    %v3299 = vunpack.c.h.b16 %v2676
    %v3300 = vunpack.c.l.b16 %v2677
    %v3301 = vunpack.c.l.b16 %v2678
    %v3302 = vunpack.c.h.b16 %v2678
    %v3303 = vunpack.c.l.b16 %v2679
    %v3304 = vunpack.c.h.b16 %v2679
    %v3305 = vunpack.c.l.b16 %v2680
    %v3306 = vunpack.c.l.b16 %v2681
    %v3307 = vunpack.c.h.b16 %v2681
    %v3308 = vunpack.c.l.b16 %v2682
    %v3309 = vunpack.c.h.b16 %v2682
    %v3310 = vunpack.c.l.b16 %v2683
    %v3311 = vunpack.c.l.b16 %v2684
    %v3312 = vunpack.c.h.b16 %v2684
    %v3313 = vunpack.c.l.b16 %v2685
    %v3314 = vunpack.c.h.b16 %v2685
    %v3315 = vunpack.c.l.b16 %v2686
    %v3316 = vunpack.c.l.b16 %v2687
    %v3317 = vunpack.c.h.b16 %v2687
    %v3318 = vunpack.c.l.b16 %v2688
    %v3319 = vunpack.c.h.b16 %v2688
    %v3320 = vunpack.c.l.b16 %v2689
    %v3321 = vunpack.c.l.b16 %v2690
    %v3322 = vunpack.c.h.b16 %v2690
    %v3323 = vunpack.c.l.b16 %v2691
    %v3324 = vunpack.c.h.b16 %v2691
    %v3325 = vunpack.c.l.b16 %v2692
    %v3326 = vunpack.c.l.b16 %v2693
    %v3327 = vunpack.c.h.b16 %v2693
    %v3328 = vunpack.c.l.b16 %v2694
    %v3329 = vunpack.c.h.b16 %v2694
    %v3330 = vunpack.c.l.b16 %v2695
    %v3331 = vunpack.c.l.b16 %v2696
    %v3332 = vunpack.c.h.b16 %v2696
    %v3333 = vunpack.c.l.b16 %v2697
    %v3334 = vunpack.c.h.b16 %v2697
    %v3335 = vunpack.c.l.b16 %v2698
    %v3336 = vunpack.c.l.b16 %v2699
    %v3337 = vunpack.c.h.b16 %v2699
    %v3338 = vunpack.c.l.b16 %v2700
    %v3339 = vunpack.c.h.b16 %v2700
    %v3340 = vunpack.c.l.b16 %v2701
    %v3341 = vunpack.c.l.b16 %v2702
    %v3342 = vunpack.c.h.b16 %v2702
    %v3343 = vunpack.c.l.b16 %v2703
    %v3344 = vunpack.c.h.b16 %v2703
    %v3345 = vunpack.c.l.b16 %v2704
    %v3346 = vunpack.c.l.b16 %v2705
    %v3347 = vunpack.c.h.b16 %v2705
    %v3348 = vunpack.c.l.b16 %v2706
    %v3349 = vunpack.c.h.b16 %v2706
    %v3350 = vunpack.c.l.b16 %v2707
    %v3351 = vunpack.c.l.b16 %v2708
    %v3352 = vunpack.c.h.b16 %v2708
    %v3353 = vunpack.c.l.b16 %v2709
    %v3354 = vunpack.c.h.b16 %v2709
    %v3355 = vunpack.c.l.b16 %v2710
    %v3356 = vunpack.c.l.b16 %v2711
    %v3357 = vunpack.c.h.b16 %v2711
    %v3358 = vunpack.c.l.b16 %v2712
    %v3359 = vunpack.c.h.b16 %v2712
    %v3360 = vunpack.c.l.b16 %v2713
    %v3361 = vunpack.c.l.b16 %v2714
    %v3362 = vunpack.c.h.b16 %v2714
    %v3363 = vunpack.c.l.b16 %v2715
    %v3364 = vunpack.c.h.b16 %v2715
    %v3365 = vunpack.c.l.b16 %v2716
    %v3366 = vunpack.c.l.b16 %v2717
    %v3367 = vunpack.c.h.b16 %v2717
    %v3368 = vunpack.c.l.b16 %v2718
    %v3369 = vunpack.c.h.b16 %v2718
    %v3370 = vunpack.c.l.b16 %v2719
    %v3371 = vunpack.c.l.b16 %v2720
    %v3372 = vunpack.c.h.b16 %v2720
    %v3373 = vunpack.c.l.b16 %v2721
    %v3374 = vunpack.c.h.b16 %v2721
    %v3375 = vunpack.c.l.b16 %v2722
    %v3376 = vunpack.c.l.b16 %v2723
    %v3377 = vunpack.c.h.b16 %v2723
    %v3378 = vunpack.c.l.b16 %v2724
    %v3379 = vunpack.c.h.b16 %v2724
    %v3380 = vunpack.c.l.b16 %v2725
    %v3381 = vunpack.c.l.b16 %v2726
    %v3382 = vunpack.c.h.b16 %v2726
    %v3383 = vunpack.c.l.b16 %v2727
    %v3384 = vunpack.c.h.b16 %v2727
    %v3385 = vunpack.c.l.b16 %v2728
    %v3386 = vunpack.c.l.b16 %v2729
    %v3387 = vunpack.c.h.b16 %v2729
    %v3388 = vunpack.c.l.b16 %v2730
    %v3389 = vunpack.c.h.b16 %v2730
    %v3390 = vunpack.c.l.b16 %v2731
    %v3391 = vunpack.c.l.b16 %v2732
    %v3392 = vunpack.c.h.b16 %v2732
    %v3393 = vunpack.c.l.b16 %v2733
    %v3394 = vunpack.c.h.b16 %v2733
    %v3395 = vunpack.c.l.b16 %v2734
    %v3396 = vunpack.c.l.b16 %v2735
    %v3397 = vunpack.c.h.b16 %v2735
    %v3398 = vunpack.c.l.b16 %v2736
    %v3399 = vunpack.c.h.b16 %v2736
    %v3400 = vunpack.c.l.b16 %v2737
    %v3401 = vunpack.c.l.b16 %v2738
    %v3402 = vunpack.c.h.b16 %v2738
    %v3403 = vunpack.c.l.b16 %v2739
    %v3404 = vunpack.c.h.b16 %v2739
    %v3405 = vunpack.c.l.b16 %v2740
    %v3406 = vunpack.c.l.b16 %v2741
    %v3407 = vunpack.c.h.b16 %v2741
    %v3408 = vunpack.c.l.b16 %v2742
    %v3409 = vunpack.c.h.b16 %v2742
    %v3410 = vunpack.c.l.b16 %v2743
    %v3411 = vpack.c.b16 %v3016, %v3011
    %v3412 = vpack.c.b16 %v3017, %v3012
    %v3413 = vpack.c.b16 %v3018, %v3013
    %v3414 = vpack.c.b16 %v3019, %v3014
    %v3415 = vpack.c.b16 %v3020, %v3015
    %v3416 = vpack.c.b16 %v3026, %v3021
    %v3417 = vpack.c.b16 %v3027, %v3022
    %v3418 = vpack.c.b16 %v3028, %v3023
    %v3419 = vpack.c.b16 %v3029, %v3024
    %v3420 = vpack.c.b16 %v3030, %v3025
    %v3421 = vpack.c.b16 %v3036, %v3031
    %v3422 = vpack.c.b16 %v3037, %v3032
    %v3423 = vpack.c.b16 %v3038, %v3033
    %v3424 = vpack.c.b16 %v3039, %v3034
    %v3425 = vpack.c.b16 %v3040, %v3035
    %v3426 = vpack.c.b16 %v3046, %v3041
    %v3427 = vpack.c.b16 %v3047, %v3042
    %v3428 = vpack.c.b16 %v3048, %v3043
    %v3429 = vpack.c.b16 %v3049, %v3044
    %v3430 = vpack.c.b16 %v3050, %v3045
    %v3431 = vpack.c.b16 %v3056, %v3051
    %v3432 = vpack.c.b16 %v3057, %v3052
    %v3433 = vpack.c.b16 %v3058, %v3053
    %v3434 = vpack.c.b16 %v3059, %v3054
    %v3435 = vpack.c.b16 %v3060, %v3055
    %v3436 = vpack.c.b16 %v3066, %v3061
    %v3437 = vpack.c.b16 %v3067, %v3062
    %v3438 = vpack.c.b16 %v3068, %v3063
    %v3439 = vpack.c.b16 %v3069, %v3064
    %v3440 = vpack.c.b16 %v3070, %v3065
    %v3441 = vpack.c.b16 %v3076, %v3071
    %v3442 = vpack.c.b16 %v3077, %v3072
    %v3443 = vpack.c.b16 %v3078, %v3073
    %v3444 = vpack.c.b16 %v3079, %v3074
    %v3445 = vpack.c.b16 %v3080, %v3075
    %v3446 = vpack.c.b16 %v3086, %v3081
    %v3447 = vpack.c.b16 %v3087, %v3082
    %v3448 = vpack.c.b16 %v3088, %v3083
    %v3449 = vpack.c.b16 %v3089, %v3084
    %v3450 = vpack.c.b16 %v3090, %v3085
    %v3451 = vpack.c.b16 %v3096, %v3091
    %v3452 = vpack.c.b16 %v3097, %v3092
    %v3453 = vpack.c.b16 %v3098, %v3093
    %v3454 = vpack.c.b16 %v3099, %v3094
    %v3455 = vpack.c.b16 %v3100, %v3095
    %v3456 = vpack.c.b16 %v3106, %v3101
    %v3457 = vpack.c.b16 %v3107, %v3102
    %v3458 = vpack.c.b16 %v3108, %v3103
    %v3459 = vpack.c.b16 %v3109, %v3104
    %v3460 = vpack.c.b16 %v3110, %v3105
    %v3461 = vpack.c.b16 %v3116, %v3111
    %v3462 = vpack.c.b16 %v3117, %v3112
    %v3463 = vpack.c.b16 %v3118, %v3113
    %v3464 = vpack.c.b16 %v3119, %v3114
    %v3465 = vpack.c.b16 %v3120, %v3115
    %v3466 = vpack.c.b16 %v3126, %v3121
    %v3467 = vpack.c.b16 %v3127, %v3122
    %v3468 = vpack.c.b16 %v3128, %v3123
    %v3469 = vpack.c.b16 %v3129, %v3124
    %v3470 = vpack.c.b16 %v3130, %v3125
    %v3471 = vpack.c.b16 %v3136, %v3131
    %v3472 = vpack.c.b16 %v3137, %v3132
    %v3473 = vpack.c.b16 %v3138, %v3133
    %v3474 = vpack.c.b16 %v3139, %v3134
    %v3475 = vpack.c.b16 %v3140, %v3135
    %v3476 = vpack.c.b16 %v3146, %v3141
    %v3477 = vpack.c.b16 %v3147, %v3142
    %v3478 = vpack.c.b16 %v3148, %v3143
    %v3479 = vpack.c.b16 %v3149, %v3144
    %v3480 = vpack.c.b16 %v3150, %v3145
    %v3481 = vpack.c.b16 %v3156, %v3151
    %v3482 = vpack.c.b16 %v3157, %v3152
    %v3483 = vpack.c.b16 %v3158, %v3153
    %v3484 = vpack.c.b16 %v3159, %v3154
    %v3485 = vpack.c.b16 %v3160, %v3155
    %v3486 = vpack.c.b16 %v3166, %v3161
    %v3487 = vpack.c.b16 %v3167, %v3162
    %v3488 = vpack.c.b16 %v3168, %v3163
    %v3489 = vpack.c.b16 %v3169, %v3164
    %v3490 = vpack.c.b16 %v3170, %v3165
    %v3491 = vpack.c.b16 %v3176, %v3171
    %v3492 = vpack.c.b16 %v3177, %v3172
    %v3493 = vpack.c.b16 %v3178, %v3173
    %v3494 = vpack.c.b16 %v3179, %v3174
    %v3495 = vpack.c.b16 %v3180, %v3175
    %v3496 = vpack.c.b16 %v3186, %v3181
    %v3497 = vpack.c.b16 %v3187, %v3182
    %v3498 = vpack.c.b16 %v3188, %v3183
    %v3499 = vpack.c.b16 %v3189, %v3184
    %v3500 = vpack.c.b16 %v3190, %v3185
    %v3501 = vpack.c.b16 %v3196, %v3191
    %v3502 = vpack.c.b16 %v3197, %v3192
    %v3503 = vpack.c.b16 %v3198, %v3193
    %v3504 = vpack.c.b16 %v3199, %v3194
    %v3505 = vpack.c.b16 %v3200, %v3195
    %v3506 = vpack.c.b16 %v3206, %v3201
    %v3507 = vpack.c.b16 %v3207, %v3202
    %v3508 = vpack.c.b16 %v3208, %v3203
    %v3509 = vpack.c.b16 %v3209, %v3204
    %v3510 = vpack.c.b16 %v3210, %v3205
    %v3511 = vpack.c.b16 %v3216, %v3211
    %v3512 = vpack.c.b16 %v3217, %v3212
    %v3513 = vpack.c.b16 %v3218, %v3213
    %v3514 = vpack.c.b16 %v3219, %v3214
    %v3515 = vpack.c.b16 %v3220, %v3215
    %v3516 = vpack.c.b16 %v3226, %v3221
    %v3517 = vpack.c.b16 %v3227, %v3222
    %v3518 = vpack.c.b16 %v3228, %v3223
    %v3519 = vpack.c.b16 %v3229, %v3224
    %v3520 = vpack.c.b16 %v3230, %v3225
    %v3521 = vpack.c.b16 %v3236, %v3231
    %v3522 = vpack.c.b16 %v3237, %v3232
    %v3523 = vpack.c.b16 %v3238, %v3233
    %v3524 = vpack.c.b16 %v3239, %v3234
    %v3525 = vpack.c.b16 %v3240, %v3235
    %v3526 = vpack.c.b16 %v3246, %v3241
    %v3527 = vpack.c.b16 %v3247, %v3242
    %v3528 = vpack.c.b16 %v3248, %v3243
    %v3529 = vpack.c.b16 %v3249, %v3244
    %v3530 = vpack.c.b16 %v3250, %v3245
    %v3531 = vpack.c.b16 %v3256, %v3251
    %v3532 = vpack.c.b16 %v3257, %v3252
    %v3533 = vpack.c.b16 %v3258, %v3253
    %v3534 = vpack.c.b16 %v3259, %v3254
    %v3535 = vpack.c.b16 %v3260, %v3255
    %v3536 = vpack.c.b16 %v3266, %v3261
    %v3537 = vpack.c.b16 %v3267, %v3262
    %v3538 = vpack.c.b16 %v3268, %v3263
    %v3539 = vpack.c.b16 %v3269, %v3264
    %v3540 = vpack.c.b16 %v3270, %v3265
    %v3541 = vpack.c.b16 %v3276, %v3271
    %v3542 = vpack.c.b16 %v3277, %v3272
    %v3543 = vpack.c.b16 %v3278, %v3273
    %v3544 = vpack.c.b16 %v3279, %v3274
    %v3545 = vpack.c.b16 %v3280, %v3275
    %v3546 = vpack.c.b16 %v3286, %v3281
    %v3547 = vpack.c.b16 %v3287, %v3282
    %v3548 = vpack.c.b16 %v3288, %v3283
    %v3549 = vpack.c.b16 %v3289, %v3284
    %v3550 = vpack.c.b16 %v3290, %v3285
    %v3551 = vpack.c.b16 %v3296, %v3291
    %v3552 = vpack.c.b16 %v3297, %v3292
    %v3553 = vpack.c.b16 %v3298, %v3293
    %v3554 = vpack.c.b16 %v3299, %v3294
    %v3555 = vpack.c.b16 %v3300, %v3295
    %v3556 = vpack.c.b16 %v3306, %v3301
    %v3557 = vpack.c.b16 %v3307, %v3302
    %v3558 = vpack.c.b16 %v3308, %v3303
    %v3559 = vpack.c.b16 %v3309, %v3304
    %v3560 = vpack.c.b16 %v3310, %v3305
    %v3561 = vpack.c.b16 %v3316, %v3311
    %v3562 = vpack.c.b16 %v3317, %v3312
    %v3563 = vpack.c.b16 %v3318, %v3313
    %v3564 = vpack.c.b16 %v3319, %v3314
    %v3565 = vpack.c.b16 %v3320, %v3315
    %v3566 = vpack.c.b16 %v3326, %v3321
    %v3567 = vpack.c.b16 %v3327, %v3322
    %v3568 = vpack.c.b16 %v3328, %v3323
    %v3569 = vpack.c.b16 %v3329, %v3324
    %v3570 = vpack.c.b16 %v3330, %v3325
    %v3571 = vpack.c.b16 %v3336, %v3331
    %v3572 = vpack.c.b16 %v3337, %v3332
    %v3573 = vpack.c.b16 %v3338, %v3333
    %v3574 = vpack.c.b16 %v3339, %v3334
    %v3575 = vpack.c.b16 %v3340, %v3335
    %v3576 = vpack.c.b16 %v3346, %v3341
    %v3577 = vpack.c.b16 %v3347, %v3342
    %v3578 = vpack.c.b16 %v3348, %v3343
    %v3579 = vpack.c.b16 %v3349, %v3344
    %v3580 = vpack.c.b16 %v3350, %v3345
    %v3581 = vpack.c.b16 %v3356, %v3351
    %v3582 = vpack.c.b16 %v3357, %v3352
    %v3583 = vpack.c.b16 %v3358, %v3353
    %v3584 = vpack.c.b16 %v3359, %v3354
    %v3585 = vpack.c.b16 %v3360, %v3355
    %v3586 = vpack.c.b16 %v3366, %v3361
    %v3587 = vpack.c.b16 %v3367, %v3362
    %v3588 = vpack.c.b16 %v3368, %v3363
    %v3589 = vpack.c.b16 %v3369, %v3364
    %v3590 = vpack.c.b16 %v3370, %v3365
    %v3591 = vpack.c.b16 %v3376, %v3371
    %v3592 = vpack.c.b16 %v3377, %v3372
    %v3593 = vpack.c.b16 %v3378, %v3373
    %v3594 = vpack.c.b16 %v3379, %v3374
    %v3595 = vpack.c.b16 %v3380, %v3375
    %v3596 = vpack.c.b16 %v3386, %v3381
    %v3597 = vpack.c.b16 %v3387, %v3382
    %v3598 = vpack.c.b16 %v3388, %v3383
    %v3599 = vpack.c.b16 %v3389, %v3384
    %v3600 = vpack.c.b16 %v3390, %v3385
    %v3601 = vpack.c.b16 %v3396, %v3391
    %v3602 = vpack.c.b16 %v3397, %v3392
    %v3603 = vpack.c.b16 %v3398, %v3393
    %v3604 = vpack.c.b16 %v3399, %v3394
    %v3605 = vpack.c.b16 %v3400, %v3395
    %v3606 = vpack.c.b16 %v3406, %v3401
    %v3607 = vpack.c.b16 %v3407, %v3402
    %v3608 = vpack.c.b16 %v3408, %v3403
    %v3609 = vpack.c.b16 %v3409, %v3404
    %v3610 = vpack.c.b16 %v3410, %v3405
    %3811 = vmatprep.subr.bf16.mxu0 %v3412
    %3812 = vmatpush1.bf16.msra.mxu0 %v3411
    %3813 = vmatprep.subr.bf16.mxu0 %v3417
    %3814 = vmatpush1.bf16.msra.mxu0 %v3416
    %3815 = vmatprep.subr.bf16.mxu0 %v3422
    %3816 = vmatpush1.bf16.msra.mxu0 %v3421
    %3817 = vmatprep.subr.bf16.mxu0 %v3427
    %3818 = vmatpush1.bf16.msra.mxu0 %v3426
    %3819 = vmatprep.subr.bf16.mxu0 %v3432
    %3820 = vmatpush1.bf16.msra.mxu0 %v3431
    %3821 = vmatprep.subr.bf16.mxu0 %v3437
    %3822 = vmatpush1.bf16.msra.mxu0 %v3436
    %3823 = vmatprep.subr.bf16.mxu0 %v3442
    %3824 = vmatpush1.bf16.msra.mxu0 %v3441
    %3825 = vmatprep.subr.bf16.mxu0 %v3447
    %3826 = vmatpush1.bf16.msra.mxu0 %v3446
    %3827 = vmatprep.subr.bf16.mxu0 %v3452
    %3828 = vmatpush1.bf16.msra.mxu0 %v3451
    %3829 = vmatprep.subr.bf16.mxu0 %v3457
    %3830 = vmatpush1.bf16.msra.mxu0 %v3456
    %3831 = vmatprep.subr.bf16.mxu0 %v3462
    %3832 = vmatpush1.bf16.msra.mxu0 %v3461
    %3833 = vmatprep.subr.bf16.mxu0 %v3467
    %3834 = vmatpush1.bf16.msra.mxu0 %v3466
    %3835 = vmatprep.subr.bf16.mxu0 %v3472
    %3836 = vmatpush1.bf16.msra.mxu0 %v3471
    %3837 = vmatprep.subr.bf16.mxu0 %v3477
    %3838 = vmatpush1.bf16.msra.mxu0 %v3476
    %3839 = vmatprep.subr.bf16.mxu0 %v3482
    %3840 = vmatpush1.bf16.msra.mxu0 %v3481
    %3841 = vmatprep.subr.bf16.mxu0 %v3487
    %3842 = vmatpush1.bf16.msra.mxu0 %v3486
    %3843 = vmatprep.mubr.bf16.mxu0 %v2500
    %3844 = vmatmul.mubr.bf16.gmra.mrb[0].mxu0 %v2499
    %v3845 = vpop.f32.mrb[0].mxu0
    %v3846 = vadd.f32 %v2749, %v3845
    %v3847 = vpop.f32.mrb[0].mxu0
    %v3848 = vadd.f32 %v2753, %v3847
    %v3849 = vpop.f32.mrb[0].mxu0
    %v3850 = vpop.f32.mrb[0].mxu0
    %3851 = vdwg.mxu0
    %3852 = vmatprep.subr.bf16.mxu0 %v3492
    %3853 = vmatpush1.bf16.msra.mxu0 %v3491
    %3854 = vmatprep.subr.bf16.mxu0 %v3497
    %3855 = vmatpush1.bf16.msra.mxu0 %v3496
    %3856 = vmatprep.subr.bf16.mxu0 %v3502
    %3857 = vmatpush1.bf16.msra.mxu0 %v3501
    %3858 = vmatprep.subr.bf16.mxu0 %v3507
    %3859 = vmatpush1.bf16.msra.mxu0 %v3506
    %3860 = vmatprep.subr.bf16.mxu0 %v3512
    %3861 = vmatpush1.bf16.msra.mxu0 %v3511
    %3862 = vmatprep.subr.bf16.mxu0 %v3517
    %3863 = vmatpush1.bf16.msra.mxu0 %v3516
    %3864 = vmatprep.subr.bf16.mxu0 %v3522
    %3865 = vmatpush1.bf16.msra.mxu0 %v3521
    %3866 = vmatprep.subr.bf16.mxu0 %v3527
    %3867 = vmatpush1.bf16.msra.mxu0 %v3526
    %3868 = vmatprep.subr.bf16.mxu0 %v3532
    %3869 = vmatpush1.bf16.msra.mxu0 %v3531
    %3870 = vmatprep.subr.bf16.mxu0 %v3537
    %3871 = vmatpush1.bf16.msra.mxu0 %v3536
    %3872 = vmatprep.subr.bf16.mxu0 %v3542
    %3873 = vmatpush1.bf16.msra.mxu0 %v3541
    %3874 = vmatprep.subr.bf16.mxu0 %v3547
    %3875 = vmatpush1.bf16.msra.mxu0 %v3546
    %3876 = vmatprep.subr.bf16.mxu0 %v3552
    %3877 = vmatpush1.bf16.msra.mxu0 %v3551
    %3878 = vmatprep.subr.bf16.mxu0 %v3557
    %3879 = vmatpush1.bf16.msra.mxu0 %v3556
    %3880 = vmatprep.subr.bf16.mxu0 %v3562
    %3881 = vmatpush1.bf16.msra.mxu0 %v3561
    %3882 = vmatprep.subr.bf16.mxu0 %v3567
    %3883 = vmatpush1.bf16.msra.mxu0 %v3566
    %3884 = vmatprep.mubr.bf16.mxu0 %v2502
    %3885 = vmatmul.mubr.bf16.gmra.mrb[0].mxu0 %v2501
    %v3886 = vpop.f32.mrb[0].mxu0
    %v3887 = vadd.f32 %v3846, %v3886
    %v3888 = vpop.f32.mrb[0].mxu0
    %v3889 = vadd.f32 %v3848, %v3888
    %v3890 = vpop.f32.mrb[0].mxu0
    %v3891 = vpop.f32.mrb[0].mxu0
    %3892 = vdwg.mxu0
    %3893 = vmatprep.subr.bf16.mxu0 %v3572
    %3894 = vmatpush1.bf16.msra.mxu0 %v3571
    %3895 = vmatprep.subr.bf16.mxu0 %v3577
    %3896 = vmatpush1.bf16.msra.mxu0 %v3576
    %3897 = vmatprep.subr.bf16.mxu0 %v3582
    %3898 = vmatpush1.bf16.msra.mxu0 %v3581
    %3899 = vmatprep.subr.bf16.mxu0 %v3587
    %3900 = vmatpush1.bf16.msra.mxu0 %v3586
    %3901 = vmatprep.subr.bf16.mxu0 %v3592
    %3902 = vmatpush1.bf16.msra.mxu0 %v3591
    %3903 = vmatprep.subr.bf16.mxu0 %v3597
    %3904 = vmatpush1.bf16.msra.mxu0 %v3596
    %3905 = vmatprep.subr.bf16.mxu0 %v3602
    %3906 = vmatpush1.bf16.msra.mxu0 %v3601
    %3907 = vmatprep.subr.bf16.mxu0 %v3607
    %3908 = vmatpush1.bf16.msra.mxu0 %v3606
    %3909 = vmatprep.subr.bf16.mxu0 0
    %3910 = vmatpush1.bf16.msra.mxu0 0
    %3911 = vmatprep.subr.bf16.mxu0 0
    %3912 = vmatpush1.bf16.msra.mxu0 0
    %3913 = vmatprep.subr.bf16.mxu0 0
    %3914 = vmatpush1.bf16.msra.mxu0 0
    %3915 = vmatprep.subr.bf16.mxu0 0
    %3916 = vmatpush1.bf16.msra.mxu0 0
    %3917 = vmatprep.subr.bf16.mxu0 0
    %3918 = vmatpush1.bf16.msra.mxu0 0
    %3919 = vmatprep.subr.bf16.mxu0 0
    %3920 = vmatpush1.bf16.msra.mxu0 0
    %3921 = vmatprep.subr.bf16.mxu0 0
    %3922 = vmatpush1.bf16.msra.mxu0 0
    %3923 = vmatprep.subr.bf16.mxu0 0
    %3924 = vmatpush1.bf16.msra.mxu0 0
    %3925 = vmatprep.mubr.bf16.mxu0 0
    %3926 = vmatmul.mubr.bf16.gmra.mrb[0].mxu0 %v2503
    %v3927 = vpop.f32.mrb[0].mxu0
    %v3928 = vadd.f32 %v3887, %v3927
    %v3929 = vpop.f32.mrb[0].mxu0
    %v3930 = vadd.f32 %v3889, %v3929
    %v3931 = vpop.f32.mrb[0].mxu0
    %v3932 = vpop.f32.mrb[0].mxu0
    %3933 = vdwg.mxu0
    %3934 = vmatprep.subr.bf16.mxu0 %v3414
    %3935 = vmatpush1.bf16.msra.mxu0 %v3413
    %3936 = vmatprep.subr.bf16.mxu0 %v3419
    %3937 = vmatpush1.bf16.msra.mxu0 %v3418
    %3938 = vmatprep.subr.bf16.mxu0 %v3424
    %3939 = vmatpush1.bf16.msra.mxu0 %v3423
    %3940 = vmatprep.subr.bf16.mxu0 %v3429
    %3941 = vmatpush1.bf16.msra.mxu0 %v3428
    %3942 = vmatprep.subr.bf16.mxu0 %v3434
    %3943 = vmatpush1.bf16.msra.mxu0 %v3433
    %3944 = vmatprep.subr.bf16.mxu0 %v3439
    %3945 = vmatpush1.bf16.msra.mxu0 %v3438
    %3946 = vmatprep.subr.bf16.mxu0 %v3444
    %3947 = vmatpush1.bf16.msra.mxu0 %v3443
    %3948 = vmatprep.subr.bf16.mxu0 %v3449
    %3949 = vmatpush1.bf16.msra.mxu0 %v3448
    %3950 = vmatprep.subr.bf16.mxu0 %v3454
    %3951 = vmatpush1.bf16.msra.mxu0 %v3453
    %3952 = vmatprep.subr.bf16.mxu0 %v3459
    %3953 = vmatpush1.bf16.msra.mxu0 %v3458
    %3954 = vmatprep.subr.bf16.mxu0 %v3464
    %3955 = vmatpush1.bf16.msra.mxu0 %v3463
    %3956 = vmatprep.subr.bf16.mxu0 %v3469
    %3957 = vmatpush1.bf16.msra.mxu0 %v3468
    %3958 = vmatprep.subr.bf16.mxu0 %v3474
    %3959 = vmatpush1.bf16.msra.mxu0 %v3473
    %3960 = vmatprep.subr.bf16.mxu0 %v3479
    %3961 = vmatpush1.bf16.msra.mxu0 %v3478
    %3962 = vmatprep.subr.bf16.mxu0 %v3484
    %3963 = vmatpush1.bf16.msra.mxu0 %v3483
    %3964 = vmatprep.subr.bf16.mxu0 %v3489
    %3965 = vmatpush1.bf16.msra.mxu0 %v3488
    %3966 = vmatprep.mubr.bf16.mxu0 %v2500
    %3967 = vmatmul.mubr.bf16.gmra.mrb[0].mxu0 %v2499
    %v3968 = vpop.f32.mrb[0].mxu0
    %v3969 = vadd.f32 %v2757, %v3968
    %v3970 = vpop.f32.mrb[0].mxu0
    %v3971 = vadd.f32 %v2761, %v3970
    %v3972 = vpop.f32.mrb[0].mxu0
    %v3973 = vpop.f32.mrb[0].mxu0
    %3974 = vdwg.mxu0
    %3975 = vmatprep.subr.bf16.mxu0 %v3494
    %3976 = vmatpush1.bf16.msra.mxu0 %v3493
    %3977 = vmatprep.subr.bf16.mxu0 %v3499
    %3978 = vmatpush1.bf16.msra.mxu0 %v3498
    %3979 = vmatprep.subr.bf16.mxu0 %v3504
    %3980 = vmatpush1.bf16.msra.mxu0 %v3503
    %3981 = vmatprep.subr.bf16.mxu0 %v3509
    %3982 = vmatpush1.bf16.msra.mxu0 %v3508
    %3983 = vmatprep.subr.bf16.mxu0 %v3514
    %3984 = vmatpush1.bf16.msra.mxu0 %v3513
    %3985 = vmatprep.subr.bf16.mxu0 %v3519
    %3986 = vmatpush1.bf16.msra.mxu0 %v3518
    %3987 = vmatprep.subr.bf16.mxu0 %v3524
    %3988 = vmatpush1.bf16.msra.mxu0 %v3523
    %3989 = vmatprep.subr.bf16.mxu0 %v3529
    %3990 = vmatpush1.bf16.msra.mxu0 %v3528
    %3991 = vmatprep.subr.bf16.mxu0 %v3534
    %3992 = vmatpush1.bf16.msra.mxu0 %v3533
    %3993 = vmatprep.subr.bf16.mxu0 %v3539
    %3994 = vmatpush1.bf16.msra.mxu0 %v3538
    %3995 = vmatprep.subr.bf16.mxu0 %v3544
    %3996 = vmatpush1.bf16.msra.mxu0 %v3543
    %3997 = vmatprep.subr.bf16.mxu0 %v3549
    %3998 = vmatpush1.bf16.msra.mxu0 %v3548
    %3999 = vmatprep.subr.bf16.mxu0 %v3554
    %4000 = vmatpush1.bf16.msra.mxu0 %v3553
    %4001 = vmatprep.subr.bf16.mxu0 %v3559
    %4002 = vmatpush1.bf16.msra.mxu0 %v3558
    %4003 = vmatprep.subr.bf16.mxu0 %v3564
    %4004 = vmatpush1.bf16.msra.mxu0 %v3563
    %4005 = vmatprep.subr.bf16.mxu0 %v3569
    %4006 = vmatpush1.bf16.msra.mxu0 %v3568
    %4007 = vmatprep.mubr.bf16.mxu0 %v2502
    %4008 = vmatmul.mubr.bf16.gmra.mrb[0].mxu0 %v2501
    %v4009 = vpop.f32.mrb[0].mxu0
    %v4010 = vadd.f32 %v3969, %v4009
    %v4011 = vpop.f32.mrb[0].mxu0
    %v4012 = vadd.f32 %v3971, %v4011
    %v4013 = vpop.f32.mrb[0].mxu0
    %v4014 = vpop.f32.mrb[0].mxu0
    %4015 = vdwg.mxu0
    %4016 = vmatprep.subr.bf16.mxu0 %v3574
    %4017 = vmatpush1.bf16.msra.mxu0 %v3573
    %4018 = vmatprep.subr.bf16.mxu0 %v3579
    %4019 = vmatpush1.bf16.msra.mxu0 %v3578
    %4020 = vmatprep.subr.bf16.mxu0 %v3584
    %4021 = vmatpush1.bf16.msra.mxu0 %v3583
    %4022 = vmatprep.subr.bf16.mxu0 %v3589
    %4023 = vmatpush1.bf16.msra.mxu0 %v3588
    %4024 = vmatprep.subr.bf16.mxu0 %v3594
    %4025 = vmatpush1.bf16.msra.mxu0 %v3593
    %4026 = vmatprep.subr.bf16.mxu0 %v3599
    %4027 = vmatpush1.bf16.msra.mxu0 %v3598
    %4028 = vmatprep.subr.bf16.mxu0 %v3604
    %4029 = vmatpush1.bf16.msra.mxu0 %v3603
    %4030 = vmatprep.subr.bf16.mxu0 %v3609
    %4031 = vmatpush1.bf16.msra.mxu0 %v3608
    %4032 = vmatprep.subr.bf16.mxu0 0
    %4033 = vmatpush1.bf16.msra.mxu0 0
    %4034 = vmatprep.subr.bf16.mxu0 0
    %4035 = vmatpush1.bf16.msra.mxu0 0
    %4036 = vmatprep.subr.bf16.mxu0 0
    %4037 = vmatpush1.bf16.msra.mxu0 0
    %4038 = vmatprep.subr.bf16.mxu0 0
    %4039 = vmatpush1.bf16.msra.mxu0 0
    %4040 = vmatprep.subr.bf16.mxu0 0
    %4041 = vmatpush1.bf16.msra.mxu0 0
    %4042 = vmatprep.subr.bf16.mxu0 0
    %4043 = vmatpush1.bf16.msra.mxu0 0
    %4044 = vmatprep.subr.bf16.mxu0 0
    %4045 = vmatpush1.bf16.msra.mxu0 0
    %4046 = vmatprep.subr.bf16.mxu0 0
    %4047 = vmatpush1.bf16.msra.mxu0 0
    %4048 = vmatprep.mubr.bf16.mxu0 0
    %4049 = vmatmul.mubr.bf16.gmra.mrb[0].mxu0 %v2503
    %v4050 = vpop.f32.mrb[0].mxu0
    %v4051 = vadd.f32 %v4010, %v4050
    %v4052 = vpop.f32.mrb[0].mxu0
    %v4053 = vadd.f32 %v4012, %v4052
    %v4054 = vpop.f32.mrb[0].mxu0
    %v4055 = vpop.f32.mrb[0].mxu0
    %4056 = vdwg.mxu0
    %4057 = vmatprep.subr.bf16.mxu0 0
    %4058 = vmatpush1.bf16.msra.mxu0 %v3415
    %4059 = vmatprep.subr.bf16.mxu0 0
    %4060 = vmatpush1.bf16.msra.mxu0 %v3420
    %4061 = vmatprep.subr.bf16.mxu0 0
    %4062 = vmatpush1.bf16.msra.mxu0 %v3425
    %4063 = vmatprep.subr.bf16.mxu0 0
    %4064 = vmatpush1.bf16.msra.mxu0 %v3430
    %4065 = vmatprep.subr.bf16.mxu0 0
    %4066 = vmatpush1.bf16.msra.mxu0 %v3435
    %4067 = vmatprep.subr.bf16.mxu0 0
    %4068 = vmatpush1.bf16.msra.mxu0 %v3440
    %4069 = vmatprep.subr.bf16.mxu0 0
    %4070 = vmatpush1.bf16.msra.mxu0 %v3445
    %4071 = vmatprep.subr.bf16.mxu0 0
    %4072 = vmatpush1.bf16.msra.mxu0 %v3450
    %4073 = vmatprep.subr.bf16.mxu0 0
    %4074 = vmatpush1.bf16.msra.mxu0 %v3455
    %4075 = vmatprep.subr.bf16.mxu0 0
    %4076 = vmatpush1.bf16.msra.mxu0 %v3460
    %4077 = vmatprep.subr.bf16.mxu0 0
    %4078 = vmatpush1.bf16.msra.mxu0 %v3465
    %4079 = vmatprep.subr.bf16.mxu0 0
    %4080 = vmatpush1.bf16.msra.mxu0 %v3470
    %4081 = vmatprep.subr.bf16.mxu0 0
    %4082 = vmatpush1.bf16.msra.mxu0 %v3475
    %4083 = vmatprep.subr.bf16.mxu0 0
    %4084 = vmatpush1.bf16.msra.mxu0 %v3480
    %4085 = vmatprep.subr.bf16.mxu0 0
    %4086 = vmatpush1.bf16.msra.mxu0 %v3485
    %4087 = vmatprep.subr.bf16.mxu0 0
    %4088 = vmatpush1.bf16.msra.mxu0 %v3490
    %4089 = vmatprep.mubr.bf16.mxu0 %v2500
    %4090 = vmatmul.mubr.bf16.gmra.mrb[0].mxu0 %v2499
    %v4091 = vpop.f32.mrb[0].mxu0
    %v4092 = vadd.f32 %v2765, %v4091
    %v4093 = vpop.f32.mrb[0].mxu0
    %v4094 = vpop.f32.mrb[0].mxu0
    %v4095 = vpop.f32.mrb[0].mxu0
    %4096 = vdwg.mxu0
    %4097 = vmatprep.subr.bf16.mxu0 0
    %4098 = vmatpush1.bf16.msra.mxu0 %v3495
    %4099 = vmatprep.subr.bf16.mxu0 0
    %4100 = vmatpush1.bf16.msra.mxu0 %v3500
    %4101 = vmatprep.subr.bf16.mxu0 0
    %4102 = vmatpush1.bf16.msra.mxu0 %v3505
    %4103 = vmatprep.subr.bf16.mxu0 0
    %4104 = vmatpush1.bf16.msra.mxu0 %v3510
    %4105 = vmatprep.subr.bf16.mxu0 0
    %4106 = vmatpush1.bf16.msra.mxu0 %v3515
    %4107 = vmatprep.subr.bf16.mxu0 0
    %4108 = vmatpush1.bf16.msra.mxu0 %v3520
    %4109 = vmatprep.subr.bf16.mxu0 0
    %4110 = vmatpush1.bf16.msra.mxu0 %v3525
    %4111 = vmatprep.subr.bf16.mxu0 0
    %4112 = vmatpush1.bf16.msra.mxu0 %v3530
    %4113 = vmatprep.subr.bf16.mxu0 0
    %4114 = vmatpush1.bf16.msra.mxu0 %v3535
    %4115 = vmatprep.subr.bf16.mxu0 0
    %4116 = vmatpush1.bf16.msra.mxu0 %v3540
    %4117 = vmatprep.subr.bf16.mxu0 0
    %4118 = vmatpush1.bf16.msra.mxu0 %v3545
    %4119 = vmatprep.subr.bf16.mxu0 0
    %4120 = vmatpush1.bf16.msra.mxu0 %v3550
    %4121 = vmatprep.subr.bf16.mxu0 0
    %4122 = vmatpush1.bf16.msra.mxu0 %v3555
    %4123 = vmatprep.subr.bf16.mxu0 0
    %4124 = vmatpush1.bf16.msra.mxu0 %v3560
    %4125 = vmatprep.subr.bf16.mxu0 0
    %4126 = vmatpush1.bf16.msra.mxu0 %v3565
    %4127 = vmatprep.subr.bf16.mxu0 0
    %4128 = vmatpush1.bf16.msra.mxu0 %v3570
    %4129 = vmatprep.mubr.bf16.mxu0 %v2502
    %4130 = vmatmul.mubr.bf16.gmra.mrb[0].mxu0 %v2501
    %v4131 = vpop.f32.mrb[0].mxu0
    %v4132 = vadd.f32 %v4092, %v4131
    %v4133 = vpop.f32.mrb[0].mxu0
    %v4134 = vpop.f32.mrb[0].mxu0
    %v4135 = vpop.f32.mrb[0].mxu0
    %4136 = vdwg.mxu0
    %4137 = vmatprep.subr.bf16.mxu0 0
    %4138 = vmatpush1.bf16.msra.mxu0 %v3575
    %4139 = vmatprep.subr.bf16.mxu0 0
    %4140 = vmatpush1.bf16.msra.mxu0 %v3580
    %4141 = vmatprep.subr.bf16.mxu0 0
    %4142 = vmatpush1.bf16.msra.mxu0 %v3585
    %4143 = vmatprep.subr.bf16.mxu0 0
    %4144 = vmatpush1.bf16.msra.mxu0 %v3590
    %4145 = vmatprep.subr.bf16.mxu0 0
    %4146 = vmatpush1.bf16.msra.mxu0 %v3595
    %4147 = vmatprep.subr.bf16.mxu0 0
    %4148 = vmatpush1.bf16.msra.mxu0 %v3600
    %4149 = vmatprep.subr.bf16.mxu0 0
    %4150 = vmatpush1.bf16.msra.mxu0 %v3605
    %4151 = vmatprep.subr.bf16.mxu0 0
    %4152 = vmatpush1.bf16.msra.mxu0 %v3610
    %4153 = vmatprep.subr.bf16.mxu0 0
    %4154 = vmatpush1.bf16.msra.mxu0 0
    %4155 = vmatprep.subr.bf16.mxu0 0
    %4156 = vmatpush1.bf16.msra.mxu0 0
    %4157 = vmatprep.subr.bf16.mxu0 0
    %4158 = vmatpush1.bf16.msra.mxu0 0
    %4159 = vmatprep.subr.bf16.mxu0 0
    %4160 = vmatpush1.bf16.msra.mxu0 0
    %4161 = vmatprep.subr.bf16.mxu0 0
    %4162 = vmatpush1.bf16.msra.mxu0 0
    %4163 = vmatprep.subr.bf16.mxu0 0
    %4164 = vmatpush1.bf16.msra.mxu0 0
    %4165 = vmatprep.subr.bf16.mxu0 0
    %4166 = vmatpush1.bf16.msra.mxu0 0
    %4167 = vmatprep.subr.bf16.mxu0 0
    %4168 = vmatpush1.bf16.msra.mxu0 0
    %4169 = vmatprep.mubr.bf16.mxu0 0
    %4170 = vmatmul.mubr.bf16.gmra.mrb[0].mxu0 %v2503
    %v4171 = vpop.f32.mrb[0].mxu0
    %v4172 = vadd.f32 %v4132, %v4171
    %v4173 = vpop.f32.mrb[0].mxu0
    %v4174 = vpop.f32.mrb[0].mxu0
    %v4175 = vpop.f32.mrb[0].mxu0
    %4176 = vdwg.mxu0
    %v4177 = vmax.f32 %v3928, 0.0
    %v4178 = vmax.f32 %v3930, 0.0
    %v4179 = vmax.f32 %v4051, 0.0
    %v4180 = vmax.f32 %v4053, 0.0
    %v4181 = vmax.f32 %v4172, 0.0
    %v4182 = vpack.c.bf16 %v4177, %v4177
    %v4183 = vpack.c.bf16 %v4178, %v4178
    %v4184 = vpack.c.bf16 %v4179, %v4179
    %v4185 = vpack.c.bf16 %v4180, %v4180
    %v4186 = vpack.c.bf16 %v4181, %v4181
    %v4187 = vld [vmem:[#allocation14] sm:$0xf]
    %v4188 = vld [vmem:[#allocation14 + $0x4] sm:$0xf]
    %v4189 = vld [vmem:[#allocation14 + $0x8] sm:$0xf]
    %v4190 = vld [vmem:[#allocation14 + $0xc] sm:$0xf]
    %v4191 = vld [vmem:[#allocation14 + $0x10] sm:$0xf]
    %v4192 = vld [vmem:[#allocation14 + $0x14] sm:$0xf]
    %v4193 = vld [vmem:[#allocation14 + $0x18] sm:$0xf]
    %v4194 = vld [vmem:[#allocation14 + $0x1c] sm:$0xf]
    %v4195 = vld [vmem:[#allocation14 + $0x20] sm:$0xf]
    %v4196 = vld [vmem:[#allocation14 + $0x24] sm:$0xf]
    %v4197 = vld [vmem:[#allocation14 + $0x28] sm:$0xf]
    %v4198 = vld [vmem:[#allocation14 + $0x2c] sm:$0xf]
    %v4199 = vld [vmem:[#allocation14 + $0x30] sm:$0xf]
    %v4200 = vld [vmem:[#allocation14 + $0x34] sm:$0xf]
    %v4201 = vld [vmem:[#allocation14 + $0x38] sm:$0xf]
    %v4202 = vld [vmem:[#allocation14 + $0x3c] sm:$0xf]
    %v4203 = vld [vmem:[#allocation14 + $0x40] sm:$0xf]
    %v4204 = vld [vmem:[#allocation14 + $0x44] sm:$0xf]
    %v4205 = vld [vmem:[#allocation14 + $0x48] sm:$0xf]
    %v4206 = vld [vmem:[#allocation14 + $0x4c] sm:$0xf]
    %v4207 = vld [vmem:[#allocation14 + $0x50] sm:$0xf]
    %v4208 = vld [vmem:[#allocation14 + $0x54] sm:$0xf]
    %v4209 = vld [vmem:[#allocation14 + $0x58] sm:$0xf]
    %v4210 = vld [vmem:[#allocation14 + $0x5c] sm:$0xf]
    %v4211 = vld [vmem:[#allocation14 + $0x60] sm:$0xf]
    %v4212 = vld [vmem:[#allocation14 + $0x64] sm:$0xf]
    %v4213 = vld [vmem:[#allocation14 + $0x68] sm:$0xf]
    %v4214 = vld [vmem:[#allocation14 + $0x6c] sm:$0xf]
    %v4215 = vld [vmem:[#allocation14 + $0x70] sm:$0xf]
    %v4216 = vld [vmem:[#allocation14 + $0x74] sm:$0xf]
    %v4217 = vld [vmem:[#allocation14 + $0x78] sm:$0xf]
    %v4218 = vld [vmem:[#allocation14 + $0x7c] sm:$0xf]
    %v4219 = vld [vmem:[#allocation14 + $0x80] sm:$0xf]
    %v4220 = vld [vmem:[#allocation14 + $0x84] sm:$0xf]
    %v4221 = vld [vmem:[#allocation14 + $0x88] sm:$0xf]
    %v4222 = vld [vmem:[#allocation14 + $0x8c] sm:$0xf]
    %v4223 = vld [vmem:[#allocation14 + $0x90] sm:$0xf]
    %v4224 = vld [vmem:[#allocation14 + $0x94] sm:$0xf]
    %v4225 = vld [vmem:[#allocation14 + $0x98] sm:$0xf]
    %v4226 = vld [vmem:[#allocation14 + $0x9c] sm:$0xf]
    %v4227 = vld [vmem:[#allocation14 + $0xa0] sm:$0xf]
    %v4228 = vld [vmem:[#allocation14 + $0xa4] sm:$0xf]
    %v4229 = vld [vmem:[#allocation14 + $0xa8] sm:$0xf]
    %v4230 = vld [vmem:[#allocation14 + $0xac] sm:$0xf]
    %v4231 = vld [vmem:[#allocation14 + $0xb0] sm:$0xf]
    %v4232 = vld [vmem:[#allocation14 + $0xb4] sm:$0xf]
    %v4233 = vld [vmem:[#allocation14 + $0xb8] sm:$0xf]
    %v4234 = vld [vmem:[#allocation14 + $0xbc] sm:$0xf]
    %v4235 = vld [vmem:[#allocation14 + $0xc0] sm:$0xf]
    %v4236 = vld [vmem:[#allocation14 + $0xc4] sm:$0xf]
    %v4237 = vld [vmem:[#allocation14 + $0xc8] sm:$0xf]
    %v4238 = vld [vmem:[#allocation14 + $0xcc] sm:$0xf]
    %v4239 = vld [vmem:[#allocation14 + $0xd0] sm:$0xf]
    %v4240 = vld [vmem:[#allocation14 + $0xd4] sm:$0xf]
    %v4241 = vld [vmem:[#allocation14 + $0xd8] sm:$0xf]
    %v4242 = vld [vmem:[#allocation14 + $0xdc] sm:$0xf]
    %v4243 = vld [vmem:[#allocation14 + $0xe0] sm:$0xf]
    %v4244 = vld [vmem:[#allocation14 + $0xe4] sm:$0xf]
    %v4245 = vld [vmem:[#allocation14 + $0xe8] sm:$0xf]
    %v4246 = vld [vmem:[#allocation14 + $0xec] sm:$0xf]
    %v4247 = vld [vmem:[#allocation14 + $0xf0] sm:$0xf]
    %v4248 = vld [vmem:[#allocation14 + $0xf4] sm:$0xf]
    %v4249 = vld [vmem:[#allocation14 + $0xf8] sm:$0xf]
    %v4250 = vld [vmem:[#allocation14 + $0xfc] sm:$0xf]
    %v4251 = vld [vmem:[#allocation14 + $0x100] sm:$0xf]
    %v4252 = vld [vmem:[#allocation14 + $0x104] sm:$0xf]
    %v4253 = vld [vmem:[#allocation14 + $0x108] sm:$0xf]
    %v4254 = vld [vmem:[#allocation14 + $0x10c] sm:$0xf]
    %v4255 = vld [vmem:[#allocation14 + $0x110] sm:$0xf]
    %v4256 = vld [vmem:[#allocation14 + $0x114] sm:$0xf]
    %v4257 = vld [vmem:[#allocation14 + $0x118] sm:$0xf]
    %v4258 = vld [vmem:[#allocation14 + $0x11c] sm:$0xf]
    %v4259 = vld [vmem:[#allocation14 + $0x120] sm:$0xf]
    %v4260 = vld [vmem:[#allocation14 + $0x124] sm:$0xf]
    %v4261 = vld [vmem:[#allocation14 + $0x128] sm:$0xf]
    %v4262 = vld [vmem:[#allocation14 + $0x12c] sm:$0xf]
    %v4263 = vld [vmem:[#allocation14 + $0x130] sm:$0xf]
    %v4264 = vld [vmem:[#allocation14 + $0x134] sm:$0xf]
    %v4265 = vld [vmem:[#allocation14 + $0x138] sm:$0xf]
    %v4266 = vld [vmem:[#allocation14 + $0x13c] sm:$0xf]
    %v4267 = vld [vmem:[#allocation16] sm:$0x1]
    %v4269 = vlaneseq
    %v4270 = vshrl.u32 %v4269, 7
    %v4271 = vsub.s32 0, %v4270
    %v4272 = vrot.slane %v4267, %v4271
    %v4354 = vunpack.c.l.b16 %v4187
    %v4355 = vunpack.c.l.b16 %v4188
    %v4356 = vunpack.c.l.b16 %v4189
    %v4357 = vunpack.c.l.b16 %v4190
    %v4358 = vunpack.c.l.b16 %v4191
    %v4359 = vunpack.c.l.b16 %v4192
    %v4360 = vunpack.c.l.b16 %v4193
    %v4361 = vunpack.c.l.b16 %v4194
    %v4362 = vunpack.c.l.b16 %v4195
    %v4363 = vunpack.c.l.b16 %v4196
    %v4364 = vunpack.c.l.b16 %v4197
    %v4365 = vunpack.c.l.b16 %v4198
    %v4366 = vunpack.c.l.b16 %v4199
    %v4367 = vunpack.c.l.b16 %v4200
    %v4368 = vunpack.c.l.b16 %v4201
    %v4369 = vunpack.c.l.b16 %v4202
    %v4370 = vunpack.c.l.b16 %v4203
    %v4371 = vunpack.c.l.b16 %v4204
    %v4372 = vunpack.c.l.b16 %v4205
    %v4373 = vunpack.c.l.b16 %v4206
    %v4374 = vunpack.c.l.b16 %v4207
    %v4375 = vunpack.c.l.b16 %v4208
    %v4376 = vunpack.c.l.b16 %v4209
    %v4377 = vunpack.c.l.b16 %v4210
    %v4378 = vunpack.c.l.b16 %v4211
    %v4379 = vunpack.c.l.b16 %v4212
    %v4380 = vunpack.c.l.b16 %v4213
    %v4381 = vunpack.c.l.b16 %v4214
    %v4382 = vunpack.c.l.b16 %v4215
    %v4383 = vunpack.c.l.b16 %v4216
    %v4384 = vunpack.c.l.b16 %v4217
    %v4385 = vunpack.c.l.b16 %v4218
    %v4386 = vunpack.c.l.b16 %v4219
    %v4387 = vunpack.c.l.b16 %v4220
    %v4388 = vunpack.c.l.b16 %v4221
    %v4389 = vunpack.c.l.b16 %v4222
    %v4390 = vunpack.c.l.b16 %v4223
    %v4391 = vunpack.c.l.b16 %v4224
    %v4392 = vunpack.c.l.b16 %v4225
    %v4393 = vunpack.c.l.b16 %v4226
    %v4394 = vunpack.c.l.b16 %v4227
    %v4395 = vunpack.c.l.b16 %v4228
    %v4396 = vunpack.c.l.b16 %v4229
    %v4397 = vunpack.c.l.b16 %v4230
    %v4398 = vunpack.c.l.b16 %v4231
    %v4399 = vunpack.c.l.b16 %v4232
    %v4400 = vunpack.c.l.b16 %v4233
    %v4401 = vunpack.c.l.b16 %v4234
    %v4402 = vunpack.c.l.b16 %v4235
    %v4403 = vunpack.c.l.b16 %v4236
    %v4404 = vunpack.c.l.b16 %v4237
    %v4405 = vunpack.c.l.b16 %v4238
    %v4406 = vunpack.c.l.b16 %v4239
    %v4407 = vunpack.c.l.b16 %v4240
    %v4408 = vunpack.c.l.b16 %v4241
    %v4409 = vunpack.c.l.b16 %v4242
    %v4410 = vunpack.c.l.b16 %v4243
    %v4411 = vunpack.c.l.b16 %v4244
    %v4412 = vunpack.c.l.b16 %v4245
    %v4413 = vunpack.c.l.b16 %v4246
    %v4414 = vunpack.c.l.b16 %v4247
    %v4415 = vunpack.c.l.b16 %v4248
    %v4416 = vunpack.c.l.b16 %v4249
    %v4417 = vunpack.c.l.b16 %v4250
    %v4418 = vunpack.c.l.b16 %v4251
    %v4419 = vunpack.c.l.b16 %v4252
    %v4420 = vunpack.c.l.b16 %v4253
    %v4421 = vunpack.c.l.b16 %v4254
    %v4422 = vunpack.c.l.b16 %v4255
    %v4423 = vunpack.c.l.b16 %v4256
    %v4424 = vunpack.c.l.b16 %v4257
    %v4425 = vunpack.c.l.b16 %v4258
    %v4426 = vunpack.c.l.b16 %v4259
    %v4427 = vunpack.c.l.b16 %v4260
    %v4428 = vunpack.c.l.b16 %v4261
    %v4429 = vunpack.c.l.b16 %v4262
    %v4430 = vunpack.c.l.b16 %v4263
    %v4431 = vunpack.c.l.b16 %v4264
    %v4432 = vunpack.c.l.b16 %v4265
    %v4433 = vunpack.c.l.b16 %v4266
    %v4434 = vpack.c.b16 %v4355, %v4354
    %v4435 = vpack.c.b16 %v4357, %v4356
    %v4436 = vpack.c.b16 %v4359, %v4358
    %v4437 = vpack.c.b16 %v4361, %v4360
    %v4438 = vpack.c.b16 %v4363, %v4362
    %v4439 = vpack.c.b16 %v4365, %v4364
    %v4440 = vpack.c.b16 %v4367, %v4366
    %v4441 = vpack.c.b16 %v4369, %v4368
    %v4442 = vpack.c.b16 %v4371, %v4370
    %v4443 = vpack.c.b16 %v4373, %v4372
    %v4444 = vpack.c.b16 %v4375, %v4374
    %v4445 = vpack.c.b16 %v4377, %v4376
    %v4446 = vpack.c.b16 %v4379, %v4378
    %v4447 = vpack.c.b16 %v4381, %v4380
    %v4448 = vpack.c.b16 %v4383, %v4382
    %v4449 = vpack.c.b16 %v4385, %v4384
    %v4450 = vpack.c.b16 %v4387, %v4386
    %v4451 = vpack.c.b16 %v4389, %v4388
    %v4452 = vpack.c.b16 %v4391, %v4390
    %v4453 = vpack.c.b16 %v4393, %v4392
    %v4454 = vpack.c.b16 %v4395, %v4394
    %v4455 = vpack.c.b16 %v4397, %v4396
    %v4456 = vpack.c.b16 %v4399, %v4398
    %v4457 = vpack.c.b16 %v4401, %v4400
    %v4458 = vpack.c.b16 %v4403, %v4402
    %v4459 = vpack.c.b16 %v4405, %v4404
    %v4460 = vpack.c.b16 %v4407, %v4406
    %v4461 = vpack.c.b16 %v4409, %v4408
    %v4462 = vpack.c.b16 %v4411, %v4410
    %v4463 = vpack.c.b16 %v4413, %v4412
    %v4464 = vpack.c.b16 %v4415, %v4414
    %v4465 = vpack.c.b16 %v4417, %v4416
    %v4466 = vpack.c.b16 %v4419, %v4418
    %v4467 = vpack.c.b16 %v4421, %v4420
    %v4468 = vpack.c.b16 %v4423, %v4422
    %v4469 = vpack.c.b16 %v4425, %v4424
    %v4470 = vpack.c.b16 %v4427, %v4426
    %v4471 = vpack.c.b16 %v4429, %v4428
    %v4472 = vpack.c.b16 %v4431, %v4430
    %v4473 = vpack.c.b16 %v4433, %v4432
    %4514 = vmatprep.subr.bf16.mxu0 0
    %4515 = vmatpush1.bf16.msra.mxu0 %v4434
    %4516 = vmatprep.subr.bf16.mxu0 0
    %4517 = vmatpush1.bf16.msra.mxu0 %v4435
    %4518 = vmatprep.subr.bf16.mxu0 0
    %4519 = vmatpush1.bf16.msra.mxu0 %v4436
    %4520 = vmatprep.subr.bf16.mxu0 0
    %4521 = vmatpush1.bf16.msra.mxu0 %v4437
    %4522 = vmatprep.subr.bf16.mxu0 0
    %4523 = vmatpush1.bf16.msra.mxu0 %v4438
    %4524 = vmatprep.subr.bf16.mxu0 0
    %4525 = vmatpush1.bf16.msra.mxu0 %v4439
    %4526 = vmatprep.subr.bf16.mxu0 0
    %4527 = vmatpush1.bf16.msra.mxu0 %v4440
    %4528 = vmatprep.subr.bf16.mxu0 0
    %4529 = vmatpush1.bf16.msra.mxu0 %v4441
    %4530 = vmatprep.subr.bf16.mxu0 0
    %4531 = vmatpush1.bf16.msra.mxu0 %v4442
    %4532 = vmatprep.subr.bf16.mxu0 0
    %4533 = vmatpush1.bf16.msra.mxu0 %v4443
    %4534 = vmatprep.subr.bf16.mxu0 0
    %4535 = vmatpush1.bf16.msra.mxu0 %v4444
    %4536 = vmatprep.subr.bf16.mxu0 0
    %4537 = vmatpush1.bf16.msra.mxu0 %v4445
    %4538 = vmatprep.subr.bf16.mxu0 0
    %4539 = vmatpush1.bf16.msra.mxu0 %v4446
    %4540 = vmatprep.subr.bf16.mxu0 0
    %4541 = vmatpush1.bf16.msra.mxu0 %v4447
    %4542 = vmatprep.subr.bf16.mxu0 0
    %4543 = vmatpush1.bf16.msra.mxu0 %v4448
    %4544 = vmatprep.subr.bf16.mxu0 0
    %4545 = vmatpush1.bf16.msra.mxu0 %v4449
    %4546 = vmatprep.mubr.bf16.mxu0 %v4183
    %4547 = vmatmul.mubr.bf16.gmra.mrb[0].mxu0 %v4182
    %v4548 = vpop.f32.mrb[0].mxu0
    %v4549 = vadd.f32 %v4272, %v4548
    %v4550 = vpop.f32.mrb[0].mxu0
    %v4551 = vpop.f32.mrb[0].mxu0
    %v4552 = vpop.f32.mrb[0].mxu0
    %4553 = vdwg.mxu0
    %4554 = vmatprep.subr.bf16.mxu0 0
    %4555 = vmatpush1.bf16.msra.mxu0 %v4450
    %4556 = vmatprep.subr.bf16.mxu0 0
    %4557 = vmatpush1.bf16.msra.mxu0 %v4451
    %4558 = vmatprep.subr.bf16.mxu0 0
    %4559 = vmatpush1.bf16.msra.mxu0 %v4452
    %4560 = vmatprep.subr.bf16.mxu0 0
    %4561 = vmatpush1.bf16.msra.mxu0 %v4453
    %4562 = vmatprep.subr.bf16.mxu0 0
    %4563 = vmatpush1.bf16.msra.mxu0 %v4454
    %4564 = vmatprep.subr.bf16.mxu0 0
    %4565 = vmatpush1.bf16.msra.mxu0 %v4455
    %4566 = vmatprep.subr.bf16.mxu0 0
    %4567 = vmatpush1.bf16.msra.mxu0 %v4456
    %4568 = vmatprep.subr.bf16.mxu0 0
    %4569 = vmatpush1.bf16.msra.mxu0 %v4457
    %4570 = vmatprep.subr.bf16.mxu0 0
    %4571 = vmatpush1.bf16.msra.mxu0 %v4458
    %4572 = vmatprep.subr.bf16.mxu0 0
    %4573 = vmatpush1.bf16.msra.mxu0 %v4459
    %4574 = vmatprep.subr.bf16.mxu0 0
    %4575 = vmatpush1.bf16.msra.mxu0 %v4460
    %4576 = vmatprep.subr.bf16.mxu0 0
    %4577 = vmatpush1.bf16.msra.mxu0 %v4461
    %4578 = vmatprep.subr.bf16.mxu0 0
    %4579 = vmatpush1.bf16.msra.mxu0 %v4462
    %4580 = vmatprep.subr.bf16.mxu0 0
    %4581 = vmatpush1.bf16.msra.mxu0 %v4463
    %4582 = vmatprep.subr.bf16.mxu0 0
    %4583 = vmatpush1.bf16.msra.mxu0 %v4464
    %4584 = vmatprep.subr.bf16.mxu0 0
    %4585 = vmatpush1.bf16.msra.mxu0 %v4465
    %4586 = vmatprep.mubr.bf16.mxu0 %v4185
    %4587 = vmatmul.mubr.bf16.gmra.mrb[0].mxu0 %v4184
    %v4588 = vpop.f32.mrb[0].mxu0
    %v4589 = vadd.f32 %v4549, %v4588
    %v4590 = vpop.f32.mrb[0].mxu0
    %v4591 = vpop.f32.mrb[0].mxu0
    %v4592 = vpop.f32.mrb[0].mxu0
    %4593 = vdwg.mxu0
    %4594 = vmatprep.subr.bf16.mxu0 0
    %4595 = vmatpush1.bf16.msra.mxu0 %v4466
    %4596 = vmatprep.subr.bf16.mxu0 0
    %4597 = vmatpush1.bf16.msra.mxu0 %v4467
    %4598 = vmatprep.subr.bf16.mxu0 0
    %4599 = vmatpush1.bf16.msra.mxu0 %v4468
    %4600 = vmatprep.subr.bf16.mxu0 0
    %4601 = vmatpush1.bf16.msra.mxu0 %v4469
    %4602 = vmatprep.subr.bf16.mxu0 0
    %4603 = vmatpush1.bf16.msra.mxu0 %v4470
    %4604 = vmatprep.subr.bf16.mxu0 0
    %4605 = vmatpush1.bf16.msra.mxu0 %v4471
    %4606 = vmatprep.subr.bf16.mxu0 0
    %4607 = vmatpush1.bf16.msra.mxu0 %v4472
    %4608 = vmatprep.subr.bf16.mxu0 0
    %4609 = vmatpush1.bf16.msra.mxu0 %v4473
    %4610 = vmatprep.subr.bf16.mxu0 0
    %4611 = vmatpush1.bf16.msra.mxu0 0
    %4612 = vmatprep.subr.bf16.mxu0 0
    %4613 = vmatpush1.bf16.msra.mxu0 0
    %4614 = vmatprep.subr.bf16.mxu0 0
    %4615 = vmatpush1.bf16.msra.mxu0 0
    %4616 = vmatprep.subr.bf16.mxu0 0
    %4617 = vmatpush1.bf16.msra.mxu0 0
    %4618 = vmatprep.subr.bf16.mxu0 0
    %4619 = vmatpush1.bf16.msra.mxu0 0
    %4620 = vmatprep.subr.bf16.mxu0 0
    %4621 = vmatpush1.bf16.msra.mxu0 0
    %4622 = vmatprep.subr.bf16.mxu0 0
    %4623 = vmatpush1.bf16.msra.mxu0 0
    %4624 = vmatprep.subr.bf16.mxu0 0
    %4625 = vmatpush1.bf16.msra.mxu0 0
    %4626 = vmatprep.mubr.bf16.mxu0 0
    %4627 = vmatmul.mubr.bf16.gmra.mrb[0].mxu0 %v4186
    %v4628 = vpop.f32.mrb[0].mxu0
    %v4629 = vadd.f32 %v4589, %v4628
    %v4630 = vpop.f32.mrb[0].mxu0
    %v4631 = vpop.f32.mrb[0].mxu0
    %v4632 = vpop.f32.mrb[0].mxu0
    %4633 = vdwg.mxu0
    %v4634 = vmax.f32 %v4629, 0.0
    %4635 = vst [vmem:[#allocation17] sm:$0xff] %v4634
    // Predicated region
    $region74: #{sensor_nn_forward.1} parent=1 // pred_check
      _
    $region75: #{sensor_nn_forward.1} parent=1 // pred_check_branch
      %4637 = sbr.rel (0) target = $region77
    $region76: #{sensor_nn_forward.1} parent=1 // pred_region
      %s4639 = ssub.s32 128, 128
      %4640 = vsyncadd [#allocation4], %s4639
      %s4642 = sshll.u32 [#allocation17], 4
      %s4643 = int_to_ptr.vmem [resolvable:$true] %s4642
      %4645 = dma.vmem_to_hbm [thread:$0]  %s4643, 128, %s9, [#allocation4]
    $region77: #{sensor_nn_forward.1} parent=1 // pred_fallthru
      _
    // Predicated region
    $region78: #{sensor_nn_forward.1} parent=1 // pred_check
      _
    $region79: #{sensor_nn_forward.1} parent=1 // pred_check_branch
      %4647 = sbr.rel (0) target = $region81
    $region80: #{sensor_nn_forward.1} parent=1 // pred_region
      %4648 = dma.done [#allocation4], 128
    $region81: #{sensor_nn_forward.1} parent=1 // pred_fallthru
      _
    %4649 = vsyncpa [#allocation3], 1
    %4650 = vsyncpa [#allocation6], 1
    %4651 = vsyncpa [#allocation9], 1
    %4652 = vsyncpa [#allocation12], 1
    %4653 = vsyncpa [#allocation15], 1
    %4654 = vsyncpa [#allocation4], 1

</llo_original>
